<compile_context>
chip_gen: v7x
topology: tpu7x:2x2x1
jax: 0.10.0
libtpu: 0.0.40
codegen_flags: <defaults>
</compile_context>

<pallas_src>
import functools

import jax
import jax.numpy as jnp
from jax.experimental import pallas as pl
from jax.experimental.pallas import tpu as pltpu


def _res_block_kernel(x_ref, w1_ref, b1_ref, w2_ref, b2_ref, m_ref, o_ref,
                      pad_ref, *, n_layers, width, margin):
    """Single grid step processes the whole (batch-fused) problem.

    x_ref : (Cp, N*HW)        activations, channels in sublanes, batch*spatial in lanes
    w*_ref: (L, Cp, 9*Cp)     conv weights, taps folded into the K dim
    b*_ref: (L, Cp, 1)        biases
    m_ref : (9, 1, N*HW)      per-tap validity masks (zero-pad + image-boundary)
    o_ref : (Cp, N*HW)
    pad_ref: (Cp, MARGIN + N*HW + MARGIN) VMEM scratch; margins stay zero
    """
    cp, nhw = x_ref.shape

    # Zero ONLY the two margin regions (never written, always read masked, but
    # must not contain NaN bit patterns).  One-time cost: 2 x (Cp, MARGIN).
    zeros_m = jnp.zeros((cp, margin), jnp.float32)
    pad_ref[:, pl.ds(0, margin)] = zeros_m
    pad_ref[:, pl.ds(margin + nhw, margin)] = zeros_m

    def conv3x3(w2d, bias):
        """3x3 SAME conv over ALL images at once as ONE matmul, K = 9*Cp.

        Reads shifted windows from the interior of pad_ref; per-tap masks kill
        out-of-image taps (both zero padding and cross-image lane adjacency).
        Returns (Cp, N*HW) f32.
        """
        taps = []
        for ky in range(3):
            for kx in range(3):
                d = (ky - 1) * width + (kx - 1)
                win = pad_ref[:, pl.ds(margin + d, nhw)]   # (Cp, N*HW) window
                if not (ky == 1 and kx == 1):              # center tap needs no mask
                    win = win * m_ref[ky * 3 + kx]         # (1, N*HW) mask broadcast
                taps.append(win)
        patches = jnp.concatenate(taps, axis=0)            # (9*Cp, N*HW) im2col slab
        return jnp.dot(w2d, patches,
                       preferred_element_type=jnp.float32) + bias

    x = x_ref[...]                                          # (Cp, N*HW) f32
    # L is tiny -> static unroll keeps the schedule visible to the LLO scheduler.
    for l in range(n_layers):
        pad_ref[:, pl.ds(margin, nhw)] = x                  # lane-aligned interior store
        h = jnp.maximum(conv3x3(w1_ref[l], b1_ref[l]), 0.0)    # conv1 + ReLU
        pad_ref[:, pl.ds(margin, nhw)] = h
        x = conv3x3(w2_ref[l], b2_ref[l]) + x                  # conv2 + residual
    o_ref[...] = x


def res_block_pallas(x_nchw, w1, b1, w2, b2):
    """x: (N,C,H,W); w1,w2: (L,C,C,3,3) PyTorch OIHW per layer; b1,b2: (L,C)."""
    N, C, H, W = x_nchw.shape
    L = w1.shape[0]
    HW = H * W
    NHW = N * HW
    Cp = ((C + 7) // 8) * 8                       # pad channels to f32 sublane tile
    MARGIN = ((W + 1 + 127) // 128) * 128         # lane-aligned zero margin >= W+1

    # ---- lane-dense re-plumbing (wrapper-side layout only, no extra compute) ----
    x_k = jnp.pad(x_nchw.astype(jnp.float32),
                  ((0, 0), (0, Cp - C), (0, 0), (0, 0)))
    x_k = jnp.transpose(x_k.reshape(N, Cp, HW), (1, 0, 2)).reshape(Cp, NHW)

    def pack_w(w):                                # (L,C,C,3,3) -> (L, Cp, 9*Cp)
        wp = jnp.pad(w.astype(jnp.float32),
                     ((0, 0), (0, Cp - C), (0, Cp - C), (0, 0), (0, 0)))
        wp = jnp.transpose(wp, (0, 1, 3, 4, 2))   # (L, Cout, ky, kx, Cin)
        return wp.reshape(L, Cp, 9 * Cp)          # col index = (ky*3+kx)*Cp + cin

    def pack_b(b):                                # (L,C) -> (L, Cp, 1)
        return jnp.pad(b.astype(jnp.float32),
                       ((0, 0), (0, Cp - C))).reshape(L, Cp, 1)

    w1_k, w2_k = pack_w(w1), pack_w(w2)
    b1_k, b2_k = pack_b(b1), pack_b(b2)

    # Per-tap validity masks, precomputed once here (removes iota/compare/cast
    # work from the kernel prologue).  A tap (dy,dx) at flat position q is valid
    # iff it stays inside the SAME image -> handles zero padding AND prevents
    # leakage between images packed next to each other along lanes.
    q = jnp.arange(NHW, dtype=jnp.int32)
    py = (q % HW) // W
    px = q % W
    masks = []
    for ky in range(3):
        for kx in range(3):
            dy, dx = ky - 1, kx - 1
            ok = ((py + dy >= 0) & (py + dy < H) &
                  (px + dx >= 0) & (px + dx < W))
            masks.append(ok.astype(jnp.float32))
    m_k = jnp.stack(masks, axis=0).reshape(9, 1, NHW)

    kernel = functools.partial(_res_block_kernel, n_layers=L,
                               width=W, margin=MARGIN)

    flops = 2 * L * 2 * Cp * (9 * Cp) * NHW
    bytes_accessed = 4 * (2 * Cp * NHW + 2 * L * Cp * 9 * Cp
                          + 2 * L * Cp + 9 * NHW)

    out = pl.pallas_call(
        kernel,
        out_shape=jax.ShapeDtypeStruct((Cp, NHW), jnp.float32),
        grid_spec=pltpu.PrefetchScalarGridSpec(
            num_scalar_prefetch=0,
            grid=(1,),                                        # single step: batch fused into lanes
            in_specs=[
                pl.BlockSpec((Cp, NHW), lambda i: (0, 0)),            # activations
                pl.BlockSpec((L, Cp, 9 * Cp), lambda i: (0, 0, 0)),   # conv1 weights
                pl.BlockSpec((L, Cp, 1), lambda i: (0, 0, 0)),        # conv1 biases
                pl.BlockSpec((L, Cp, 9 * Cp), lambda i: (0, 0, 0)),   # conv2 weights
                pl.BlockSpec((L, Cp, 1), lambda i: (0, 0, 0)),        # conv2 biases
                pl.BlockSpec((9, 1, NHW), lambda i: (0, 0, 0)),       # tap masks
            ],
            out_specs=pl.BlockSpec((Cp, NHW), lambda i: (0, 0)),
            scratch_shapes=[pltpu.VMEM((Cp, 2 * MARGIN + NHW), jnp.float32)],
        ),
        compiler_params=pltpu.CompilerParams(
            dimension_semantics=("arbitrary",)),
        cost_estimate=pl.CostEstimate(flops=flops, transcendentals=0,
                                      bytes_accessed=bytes_accessed),
    )(x_k, w1_k, b1_k, w2_k, b2_k, m_k)

    out = out.reshape(Cp, N, HW).transpose(1, 0, 2).reshape(N, Cp, H, W)
    return out[:, :C]


def res_block_reference(x, w1, b1, w2, b2):
    """Pure-JAX reference (lax conv, NCHW/OIHW — same layout as the torch module)."""
    L = w1.shape[0]
    dn = jax.lax.conv_dimension_numbers(x.shape, w1[0].shape,
                                        ("NCHW", "OIHW", "NCHW"))
    y = x.astype(jnp.float32)
    for l in range(L):
        h = jax.lax.conv_general_dilated(y, w1[l], (1, 1), "SAME",
                                         dimension_numbers=dn)
        h = jnp.maximum(h + b1[l][None, :, None, None], 0.0)
        y = jax.lax.conv_general_dilated(h, w2[l], (1, 1), "SAME",
                                         dimension_numbers=dn) \
            + b2[l][None, :, None, None] + y
    return y


if __name__ == "__main__":
    N, C, H, W = 2, 4, 16, 16     # batch, nFeat, spatial
    L = 2                         # nReslayer

    key = jax.random.PRNGKey(0)
    kx, kw1, kb1, kw2, kb2 = jax.random.split(key, 5)

    x = jax.random.normal(kx, (N, C, H, W), dtype=jnp.float32)

    # Synthetic parameters in PyTorch Conv2d layout: (Cout, Cin, kH, kW) per layer.
    fan_in = C * 3 * 3
    scale = 1.0 / (fan_in ** 0.5)
    w1 = jax.random.normal(kw1, (L, C, C, 3, 3), dtype=jnp.float32) * scale
    b1 = jax.random.normal(kb1, (L, C), dtype=jnp.float32) * scale
    w2 = jax.random.normal(kw2, (L, C, C, 3, 3), dtype=jnp.float32) * scale
    b2 = jax.random.normal(kb2, (L, C), dtype=jnp.float32) * scale

    out = jax.block_until_ready(res_block_pallas(x, w1, b1, w2, b2))
    ref = jax.block_until_ready(res_block_reference(x, w1, b1, w2, b2))

    assert out.shape == (N, C, H, W)
    assert jnp.allclose(out, ref, atol=1e-4, rtol=1e-4), "mismatch vs reference"

    print("KERNEL_OK")
</pallas_src>

<mosaic_0001>
module attributes {stable_mosaic.version = 11 : i64} {
  func.func @_res_block_kernel(%arg0: i32, %arg1: memref<8x512xf32, #tpu.memory_space<vmem>>, %arg2: memref<2x8x72xf32, #tpu.memory_space<vmem>>, %arg3: memref<2x8x1xf32, #tpu.memory_space<vmem>>, %arg4: memref<2x8x72xf32, #tpu.memory_space<vmem>>, %arg5: memref<2x8x1xf32, #tpu.memory_space<vmem>>, %arg6: memref<9x1x512xf32, #tpu.memory_space<vmem>>, %arg7: memref<8x512xf32, #tpu.memory_space<vmem>>, %arg8: memref<8x768xf32, #tpu.memory_space<vmem>>) attributes {dimension_semantics = [#tpu.dimension_semantics<arbitrary>], iteration_bounds = array<i64: 1>, scalar_prefetch = 0 : i64, scratch_operands = 1 : i64, tpu.core_type = #tpu.core_type<tc>, window_params = [{pipeline_mode = #tpu.pipeline_mode<synchronous>, transform_indices = @transform_0, window_bounds = array<i64: 8, 512>}, {pipeline_mode = #tpu.pipeline_mode<synchronous>, transform_indices = @transform_1, window_bounds = array<i64: 2, 8, 72>}, {pipeline_mode = #tpu.pipeline_mode<synchronous>, transform_indices = @transform_2, window_bounds = array<i64: 2, 8, 1>}, {pipeline_mode = #tpu.pipeline_mode<synchronous>, transform_indices = @transform_3, window_bounds = array<i64: 2, 8, 72>}, {pipeline_mode = #tpu.pipeline_mode<synchronous>, transform_indices = @transform_4, window_bounds = array<i64: 2, 8, 1>}, {pipeline_mode = #tpu.pipeline_mode<synchronous>, transform_indices = @transform_5, window_bounds = array<i64: 9, 1, 512>}, {pipeline_mode = #tpu.pipeline_mode<synchronous>, transform_indices = @transform_6, window_bounds = array<i64: 8, 512>}]} {
    %cst = arith.constant 0.000000e+00 : f32
    %0 = vector.broadcast %cst : f32 to vector<8x128xf32>
    %c0 = arith.constant 0 : index
    %c0_0 = arith.constant 0 : index
    %1 = vector.load %arg8[%c0, %c0_0] : memref<8x768xf32, #tpu.memory_space<vmem>>, vector<8x128xf32>
    tpu.vector_store %arg8[%c0, %c0_0], %0 {strides = array<i32>} : memref<8x768xf32, #tpu.memory_space<vmem>>, vector<8x128xf32>,
    %c0_1 = arith.constant 0 : index
    %c640 = arith.constant 640 : index
    %2 = vector.load %arg8[%c0_1, %c640] : memref<8x768xf32, #tpu.memory_space<vmem>>, vector<8x128xf32>
    tpu.vector_store %arg8[%c0_1, %c640], %0 {strides = array<i32>} : memref<8x768xf32, #tpu.memory_space<vmem>>, vector<8x128xf32>,
    %c0_2 = arith.constant 0 : index
    %c0_3 = arith.constant 0 : index
    %3 = vector.load %arg1[%c0_2, %c0_3] : memref<8x512xf32, #tpu.memory_space<vmem>>, vector<8x512xf32>
    %c0_4 = arith.constant 0 : index
    %c128 = arith.constant 128 : index
    %4 = vector.load %arg8[%c0_4, %c128] : memref<8x768xf32, #tpu.memory_space<vmem>>, vector<8x512xf32>
    tpu.vector_store %arg8[%c0_4, %c128], %3 {strides = array<i32>} : memref<8x768xf32, #tpu.memory_space<vmem>>, vector<8x512xf32>,
    %c0_5 = arith.constant 0 : index
    %c0_6 = arith.constant 0 : index
    %c0_7 = arith.constant 0 : index
    %5 = vector.load %arg2[%c0_5, %c0_6, %c0_7] : memref<2x8x72xf32, #tpu.memory_space<vmem>>, vector<1x8x72xf32>
    %6 = vector.shape_cast %5 : vector<1x8x72xf32> to vector<8x72xf32>
    %c0_8 = arith.constant 0 : index
    %c0_9 = arith.constant 0 : index
    %c0_10 = arith.constant 0 : index
    %7 = vector.load %arg3[%c0_8, %c0_9, %c0_10] : memref<2x8x1xf32, #tpu.memory_space<vmem>>, vector<1x8x1xf32>
    %8 = vector.shape_cast %7 : vector<1x8x1xf32> to vector<8x1xf32>
    %c0_11 = arith.constant 0 : index
    %c111 = arith.constant 111 : index
    %9 = vector.load %arg8[%c0_11, %c111] : memref<8x768xf32, #tpu.memory_space<vmem>>, vector<8x512xf32>
    %c0_12 = arith.constant 0 : index
    %c0_13 = arith.constant 0 : index
    %c0_14 = arith.constant 0 : index
    %10 = vector.load %arg6[%c0_12, %c0_13, %c0_14] : memref<9x1x512xf32, #tpu.memory_space<vmem>>, vector<1x1x512xf32>
    %11 = vector.shape_cast %10 : vector<1x1x512xf32> to vector<1x512xf32>
    %12 = vector.broadcast %11 : vector<1x512xf32> to vector<8x512xf32>
    %13 = arith.mulf %9, %12 : vector<8x512xf32>
    %c0_15 = arith.constant 0 : index
    %c112 = arith.constant 112 : index
    %14 = vector.load %arg8[%c0_15, %c112] : memref<8x768xf32, #tpu.memory_space<vmem>>, vector<8x512xf32>
    %c1 = arith.constant 1 : index
    %c0_16 = arith.constant 0 : index
    %c0_17 = arith.constant 0 : index
    %15 = vector.load %arg6[%c1, %c0_16, %c0_17] : memref<9x1x512xf32, #tpu.memory_space<vmem>>, vector<1x1x512xf32>
    %16 = vector.shape_cast %15 : vector<1x1x512xf32> to vector<1x512xf32>
    %17 = vector.broadcast %16 : vector<1x512xf32> to vector<8x512xf32>
    %18 = arith.mulf %14, %17 : vector<8x512xf32>
    %c0_18 = arith.constant 0 : index
    %c113 = arith.constant 113 : index
    %19 = vector.load %arg8[%c0_18, %c113] : memref<8x768xf32, #tpu.memory_space<vmem>>, vector<8x512xf32>
    %c2 = arith.constant 2 : index
    %c0_19 = arith.constant 0 : index
    %c0_20 = arith.constant 0 : index
    %20 = vector.load %arg6[%c2, %c0_19, %c0_20] : memref<9x1x512xf32, #tpu.memory_space<vmem>>, vector<1x1x512xf32>
    %21 = vector.shape_cast %20 : vector<1x1x512xf32> to vector<1x512xf32>
    %22 = vector.broadcast %21 : vector<1x512xf32> to vector<8x512xf32>
    %23 = arith.mulf %19, %22 : vector<8x512xf32>
    %c0_21 = arith.constant 0 : index
    %c127 = arith.constant 127 : index
    %24 = vector.load %arg8[%c0_21, %c127] : memref<8x768xf32, #tpu.memory_space<vmem>>, vector<8x512xf32>
    %c3 = arith.constant 3 : index
    %c0_22 = arith.constant 0 : index
    %c0_23 = arith.constant 0 : index
    %25 = vector.load %arg6[%c3, %c0_22, %c0_23] : memref<9x1x512xf32, #tpu.memory_space<vmem>>, vector<1x1x512xf32>
    %26 = vector.shape_cast %25 : vector<1x1x512xf32> to vector<1x512xf32>
    %27 = vector.broadcast %26 : vector<1x512xf32> to vector<8x512xf32>
    %28 = arith.mulf %24, %27 : vector<8x512xf32>
    %c0_24 = arith.constant 0 : index
    %c128_25 = arith.constant 128 : index
    %29 = vector.load %arg8[%c0_24, %c128_25] : memref<8x768xf32, #tpu.memory_space<vmem>>, vector<8x512xf32>
    %c0_26 = arith.constant 0 : index
    %c129 = arith.constant 129 : index
    %30 = vector.load %arg8[%c0_26, %c129] : memref<8x768xf32, #tpu.memory_space<vmem>>, vector<8x512xf32>
    %c5 = arith.constant 5 : index
    %c0_27 = arith.constant 0 : index
    %c0_28 = arith.constant 0 : index
    %31 = vector.load %arg6[%c5, %c0_27, %c0_28] : memref<9x1x512xf32, #tpu.memory_space<vmem>>, vector<1x1x512xf32>
    %32 = vector.shape_cast %31 : vector<1x1x512xf32> to vector<1x512xf32>
    %33 = vector.broadcast %32 : vector<1x512xf32> to vector<8x512xf32>
    %34 = arith.mulf %30, %33 : vector<8x512xf32>
    %c0_29 = arith.constant 0 : index
    %c143 = arith.constant 143 : index
    %35 = vector.load %arg8[%c0_29, %c143] : memref<8x768xf32, #tpu.memory_space<vmem>>, vector<8x512xf32>
    %c6 = arith.constant 6 : index
    %c0_30 = arith.constant 0 : index
    %c0_31 = arith.constant 0 : index
    %36 = vector.load %arg6[%c6, %c0_30, %c0_31] : memref<9x1x512xf32, #tpu.memory_space<vmem>>, vector<1x1x512xf32>
    %37 = vector.shape_cast %36 : vector<1x1x512xf32> to vector<1x512xf32>
    %38 = vector.broadcast %37 : vector<1x512xf32> to vector<8x512xf32>
    %39 = arith.mulf %35, %38 : vector<8x512xf32>
    %c0_32 = arith.constant 0 : index
    %c144 = arith.constant 144 : index
    %40 = vector.load %arg8[%c0_32, %c144] : memref<8x768xf32, #tpu.memory_space<vmem>>, vector<8x512xf32>
    %c7 = arith.constant 7 : index
    %c0_33 = arith.constant 0 : index
    %c0_34 = arith.constant 0 : index
    %41 = vector.load %arg6[%c7, %c0_33, %c0_34] : memref<9x1x512xf32, #tpu.memory_space<vmem>>, vector<1x1x512xf32>
    %42 = vector.shape_cast %41 : vector<1x1x512xf32> to vector<1x512xf32>
    %43 = vector.broadcast %42 : vector<1x512xf32> to vector<8x512xf32>
    %44 = arith.mulf %40, %43 : vector<8x512xf32>
    %c0_35 = arith.constant 0 : index
    %c145 = arith.constant 145 : index
    %45 = vector.load %arg8[%c0_35, %c145] : memref<8x768xf32, #tpu.memory_space<vmem>>, vector<8x512xf32>
    %c8 = arith.constant 8 : index
    %c0_36 = arith.constant 0 : index
    %c0_37 = arith.constant 0 : index
    %46 = vector.load %arg6[%c8, %c0_36, %c0_37] : memref<9x1x512xf32, #tpu.memory_space<vmem>>, vector<1x1x512xf32>
    %47 = vector.shape_cast %46 : vector<1x1x512xf32> to vector<1x512xf32>
    %48 = vector.broadcast %47 : vector<1x512xf32> to vector<8x512xf32>
    %49 = arith.mulf %45, %48 : vector<8x512xf32>
    %50 = tpu.concatenate %13, %18, %23, %28, %29, %34, %39, %44, %49 in 0 : vector<8x512xf32>, vector<8x512xf32>, vector<8x512xf32>, vector<8x512xf32>, vector<8x512xf32>, vector<8x512xf32>, vector<8x512xf32>, vector<8x512xf32>, vector<8x512xf32> -> vector<72x512xf32>
    %cst_38 = arith.constant dense<0.000000e+00> : vector<8x512xf32>
    %51 = tpu.matmul %6, %50, %cst_38 {dimension_numbers = #tpu.dot_dimension_numbers<[1], [0], [0], [1], [0, 0, 1, 1], [], []>} : vector<8x72xf32>, vector<72x512xf32>, vector<8x512xf32> -> vector<8x512xf32>
    %52 = vector.broadcast %8 : vector<8x1xf32> to vector<8x512xf32>
    %53 = arith.addf %51, %52 : vector<8x512xf32>
    %cst_39 = arith.constant 0.000000e+00 : f32
    %54 = vector.broadcast %cst_39 : f32 to vector<8x512xf32>
    %55 = arith.maximumf %53, %54 : vector<8x512xf32>
    %c0_40 = arith.constant 0 : index
    %c128_41 = arith.constant 128 : index
    %56 = vector.load %arg8[%c0_40, %c128_41] : memref<8x768xf32, #tpu.memory_space<vmem>>, vector<8x512xf32>
    tpu.vector_store %arg8[%c0_40, %c128_41], %55 {strides = array<i32>} : memref<8x768xf32, #tpu.memory_space<vmem>>, vector<8x512xf32>,
    %c0_42 = arith.constant 0 : index
    %c0_43 = arith.constant 0 : index
    %c0_44 = arith.constant 0 : index
    %57 = vector.load %arg4[%c0_42, %c0_43, %c0_44] : memref<2x8x72xf32, #tpu.memory_space<vmem>>, vector<1x8x72xf32>
    %58 = vector.shape_cast %57 : vector<1x8x72xf32> to vector<8x72xf32>
    %c0_45 = arith.constant 0 : index
    %c0_46 = arith.constant 0 : index
    %c0_47 = arith.constant 0 : index
    %59 = vector.load %arg5[%c0_45, %c0_46, %c0_47] : memref<2x8x1xf32, #tpu.memory_space<vmem>>, vector<1x8x1xf32>
    %60 = vector.shape_cast %59 : vector<1x8x1xf32> to vector<8x1xf32>
    %c0_48 = arith.constant 0 : index
    %c111_49 = arith.constant 111 : index
    %61 = vector.load %arg8[%c0_48, %c111_49] : memref<8x768xf32, #tpu.memory_space<vmem>>, vector<8x512xf32>
    %c0_50 = arith.constant 0 : index
    %c0_51 = arith.constant 0 : index
    %c0_52 = arith.constant 0 : index
    %62 = vector.load %arg6[%c0_50, %c0_51, %c0_52] : memref<9x1x512xf32, #tpu.memory_space<vmem>>, vector<1x1x512xf32>
    %63 = vector.shape_cast %62 : vector<1x1x512xf32> to vector<1x512xf32>
    %64 = vector.broadcast %63 : vector<1x512xf32> to vector<8x512xf32>
    %65 = arith.mulf %61, %64 : vector<8x512xf32>
    %c0_53 = arith.constant 0 : index
    %c112_54 = arith.constant 112 : index
    %66 = vector.load %arg8[%c0_53, %c112_54] : memref<8x768xf32, #tpu.memory_space<vmem>>, vector<8x512xf32>
    %c1_55 = arith.constant 1 : index
    %c0_56 = arith.constant 0 : index
    %c0_57 = arith.constant 0 : index
    %67 = vector.load %arg6[%c1_55, %c0_56, %c0_57] : memref<9x1x512xf32, #tpu.memory_space<vmem>>, vector<1x1x512xf32>
    %68 = vector.shape_cast %67 : vector<1x1x512xf32> to vector<1x512xf32>
    %69 = vector.broadcast %68 : vector<1x512xf32> to vector<8x512xf32>
    %70 = arith.mulf %66, %69 : vector<8x512xf32>
    %c0_58 = arith.constant 0 : index
    %c113_59 = arith.constant 113 : index
    %71 = vector.load %arg8[%c0_58, %c113_59] : memref<8x768xf32, #tpu.memory_space<vmem>>, vector<8x512xf32>
    %c2_60 = arith.constant 2 : index
    %c0_61 = arith.constant 0 : index
    %c0_62 = arith.constant 0 : index
    %72 = vector.load %arg6[%c2_60, %c0_61, %c0_62] : memref<9x1x512xf32, #tpu.memory_space<vmem>>, vector<1x1x512xf32>
    %73 = vector.shape_cast %72 : vector<1x1x512xf32> to vector<1x512xf32>
    %74 = vector.broadcast %73 : vector<1x512xf32> to vector<8x512xf32>
    %75 = arith.mulf %71, %74 : vector<8x512xf32>
    %c0_63 = arith.constant 0 : index
    %c127_64 = arith.constant 127 : index
    %76 = vector.load %arg8[%c0_63, %c127_64] : memref<8x768xf32, #tpu.memory_space<vmem>>, vector<8x512xf32>
    %c3_65 = arith.constant 3 : index
    %c0_66 = arith.constant 0 : index
    %c0_67 = arith.constant 0 : index
    %77 = vector.load %arg6[%c3_65, %c0_66, %c0_67] : memref<9x1x512xf32, #tpu.memory_space<vmem>>, vector<1x1x512xf32>
    %78 = vector.shape_cast %77 : vector<1x1x512xf32> to vector<1x512xf32>
    %79 = vector.broadcast %78 : vector<1x512xf32> to vector<8x512xf32>
    %80 = arith.mulf %76, %79 : vector<8x512xf32>
    %c0_68 = arith.constant 0 : index
    %c128_69 = arith.constant 128 : index
    %81 = vector.load %arg8[%c0_68, %c128_69] : memref<8x768xf32, #tpu.memory_space<vmem>>, vector<8x512xf32>
    %c0_70 = arith.constant 0 : index
    %c129_71 = arith.constant 129 : index
    %82 = vector.load %arg8[%c0_70, %c129_71] : memref<8x768xf32, #tpu.memory_space<vmem>>, vector<8x512xf32>
    %c5_72 = arith.constant 5 : index
    %c0_73 = arith.constant 0 : index
    %c0_74 = arith.constant 0 : index
    %83 = vector.load %arg6[%c5_72, %c0_73, %c0_74] : memref<9x1x512xf32, #tpu.memory_space<vmem>>, vector<1x1x512xf32>
    %84 = vector.shape_cast %83 : vector<1x1x512xf32> to vector<1x512xf32>
    %85 = vector.broadcast %84 : vector<1x512xf32> to vector<8x512xf32>
    %86 = arith.mulf %82, %85 : vector<8x512xf32>
    %c0_75 = arith.constant 0 : index
    %c143_76 = arith.constant 143 : index
    %87 = vector.load %arg8[%c0_75, %c143_76] : memref<8x768xf32, #tpu.memory_space<vmem>>, vector<8x512xf32>
    %c6_77 = arith.constant 6 : index
    %c0_78 = arith.constant 0 : index
    %c0_79 = arith.constant 0 : index
    %88 = vector.load %arg6[%c6_77, %c0_78, %c0_79] : memref<9x1x512xf32, #tpu.memory_space<vmem>>, vector<1x1x512xf32>
    %89 = vector.shape_cast %88 : vector<1x1x512xf32> to vector<1x512xf32>
    %90 = vector.broadcast %89 : vector<1x512xf32> to vector<8x512xf32>
    %91 = arith.mulf %87, %90 : vector<8x512xf32>
    %c0_80 = arith.constant 0 : index
    %c144_81 = arith.constant 144 : index
    %92 = vector.load %arg8[%c0_80, %c144_81] : memref<8x768xf32, #tpu.memory_space<vmem>>, vector<8x512xf32>
    %c7_82 = arith.constant 7 : index
    %c0_83 = arith.constant 0 : index
    %c0_84 = arith.constant 0 : index
    %93 = vector.load %arg6[%c7_82, %c0_83, %c0_84] : memref<9x1x512xf32, #tpu.memory_space<vmem>>, vector<1x1x512xf32>
    %94 = vector.shape_cast %93 : vector<1x1x512xf32> to vector<1x512xf32>
    %95 = vector.broadcast %94 : vector<1x512xf32> to vector<8x512xf32>
    %96 = arith.mulf %92, %95 : vector<8x512xf32>
    %c0_85 = arith.constant 0 : index
    %c145_86 = arith.constant 145 : index
    %97 = vector.load %arg8[%c0_85, %c145_86] : memref<8x768xf32, #tpu.memory_space<vmem>>, vector<8x512xf32>
    %c8_87 = arith.constant 8 : index
    %c0_88 = arith.constant 0 : index
    %c0_89 = arith.constant 0 : index
    %98 = vector.load %arg6[%c8_87, %c0_88, %c0_89] : memref<9x1x512xf32, #tpu.memory_space<vmem>>, vector<1x1x512xf32>
    %99 = vector.shape_cast %98 : vector<1x1x512xf32> to vector<1x512xf32>
    %100 = vector.broadcast %99 : vector<1x512xf32> to vector<8x512xf32>
    %101 = arith.mulf %97, %100 : vector<8x512xf32>
    %102 = tpu.concatenate %65, %70, %75, %80, %81, %86, %91, %96, %101 in 0 : vector<8x512xf32>, vector<8x512xf32>, vector<8x512xf32>, vector<8x512xf32>, vector<8x512xf32>, vector<8x512xf32>, vector<8x512xf32>, vector<8x512xf32>, vector<8x512xf32> -> vector<72x512xf32>
    %cst_90 = arith.constant dense<0.000000e+00> : vector<8x512xf32>
    %103 = tpu.matmul %58, %102, %cst_90 {dimension_numbers = #tpu.dot_dimension_numbers<[1], [0], [0], [1], [0, 0, 1, 1], [], []>} : vector<8x72xf32>, vector<72x512xf32>, vector<8x512xf32> -> vector<8x512xf32>
    %104 = vector.broadcast %60 : vector<8x1xf32> to vector<8x512xf32>
    %105 = arith.addf %103, %104 : vector<8x512xf32>
    %106 = arith.addf %105, %3 : vector<8x512xf32>
    %c0_91 = arith.constant 0 : index
    %c128_92 = arith.constant 128 : index
    %107 = vector.load %arg8[%c0_91, %c128_92] : memref<8x768xf32, #tpu.memory_space<vmem>>, vector<8x512xf32>
    tpu.vector_store %arg8[%c0_91, %c128_92], %106 {strides = array<i32>} : memref<8x768xf32, #tpu.memory_space<vmem>>, vector<8x512xf32>,
    %c1_93 = arith.constant 1 : index
    %c0_94 = arith.constant 0 : index
    %c0_95 = arith.constant 0 : index
    %108 = vector.load %arg2[%c1_93, %c0_94, %c0_95] : memref<2x8x72xf32, #tpu.memory_space<vmem>>, vector<1x8x72xf32>
    %109 = vector.shape_cast %108 : vector<1x8x72xf32> to vector<8x72xf32>
    %c1_96 = arith.constant 1 : index
    %c0_97 = arith.constant 0 : index
    %c0_98 = arith.constant 0 : index
    %110 = vector.load %arg3[%c1_96, %c0_97, %c0_98] : memref<2x8x1xf32, #tpu.memory_space<vmem>>, vector<1x8x1xf32>
    %111 = vector.shape_cast %110 : vector<1x8x1xf32> to vector<8x1xf32>
    %c0_99 = arith.constant 0 : index
    %c111_100 = arith.constant 111 : index
    %112 = vector.load %arg8[%c0_99, %c111_100] : memref<8x768xf32, #tpu.memory_space<vmem>>, vector<8x512xf32>
    %c0_101 = arith.constant 0 : index
    %c0_102 = arith.constant 0 : index
    %c0_103 = arith.constant 0 : index
    %113 = vector.load %arg6[%c0_101, %c0_102, %c0_103] : memref<9x1x512xf32, #tpu.memory_space<vmem>>, vector<1x1x512xf32>
    %114 = vector.shape_cast %113 : vector<1x1x512xf32> to vector<1x512xf32>
    %115 = vector.broadcast %114 : vector<1x512xf32> to vector<8x512xf32>
    %116 = arith.mulf %112, %115 : vector<8x512xf32>
    %c0_104 = arith.constant 0 : index
    %c112_105 = arith.constant 112 : index
    %117 = vector.load %arg8[%c0_104, %c112_105] : memref<8x768xf32, #tpu.memory_space<vmem>>, vector<8x512xf32>
    %c1_106 = arith.constant 1 : index
    %c0_107 = arith.constant 0 : index
    %c0_108 = arith.constant 0 : index
    %118 = vector.load %arg6[%c1_106, %c0_107, %c0_108] : memref<9x1x512xf32, #tpu.memory_space<vmem>>, vector<1x1x512xf32>
    %119 = vector.shape_cast %118 : vector<1x1x512xf32> to vector<1x512xf32>
    %120 = vector.broadcast %119 : vector<1x512xf32> to vector<8x512xf32>
    %121 = arith.mulf %117, %120 : vector<8x512xf32>
    %c0_109 = arith.constant 0 : index
    %c113_110 = arith.constant 113 : index
    %122 = vector.load %arg8[%c0_109, %c113_110] : memref<8x768xf32, #tpu.memory_space<vmem>>, vector<8x512xf32>
    %c2_111 = arith.constant 2 : index
    %c0_112 = arith.constant 0 : index
    %c0_113 = arith.constant 0 : index
    %123 = vector.load %arg6[%c2_111, %c0_112, %c0_113] : memref<9x1x512xf32, #tpu.memory_space<vmem>>, vector<1x1x512xf32>
    %124 = vector.shape_cast %123 : vector<1x1x512xf32> to vector<1x512xf32>
    %125 = vector.broadcast %124 : vector<1x512xf32> to vector<8x512xf32>
    %126 = arith.mulf %122, %125 : vector<8x512xf32>
    %c0_114 = arith.constant 0 : index
    %c127_115 = arith.constant 127 : index
    %127 = vector.load %arg8[%c0_114, %c127_115] : memref<8x768xf32, #tpu.memory_space<vmem>>, vector<8x512xf32>
    %c3_116 = arith.constant 3 : index
    %c0_117 = arith.constant 0 : index
    %c0_118 = arith.constant 0 : index
    %128 = vector.load %arg6[%c3_116, %c0_117, %c0_118] : memref<9x1x512xf32, #tpu.memory_space<vmem>>, vector<1x1x512xf32>
    %129 = vector.shape_cast %128 : vector<1x1x512xf32> to vector<1x512xf32>
    %130 = vector.broadcast %129 : vector<1x512xf32> to vector<8x512xf32>
    %131 = arith.mulf %127, %130 : vector<8x512xf32>
    %c0_119 = arith.constant 0 : index
    %c128_120 = arith.constant 128 : index
    %132 = vector.load %arg8[%c0_119, %c128_120] : memref<8x768xf32, #tpu.memory_space<vmem>>, vector<8x512xf32>
    %c0_121 = arith.constant 0 : index
    %c129_122 = arith.constant 129 : index
    %133 = vector.load %arg8[%c0_121, %c129_122] : memref<8x768xf32, #tpu.memory_space<vmem>>, vector<8x512xf32>
    %c5_123 = arith.constant 5 : index
    %c0_124 = arith.constant 0 : index
    %c0_125 = arith.constant 0 : index
    %134 = vector.load %arg6[%c5_123, %c0_124, %c0_125] : memref<9x1x512xf32, #tpu.memory_space<vmem>>, vector<1x1x512xf32>
    %135 = vector.shape_cast %134 : vector<1x1x512xf32> to vector<1x512xf32>
    %136 = vector.broadcast %135 : vector<1x512xf32> to vector<8x512xf32>
    %137 = arith.mulf %133, %136 : vector<8x512xf32>
    %c0_126 = arith.constant 0 : index
    %c143_127 = arith.constant 143 : index
    %138 = vector.load %arg8[%c0_126, %c143_127] : memref<8x768xf32, #tpu.memory_space<vmem>>, vector<8x512xf32>
    %c6_128 = arith.constant 6 : index
    %c0_129 = arith.constant 0 : index
    %c0_130 = arith.constant 0 : index
    %139 = vector.load %arg6[%c6_128, %c0_129, %c0_130] : memref<9x1x512xf32, #tpu.memory_space<vmem>>, vector<1x1x512xf32>
    %140 = vector.shape_cast %139 : vector<1x1x512xf32> to vector<1x512xf32>
    %141 = vector.broadcast %140 : vector<1x512xf32> to vector<8x512xf32>
    %142 = arith.mulf %138, %141 : vector<8x512xf32>
    %c0_131 = arith.constant 0 : index
    %c144_132 = arith.constant 144 : index
    %143 = vector.load %arg8[%c0_131, %c144_132] : memref<8x768xf32, #tpu.memory_space<vmem>>, vector<8x512xf32>
    %c7_133 = arith.constant 7 : index
    %c0_134 = arith.constant 0 : index
    %c0_135 = arith.constant 0 : index
    %144 = vector.load %arg6[%c7_133, %c0_134, %c0_135] : memref<9x1x512xf32, #tpu.memory_space<vmem>>, vector<1x1x512xf32>
    %145 = vector.shape_cast %144 : vector<1x1x512xf32> to vector<1x512xf32>
    %146 = vector.broadcast %145 : vector<1x512xf32> to vector<8x512xf32>
    %147 = arith.mulf %143, %146 : vector<8x512xf32>
    %c0_136 = arith.constant 0 : index
    %c145_137 = arith.constant 145 : index
    %148 = vector.load %arg8[%c0_136, %c145_137] : memref<8x768xf32, #tpu.memory_space<vmem>>, vector<8x512xf32>
    %c8_138 = arith.constant 8 : index
    %c0_139 = arith.constant 0 : index
    %c0_140 = arith.constant 0 : index
    %149 = vector.load %arg6[%c8_138, %c0_139, %c0_140] : memref<9x1x512xf32, #tpu.memory_space<vmem>>, vector<1x1x512xf32>
    %150 = vector.shape_cast %149 : vector<1x1x512xf32> to vector<1x512xf32>
    %151 = vector.broadcast %150 : vector<1x512xf32> to vector<8x512xf32>
    %152 = arith.mulf %148, %151 : vector<8x512xf32>
    %153 = tpu.concatenate %116, %121, %126, %131, %132, %137, %142, %147, %152 in 0 : vector<8x512xf32>, vector<8x512xf32>, vector<8x512xf32>, vector<8x512xf32>, vector<8x512xf32>, vector<8x512xf32>, vector<8x512xf32>, vector<8x512xf32>, vector<8x512xf32> -> vector<72x512xf32>
    %cst_141 = arith.constant dense<0.000000e+00> : vector<8x512xf32>
    %154 = tpu.matmul %109, %153, %cst_141 {dimension_numbers = #tpu.dot_dimension_numbers<[1], [0], [0], [1], [0, 0, 1, 1], [], []>} : vector<8x72xf32>, vector<72x512xf32>, vector<8x512xf32> -> vector<8x512xf32>
    %155 = vector.broadcast %111 : vector<8x1xf32> to vector<8x512xf32>
    %156 = arith.addf %154, %155 : vector<8x512xf32>
    %cst_142 = arith.constant 0.000000e+00 : f32
    %157 = vector.broadcast %cst_142 : f32 to vector<8x512xf32>
    %158 = arith.maximumf %156, %157 : vector<8x512xf32>
    %c0_143 = arith.constant 0 : index
    %c128_144 = arith.constant 128 : index
    %159 = vector.load %arg8[%c0_143, %c128_144] : memref<8x768xf32, #tpu.memory_space<vmem>>, vector<8x512xf32>
    tpu.vector_store %arg8[%c0_143, %c128_144], %158 {strides = array<i32>} : memref<8x768xf32, #tpu.memory_space<vmem>>, vector<8x512xf32>,
    %c1_145 = arith.constant 1 : index
    %c0_146 = arith.constant 0 : index
    %c0_147 = arith.constant 0 : index
    %160 = vector.load %arg4[%c1_145, %c0_146, %c0_147] : memref<2x8x72xf32, #tpu.memory_space<vmem>>, vector<1x8x72xf32>
    %161 = vector.shape_cast %160 : vector<1x8x72xf32> to vector<8x72xf32>
    %c1_148 = arith.constant 1 : index
    %c0_149 = arith.constant 0 : index
    %c0_150 = arith.constant 0 : index
    %162 = vector.load %arg5[%c1_148, %c0_149, %c0_150] : memref<2x8x1xf32, #tpu.memory_space<vmem>>, vector<1x8x1xf32>
    %163 = vector.shape_cast %162 : vector<1x8x1xf32> to vector<8x1xf32>
    %c0_151 = arith.constant 0 : index
    %c111_152 = arith.constant 111 : index
    %164 = vector.load %arg8[%c0_151, %c111_152] : memref<8x768xf32, #tpu.memory_space<vmem>>, vector<8x512xf32>
    %c0_153 = arith.constant 0 : index
    %c0_154 = arith.constant 0 : index
    %c0_155 = arith.constant 0 : index
    %165 = vector.load %arg6[%c0_153, %c0_154, %c0_155] : memref<9x1x512xf32, #tpu.memory_space<vmem>>, vector<1x1x512xf32>
    %166 = vector.shape_cast %165 : vector<1x1x512xf32> to vector<1x512xf32>
    %167 = vector.broadcast %166 : vector<1x512xf32> to vector<8x512xf32>
    %168 = arith.mulf %164, %167 : vector<8x512xf32>
    %c0_156 = arith.constant 0 : index
    %c112_157 = arith.constant 112 : index
    %169 = vector.load %arg8[%c0_156, %c112_157] : memref<8x768xf32, #tpu.memory_space<vmem>>, vector<8x512xf32>
    %c1_158 = arith.constant 1 : index
    %c0_159 = arith.constant 0 : index
    %c0_160 = arith.constant 0 : index
    %170 = vector.load %arg6[%c1_158, %c0_159, %c0_160] : memref<9x1x512xf32, #tpu.memory_space<vmem>>, vector<1x1x512xf32>
    %171 = vector.shape_cast %170 : vector<1x1x512xf32> to vector<1x512xf32>
    %172 = vector.broadcast %171 : vector<1x512xf32> to vector<8x512xf32>
    %173 = arith.mulf %169, %172 : vector<8x512xf32>
    %c0_161 = arith.constant 0 : index
    %c113_162 = arith.constant 113 : index
    %174 = vector.load %arg8[%c0_161, %c113_162] : memref<8x768xf32, #tpu.memory_space<vmem>>, vector<8x512xf32>
    %c2_163 = arith.constant 2 : index
    %c0_164 = arith.constant 0 : index
    %c0_165 = arith.constant 0 : index
    %175 = vector.load %arg6[%c2_163, %c0_164, %c0_165] : memref<9x1x512xf32, #tpu.memory_space<vmem>>, vector<1x1x512xf32>
    %176 = vector.shape_cast %175 : vector<1x1x512xf32> to vector<1x512xf32>
    %177 = vector.broadcast %176 : vector<1x512xf32> to vector<8x512xf32>
    %178 = arith.mulf %174, %177 : vector<8x512xf32>
    %c0_166 = arith.constant 0 : index
    %c127_167 = arith.constant 127 : index
    %179 = vector.load %arg8[%c0_166, %c127_167] : memref<8x768xf32, #tpu.memory_space<vmem>>, vector<8x512xf32>
    %c3_168 = arith.constant 3 : index
    %c0_169 = arith.constant 0 : index
    %c0_170 = arith.constant 0 : index
    %180 = vector.load %arg6[%c3_168, %c0_169, %c0_170] : memref<9x1x512xf32, #tpu.memory_space<vmem>>, vector<1x1x512xf32>
    %181 = vector.shape_cast %180 : vector<1x1x512xf32> to vector<1x512xf32>
    %182 = vector.broadcast %181 : vector<1x512xf32> to vector<8x512xf32>
    %183 = arith.mulf %179, %182 : vector<8x512xf32>
    %c0_171 = arith.constant 0 : index
    %c128_172 = arith.constant 128 : index
    %184 = vector.load %arg8[%c0_171, %c128_172] : memref<8x768xf32, #tpu.memory_space<vmem>>, vector<8x512xf32>
    %c0_173 = arith.constant 0 : index
    %c129_174 = arith.constant 129 : index
    %185 = vector.load %arg8[%c0_173, %c129_174] : memref<8x768xf32, #tpu.memory_space<vmem>>, vector<8x512xf32>
    %c5_175 = arith.constant 5 : index
    %c0_176 = arith.constant 0 : index
    %c0_177 = arith.constant 0 : index
    %186 = vector.load %arg6[%c5_175, %c0_176, %c0_177] : memref<9x1x512xf32, #tpu.memory_space<vmem>>, vector<1x1x512xf32>
    %187 = vector.shape_cast %186 : vector<1x1x512xf32> to vector<1x512xf32>
    %188 = vector.broadcast %187 : vector<1x512xf32> to vector<8x512xf32>
    %189 = arith.mulf %185, %188 : vector<8x512xf32>
    %c0_178 = arith.constant 0 : index
    %c143_179 = arith.constant 143 : index
    %190 = vector.load %arg8[%c0_178, %c143_179] : memref<8x768xf32, #tpu.memory_space<vmem>>, vector<8x512xf32>
    %c6_180 = arith.constant 6 : index
    %c0_181 = arith.constant 0 : index
    %c0_182 = arith.constant 0 : index
    %191 = vector.load %arg6[%c6_180, %c0_181, %c0_182] : memref<9x1x512xf32, #tpu.memory_space<vmem>>, vector<1x1x512xf32>
    %192 = vector.shape_cast %191 : vector<1x1x512xf32> to vector<1x512xf32>
    %193 = vector.broadcast %192 : vector<1x512xf32> to vector<8x512xf32>
    %194 = arith.mulf %190, %193 : vector<8x512xf32>
    %c0_183 = arith.constant 0 : index
    %c144_184 = arith.constant 144 : index
    %195 = vector.load %arg8[%c0_183, %c144_184] : memref<8x768xf32, #tpu.memory_space<vmem>>, vector<8x512xf32>
    %c7_185 = arith.constant 7 : index
    %c0_186 = arith.constant 0 : index
    %c0_187 = arith.constant 0 : index
    %196 = vector.load %arg6[%c7_185, %c0_186, %c0_187] : memref<9x1x512xf32, #tpu.memory_space<vmem>>, vector<1x1x512xf32>
    %197 = vector.shape_cast %196 : vector<1x1x512xf32> to vector<1x512xf32>
    %198 = vector.broadcast %197 : vector<1x512xf32> to vector<8x512xf32>
    %199 = arith.mulf %195, %198 : vector<8x512xf32>
    %c0_188 = arith.constant 0 : index
    %c145_189 = arith.constant 145 : index
    %200 = vector.load %arg8[%c0_188, %c145_189] : memref<8x768xf32, #tpu.memory_space<vmem>>, vector<8x512xf32>
    %c8_190 = arith.constant 8 : index
    %c0_191 = arith.constant 0 : index
    %c0_192 = arith.constant 0 : index
    %201 = vector.load %arg6[%c8_190, %c0_191, %c0_192] : memref<9x1x512xf32, #tpu.memory_space<vmem>>, vector<1x1x512xf32>
    %202 = vector.shape_cast %201 : vector<1x1x512xf32> to vector<1x512xf32>
    %203 = vector.broadcast %202 : vector<1x512xf32> to vector<8x512xf32>
    %204 = arith.mulf %200, %203 : vector<8x512xf32>
    %205 = tpu.concatenate %168, %173, %178, %183, %184, %189, %194, %199, %204 in 0 : vector<8x512xf32>, vector<8x512xf32>, vector<8x512xf32>, vector<8x512xf32>, vector<8x512xf32>, vector<8x512xf32>, vector<8x512xf32>, vector<8x512xf32>, vector<8x512xf32> -> vector<72x512xf32>
    %cst_193 = arith.constant dense<0.000000e+00> : vector<8x512xf32>
    %206 = tpu.matmul %161, %205, %cst_193 {dimension_numbers = #tpu.dot_dimension_numbers<[1], [0], [0], [1], [0, 0, 1, 1], [], []>} : vector<8x72xf32>, vector<72x512xf32>, vector<8x512xf32> -> vector<8x512xf32>
    %207 = vector.broadcast %163 : vector<8x1xf32> to vector<8x512xf32>
    %208 = arith.addf %206, %207 : vector<8x512xf32>
    %209 = arith.addf %208, %106 : vector<8x512xf32>
    %c0_194 = arith.constant 0 : index
    %c0_195 = arith.constant 0 : index
    %210 = vector.load %arg7[%c0_194, %c0_195] : memref<8x512xf32, #tpu.memory_space<vmem>>, vector<8x512xf32>
    tpu.vector_store %arg7[%c0_194, %c0_195], %209 {strides = array<i32>} : memref<8x512xf32, #tpu.memory_space<vmem>>, vector<8x512xf32>,
    return
  }
  func.func @transform_0(%arg0: i32) -> (i32, i32) {
    %c0_i32 = arith.constant 0 : i32
    %c0_i32_0 = arith.constant 0 : i32
    %c0_i32_1 = arith.constant 0 : i32
    return %c0_i32, %c0_i32_0 : i32, i32
  }
  func.func @transform_1(%arg0: i32) -> (i32, i32, i32) {
    %c0_i32 = arith.constant 0 : i32
    %c0_i32_0 = arith.constant 0 : i32
    %c0_i32_1 = arith.constant 0 : i32
    %c0_i32_2 = arith.constant 0 : i32
    return %c0_i32, %c0_i32_0, %c0_i32_1 : i32, i32, i32
  }
  func.func @transform_2(%arg0: i32) -> (i32, i32, i32) {
    %c0_i32 = arith.constant 0 : i32
    %c0_i32_0 = arith.constant 0 : i32
    %c0_i32_1 = arith.constant 0 : i32
    %c0_i32_2 = arith.constant 0 : i32
    return %c0_i32, %c0_i32_0, %c0_i32_1 : i32, i32, i32
  }
  func.func @transform_3(%arg0: i32) -> (i32, i32, i32) {
    %c0_i32 = arith.constant 0 : i32
    %c0_i32_0 = arith.constant 0 : i32
    %c0_i32_1 = arith.constant 0 : i32
    %c0_i32_2 = arith.constant 0 : i32
    return %c0_i32, %c0_i32_0, %c0_i32_1 : i32, i32, i32
  }
  func.func @transform_4(%arg0: i32) -> (i32, i32, i32) {
    %c0_i32 = arith.constant 0 : i32
    %c0_i32_0 = arith.constant 0 : i32
    %c0_i32_1 = arith.constant 0 : i32
    %c0_i32_2 = arith.constant 0 : i32
    return %c0_i32, %c0_i32_0, %c0_i32_1 : i32, i32, i32
  }
  func.func @transform_5(%arg0: i32) -> (i32, i32, i32) {
    %c0_i32 = arith.constant 0 : i32
    %c0_i32_0 = arith.constant 0 : i32
    %c0_i32_1 = arith.constant 0 : i32
    %c0_i32_2 = arith.constant 0 : i32
    return %c0_i32, %c0_i32_0, %c0_i32_1 : i32, i32, i32
  }
  func.func @transform_6(%arg0: i32) -> (i32, i32) {
    %c0_i32 = arith.constant 0 : i32
    %c0_i32_0 = arith.constant 0 : i32
    %c0_i32_1 = arith.constant 0 : i32
    return %c0_i32, %c0_i32_0 : i32, i32
  }
}

</mosaic_0001>

<llo_original>
// kernel: tpu_custom_call.1
$region0: #{tpu_custom_call.1}
  #allocation0 [shape = 'u32[]', space=smem, size = 0x4, offset = 0x4, fixed_abs, tag = 'smem constant byte address 0x4 - core index']
  #allocation1 [shape = 'u32[144,128]{1,0:T(1,128)}', space=vmem, size = 0x12000, scoped, tag = 'internal scratch']
  #allocation2 [shape = 'f32[8,768]{1,0:T(8,128)}', space=vmem, size = 0x6000, scoped, tag = 'scratch operand']
  %s0 = inlined_call_operand.hbm [shape: f32[8,512], index: 0, kind: input, shape index: {}]
  %s1 = inlined_call_operand.vmem [shape: f32[2,8,72], index: 1, kind: input, shape index: {}]
  %s2 = inlined_call_operand.vmem [shape: f32[2,8,1], index: 2, kind: input, shape index: {}]
  %s3 = inlined_call_operand.hbm [shape: f32[2,8,72], index: 3, kind: input, shape index: {}]
  %s4 = inlined_call_operand.vmem [shape: f32[2,8,1], index: 4, kind: input, shape index: {}]
  %s5 = inlined_call_operand.vmem [shape: f32[9,1,512], index: 5, kind: input, shape index: {}]
  %s6 = inlined_call_operand.hbm [shape: f32[8,512], index: 6, kind: output, shape index: {}]
  %s7 = sld [smem:[#allocation0]]
  $region42: #{tpu_custom_call.1} parent=0
    _
  %s9 = ssub.s32 1, %s7
  %s10 = scalar_select 0, %s9, %s7
  $region1: #{tpu_custom_call.1} parent=0
    #allocation3 [shape = 'u8[16384]{0}', space=vmem, size = 0x4000, scoped, tag = 'input window, operand 0, single buffered']
    #allocation4 [shape = 's32[1]{0}', space=sflag, size = 0x4, scoped, tag = 'scoped memory for tpu_custom_call.1']
    #allocation5 [shape = 's32[1]{0}', space=sflag, size = 0x4, scoped, tag = 'scoped memory for tpu_custom_call.1']
    #allocation6 [shape = 'u8[8192]{0}', space=vmem, size = 0x2000, scoped, tag = 'input window, operand 3, single buffered']
    #allocation7 [shape = 's32[1]{0}', space=sflag, size = 0x4, scoped, tag = 'scoped memory for tpu_custom_call.1']
    #allocation8 [shape = 'u8[16384]{0}', space=vmem, size = 0x4000, scoped, tag = 'output window, operand 0, single buffered']
    %11 = vsyncpa [#allocation4], 0
    %12 = vsyncpa [#allocation7], 0
    %13 = vsyncpa [#allocation5], 0
    // Predicated region
    $region2: #{tpu_custom_call.1} parent=1 // pred_check
      _
    $region3: #{tpu_custom_call.1} parent=1 // pred_check_branch
      %15 = sbr.rel (0) target = $region5
    $region4: #{tpu_custom_call.1} parent=1 // pred_region
      %s17 = ssub.s32 512, 512
      %18 = vsyncadd [#allocation4], %s17
      %s20 = sshll.u32 [#allocation3], 4
      %s21 = int_to_ptr.vmem [resolvable:$true] %s20
      %23 = dma.hbm_to_vmem [thread:$0]  %s0, 512, %s21, [#allocation4]
    $region5: #{tpu_custom_call.1} parent=1 // pred_fallthru
      _
    // Predicated region
    $region6: #{tpu_custom_call.1} parent=1 // pred_check
      _
    $region7: #{tpu_custom_call.1} parent=1 // pred_check_branch
      %25 = sbr.rel (0) target = $region9
    $region8: #{tpu_custom_call.1} parent=1 // pred_region
      _
    $region9: #{tpu_custom_call.1} parent=1 // pred_fallthru
      _
    // Predicated region
    $region10: #{tpu_custom_call.1} parent=1 // pred_check
      _
    $region11: #{tpu_custom_call.1} parent=1 // pred_check_branch
      %27 = sbr.rel (0) target = $region13
    $region12: #{tpu_custom_call.1} parent=1 // pred_region
      _
    $region13: #{tpu_custom_call.1} parent=1 // pred_fallthru
      _
    // Predicated region
    $region14: #{tpu_custom_call.1} parent=1 // pred_check
      _
    $region15: #{tpu_custom_call.1} parent=1 // pred_check_branch
      %29 = sbr.rel (0) target = $region17
    $region16: #{tpu_custom_call.1} parent=1 // pred_region
      %s31 = ssub.s32 256, 256
      %32 = vsyncadd [#allocation7], %s31
      %s33 = sshll.u32 [#allocation6], 4
      %s34 = int_to_ptr.vmem [resolvable:$true] %s33
      %39 = dma.hbm_to_vmem [thread:$0]  %s3, 256, %s34, [#allocation7], 128, 128, 8
    $region17: #{tpu_custom_call.1} parent=1 // pred_fallthru
      _
    // Predicated region
    $region18: #{tpu_custom_call.1} parent=1 // pred_check
      _
    $region19: #{tpu_custom_call.1} parent=1 // pred_check_branch
      %41 = sbr.rel (0) target = $region21
    $region20: #{tpu_custom_call.1} parent=1 // pred_region
      _
    $region21: #{tpu_custom_call.1} parent=1 // pred_fallthru
      _
    // Predicated region
    $region22: #{tpu_custom_call.1} parent=1 // pred_check
      _
    $region23: #{tpu_custom_call.1} parent=1 // pred_check_branch
      %43 = sbr.rel (0) target = $region25
    $region24: #{tpu_custom_call.1} parent=1 // pred_region
      _
    $region25: #{tpu_custom_call.1} parent=1 // pred_fallthru
      _
    // Predicated region
    $region26: #{tpu_custom_call.1} parent=1 // pred_check
      _
    $region27: #{tpu_custom_call.1} parent=1 // pred_check_branch
      %45 = sbr.rel (0) target = $region29
    $region28: #{tpu_custom_call.1} parent=1 // pred_region
      %46 = dma.done [#allocation4], 512
    $region29: #{tpu_custom_call.1} parent=1 // pred_fallthru
      _
    // Predicated region
    $region30: #{tpu_custom_call.1} parent=1 // pred_check
      _
    $region31: #{tpu_custom_call.1} parent=1 // pred_check_branch
      %48 = sbr.rel (0) target = $region33
    $region32: #{tpu_custom_call.1} parent=1 // pred_region
      %49 = dma.done [#allocation7], 256
    $region33: #{tpu_custom_call.1} parent=1 // pred_fallthru
      _
    %50 = vst [vmem:[#allocation2] sm:$0xff] 0.0
    %51 = vst [vmem:[#allocation2 + $0x28] sm:$0xff] 0.0
    %v52 = vld [vmem:[#allocation3] sm:$0xff]
    %v53 = vld [vmem:[#allocation3 + $0x8] sm:$0xff]
    %v54 = vld [vmem:[#allocation3 + $0x10] sm:$0xff]
    %v55 = vld [vmem:[#allocation3 + $0x18] sm:$0xff]
    %56 = vst [vmem:[#allocation2 + $0x8] sm:$0xff] %v52
    %57 = vst [vmem:[#allocation2 + $0x10] sm:$0xff] %v53
    %58 = vst [vmem:[#allocation2 + $0x18] sm:$0xff] %v54
    %59 = vst [vmem:[#allocation2 + $0x20] sm:$0xff] %v55
    %v60 = vld [vmem:[%s1] sm:$0xff]
    %v61 = vld [vmem:[%s2] sm:$0xff]
    %v62 = vld [vmem:[#allocation2] sm:$0xff]
    %v63 = vld [vmem:[#allocation2 + $0x8] sm:$0xff]
    %v64 = vld [vmem:[#allocation2 + $0x10] sm:$0xff]
    %v65 = vld [vmem:[#allocation2 + $0x18] sm:$0xff]
    %v66 = vld [vmem:[#allocation2 + $0x20] sm:$0xff]
    %v67 = vld [vmem:[%s5] sm:$0xf]
    %v69 = vlaneseq
    %v70 = vshrl.u32 %v69, 7
    %v71 = vsub.s32 0, %v70
    %v72 = vrot.slane %v67, %v71
    %v73 = vlaneseq
    %v74 = vshrl.u32 %v73, 7
    %v75 = vsub.s32 1, %v74
    %v76 = vrot.slane %v67, %v75
    %v77 = vlaneseq
    %v78 = vshrl.u32 %v77, 7
    %v79 = vsub.s32 2, %v78
    %v80 = vrot.slane %v67, %v79
    %v81 = vlaneseq
    %v82 = vshrl.u32 %v81, 7
    %v83 = vsub.s32 3, %v82
    %v84 = vrot.slane %v67, %v83
    %85 = vrot.lane.b32.xlu0 %v72, 111
    %v86 = vpop.permute.xlu0 %85
    %87 = vrot.lane.b32.xlu0 %v76, 111
    %v88 = vpop.permute.xlu0 %87
    %89 = vrot.lane.b32.xlu0 %v80, 111
    %v90 = vpop.permute.xlu0 %89
    %91 = vrot.lane.b32.xlu0 %v84, 111
    %v92 = vpop.permute.xlu0 %91
    %vm93 = vcmask 908288
    %v94 = vsel %vm93, %v86, %v88
    %v95 = vsel %vm93, %v88, %v90
    %v96 = vsel %vm93, %v90, %v92
    %v102 = vmul.f32 %v62, %v86
    %v103 = vmul.f32 %v63, %v94
    %v104 = vmul.f32 %v64, %v95
    %v105 = vmul.f32 %v65, %v96
    %v106 = vmul.f32 %v66, %v92
    %s107 = scalar_lea.vmem %s5, 4
    %v108 = vld [vmem:[%s107] sm:$0xf]
    %v110 = vlaneseq
    %v111 = vshrl.u32 %v110, 7
    %v112 = vsub.s32 0, %v111
    %v113 = vrot.slane %v108, %v112
    %v114 = vlaneseq
    %v115 = vshrl.u32 %v114, 7
    %v116 = vsub.s32 1, %v115
    %v117 = vrot.slane %v108, %v116
    %v118 = vlaneseq
    %v119 = vshrl.u32 %v118, 7
    %v120 = vsub.s32 2, %v119
    %v121 = vrot.slane %v108, %v120
    %v122 = vlaneseq
    %v123 = vshrl.u32 %v122, 7
    %v124 = vsub.s32 3, %v123
    %v125 = vrot.slane %v108, %v124
    %126 = vrot.lane.b32.xlu0 %v113, 112
    %v127 = vpop.permute.xlu0 %126
    %128 = vrot.lane.b32.xlu0 %v117, 112
    %v129 = vpop.permute.xlu0 %128
    %130 = vrot.lane.b32.xlu0 %v121, 112
    %v131 = vpop.permute.xlu0 %130
    %132 = vrot.lane.b32.xlu0 %v125, 112
    %v133 = vpop.permute.xlu0 %132
    %vm134 = vcmask 916480
    %v135 = vsel %vm134, %v127, %v129
    %v136 = vsel %vm134, %v129, %v131
    %v137 = vsel %vm134, %v131, %v133
    %v143 = vmul.f32 %v62, %v127
    %v144 = vmul.f32 %v63, %v135
    %v145 = vmul.f32 %v64, %v136
    %v146 = vmul.f32 %v65, %v137
    %v147 = vmul.f32 %v66, %v133
    %s148 = scalar_lea.vmem %s5, 8
    %v149 = vld [vmem:[%s148] sm:$0xf]
    %v151 = vlaneseq
    %v152 = vshrl.u32 %v151, 7
    %v153 = vsub.s32 0, %v152
    %v154 = vrot.slane %v149, %v153
    %v155 = vlaneseq
    %v156 = vshrl.u32 %v155, 7
    %v157 = vsub.s32 1, %v156
    %v158 = vrot.slane %v149, %v157
    %v159 = vlaneseq
    %v160 = vshrl.u32 %v159, 7
    %v161 = vsub.s32 2, %v160
    %v162 = vrot.slane %v149, %v161
    %v163 = vlaneseq
    %v164 = vshrl.u32 %v163, 7
    %v165 = vsub.s32 3, %v164
    %v166 = vrot.slane %v149, %v165
    %167 = vrot.lane.b32.xlu0 %v154, 113
    %v168 = vpop.permute.xlu0 %167
    %169 = vrot.lane.b32.xlu0 %v158, 113
    %v170 = vpop.permute.xlu0 %169
    %171 = vrot.lane.b32.xlu0 %v162, 113
    %v172 = vpop.permute.xlu0 %171
    %173 = vrot.lane.b32.xlu0 %v166, 113
    %v174 = vpop.permute.xlu0 %173
    %vm175 = vcmask 924672
    %v176 = vsel %vm175, %v168, %v170
    %v177 = vsel %vm175, %v170, %v172
    %v178 = vsel %vm175, %v172, %v174
    %v184 = vmul.f32 %v62, %v168
    %v185 = vmul.f32 %v63, %v176
    %v186 = vmul.f32 %v64, %v177
    %v187 = vmul.f32 %v65, %v178
    %v188 = vmul.f32 %v66, %v174
    %s189 = scalar_lea.vmem %s5, 12
    %v190 = vld [vmem:[%s189] sm:$0xf]
    %v192 = vlaneseq
    %v193 = vshrl.u32 %v192, 7
    %v194 = vsub.s32 0, %v193
    %v195 = vrot.slane %v190, %v194
    %v196 = vlaneseq
    %v197 = vshrl.u32 %v196, 7
    %v198 = vsub.s32 1, %v197
    %v199 = vrot.slane %v190, %v198
    %v200 = vlaneseq
    %v201 = vshrl.u32 %v200, 7
    %v202 = vsub.s32 2, %v201
    %v203 = vrot.slane %v190, %v202
    %v204 = vlaneseq
    %v205 = vshrl.u32 %v204, 7
    %v206 = vsub.s32 3, %v205
    %v207 = vrot.slane %v190, %v206
    %208 = vrot.lane.b32.xlu0 %v195, 127
    %v209 = vpop.permute.xlu0 %208
    %210 = vrot.lane.b32.xlu0 %v199, 127
    %v211 = vpop.permute.xlu0 %210
    %212 = vrot.lane.b32.xlu0 %v203, 127
    %v213 = vpop.permute.xlu0 %212
    %214 = vrot.lane.b32.xlu0 %v207, 127
    %v215 = vpop.permute.xlu0 %214
    %vm216 = vcmask 1039360
    %v217 = vsel %vm216, %v209, %v211
    %v218 = vsel %vm216, %v211, %v213
    %v219 = vsel %vm216, %v213, %v215
    %v225 = vmul.f32 %v62, %v209
    %v226 = vmul.f32 %v63, %v217
    %v227 = vmul.f32 %v64, %v218
    %v228 = vmul.f32 %v65, %v219
    %v229 = vmul.f32 %v66, %v215
    %v230 = vld [vmem:[#allocation2 + $0x8] sm:$0xff]
    %v231 = vld [vmem:[#allocation2 + $0x10] sm:$0xff]
    %v232 = vld [vmem:[#allocation2 + $0x18] sm:$0xff]
    %v233 = vld [vmem:[#allocation2 + $0x20] sm:$0xff]
    %v234 = vld [vmem:[#allocation2 + $0x28] sm:$0xff]
    %s235 = scalar_lea.vmem %s5, 20
    %v236 = vld [vmem:[%s235] sm:$0xf]
    %v238 = vlaneseq
    %v239 = vshrl.u32 %v238, 7
    %v240 = vsub.s32 0, %v239
    %v241 = vrot.slane %v236, %v240
    %v242 = vlaneseq
    %v243 = vshrl.u32 %v242, 7
    %v244 = vsub.s32 1, %v243
    %v245 = vrot.slane %v236, %v244
    %v246 = vlaneseq
    %v247 = vshrl.u32 %v246, 7
    %v248 = vsub.s32 2, %v247
    %v249 = vrot.slane %v236, %v248
    %v250 = vlaneseq
    %v251 = vshrl.u32 %v250, 7
    %v252 = vsub.s32 3, %v251
    %v253 = vrot.slane %v236, %v252
    %254 = vrot.lane.b32.xlu0 %v241, 1
    %v255 = vpop.permute.xlu0 %254
    %256 = vrot.lane.b32.xlu0 %v245, 1
    %v257 = vpop.permute.xlu0 %256
    %258 = vrot.lane.b32.xlu0 %v249, 1
    %v259 = vpop.permute.xlu0 %258
    %260 = vrot.lane.b32.xlu0 %v253, 1
    %v261 = vpop.permute.xlu0 %260
    %vm262 = vcmask 7168
    %v263 = vsel %vm262, %v255, %v257
    %v264 = vsel %vm262, %v257, %v259
    %v265 = vsel %vm262, %v259, %v261
    %v271 = vmul.f32 %v230, %v255
    %v272 = vmul.f32 %v231, %v263
    %v273 = vmul.f32 %v232, %v264
    %v274 = vmul.f32 %v233, %v265
    %v275 = vmul.f32 %v234, %v261
    %s276 = scalar_lea.vmem %s5, 24
    %v277 = vld [vmem:[%s276] sm:$0xf]
    %v279 = vlaneseq
    %v280 = vshrl.u32 %v279, 7
    %v281 = vsub.s32 0, %v280
    %v282 = vrot.slane %v277, %v281
    %v283 = vlaneseq
    %v284 = vshrl.u32 %v283, 7
    %v285 = vsub.s32 1, %v284
    %v286 = vrot.slane %v277, %v285
    %v287 = vlaneseq
    %v288 = vshrl.u32 %v287, 7
    %v289 = vsub.s32 2, %v288
    %v290 = vrot.slane %v277, %v289
    %v291 = vlaneseq
    %v292 = vshrl.u32 %v291, 7
    %v293 = vsub.s32 3, %v292
    %v294 = vrot.slane %v277, %v293
    %295 = vrot.lane.b32.xlu0 %v282, 15
    %v296 = vpop.permute.xlu0 %295
    %297 = vrot.lane.b32.xlu0 %v286, 15
    %v298 = vpop.permute.xlu0 %297
    %299 = vrot.lane.b32.xlu0 %v290, 15
    %v300 = vpop.permute.xlu0 %299
    %301 = vrot.lane.b32.xlu0 %v294, 15
    %v302 = vpop.permute.xlu0 %301
    %vm303 = vcmask 121856
    %v304 = vsel %vm303, %v296, %v298
    %v305 = vsel %vm303, %v298, %v300
    %v306 = vsel %vm303, %v300, %v302
    %v312 = vmul.f32 %v230, %v296
    %v313 = vmul.f32 %v231, %v304
    %v314 = vmul.f32 %v232, %v305
    %v315 = vmul.f32 %v233, %v306
    %v316 = vmul.f32 %v234, %v302
    %s317 = scalar_lea.vmem %s5, 28
    %v318 = vld [vmem:[%s317] sm:$0xf]
    %v320 = vlaneseq
    %v321 = vshrl.u32 %v320, 7
    %v322 = vsub.s32 0, %v321
    %v323 = vrot.slane %v318, %v322
    %v324 = vlaneseq
    %v325 = vshrl.u32 %v324, 7
    %v326 = vsub.s32 1, %v325
    %v327 = vrot.slane %v318, %v326
    %v328 = vlaneseq
    %v329 = vshrl.u32 %v328, 7
    %v330 = vsub.s32 2, %v329
    %v331 = vrot.slane %v318, %v330
    %v332 = vlaneseq
    %v333 = vshrl.u32 %v332, 7
    %v334 = vsub.s32 3, %v333
    %v335 = vrot.slane %v318, %v334
    %336 = vrot.lane.b32.xlu0 %v323, 16
    %v337 = vpop.permute.xlu0 %336
    %338 = vrot.lane.b32.xlu0 %v327, 16
    %v339 = vpop.permute.xlu0 %338
    %340 = vrot.lane.b32.xlu0 %v331, 16
    %v341 = vpop.permute.xlu0 %340
    %342 = vrot.lane.b32.xlu0 %v335, 16
    %v343 = vpop.permute.xlu0 %342
    %vm344 = vcmask 130048
    %v345 = vsel %vm344, %v337, %v339
    %v346 = vsel %vm344, %v339, %v341
    %v347 = vsel %vm344, %v341, %v343
    %v353 = vmul.f32 %v230, %v337
    %v354 = vmul.f32 %v231, %v345
    %v355 = vmul.f32 %v232, %v346
    %v356 = vmul.f32 %v233, %v347
    %v357 = vmul.f32 %v234, %v343
    %s358 = scalar_lea.vmem %s5, 32
    %v359 = vld [vmem:[%s358] sm:$0xf]
    %v361 = vlaneseq
    %v362 = vshrl.u32 %v361, 7
    %v363 = vsub.s32 0, %v362
    %v364 = vrot.slane %v359, %v363
    %v365 = vlaneseq
    %v366 = vshrl.u32 %v365, 7
    %v367 = vsub.s32 1, %v366
    %v368 = vrot.slane %v359, %v367
    %v369 = vlaneseq
    %v370 = vshrl.u32 %v369, 7
    %v371 = vsub.s32 2, %v370
    %v372 = vrot.slane %v359, %v371
    %v373 = vlaneseq
    %v374 = vshrl.u32 %v373, 7
    %v375 = vsub.s32 3, %v374
    %v376 = vrot.slane %v359, %v375
    %377 = vrot.lane.b32.xlu0 %v364, 17
    %v378 = vpop.permute.xlu0 %377
    %379 = vrot.lane.b32.xlu0 %v368, 17
    %v380 = vpop.permute.xlu0 %379
    %381 = vrot.lane.b32.xlu0 %v372, 17
    %v382 = vpop.permute.xlu0 %381
    %383 = vrot.lane.b32.xlu0 %v376, 17
    %v384 = vpop.permute.xlu0 %383
    %vm385 = vcmask 138240
    %v386 = vsel %vm385, %v378, %v380
    %v387 = vsel %vm385, %v380, %v382
    %v388 = vsel %vm385, %v382, %v384
    %v394 = vmul.f32 %v230, %v378
    %v395 = vmul.f32 %v231, %v386
    %v396 = vmul.f32 %v232, %v387
    %v397 = vmul.f32 %v233, %v388
    %v398 = vmul.f32 %v234, %v384
    %404 = vrot.lane.b32.xlu0 %v143, 127
    %v405 = vpop.permute.xlu0 %404
    %406 = vrot.lane.b32.xlu0 %v144, 127
    %v407 = vpop.permute.xlu0 %406
    %408 = vrot.lane.b32.xlu0 %v145, 127
    %v409 = vpop.permute.xlu0 %408
    %410 = vrot.lane.b32.xlu0 %v146, 127
    %v411 = vpop.permute.xlu0 %410
    %412 = vrot.lane.b32.xlu0 %v147, 127
    %v413 = vpop.permute.xlu0 %412
    %v414 = vsel %vm216, %v405, %v407
    %v415 = vsel %vm216, %v407, %v409
    %v416 = vsel %vm216, %v409, %v411
    %v417 = vsel %vm216, %v411, %v413
    %423 = vrot.lane.b32.xlu0 %v184, 126
    %v424 = vpop.permute.xlu0 %423
    %425 = vrot.lane.b32.xlu0 %v185, 126
    %v426 = vpop.permute.xlu0 %425
    %427 = vrot.lane.b32.xlu0 %v186, 126
    %v428 = vpop.permute.xlu0 %427
    %429 = vrot.lane.b32.xlu0 %v187, 126
    %v430 = vpop.permute.xlu0 %429
    %431 = vrot.lane.b32.xlu0 %v188, 126
    %v432 = vpop.permute.xlu0 %431
    %vm433 = vcmask 1031168
    %v434 = vsel %vm433, %v424, %v426
    %v435 = vsel %vm433, %v426, %v428
    %v436 = vsel %vm433, %v428, %v430
    %v437 = vsel %vm433, %v430, %v432
    %443 = vrot.lane.b32.xlu0 %v225, 112
    %v444 = vpop.permute.xlu0 %443
    %445 = vrot.lane.b32.xlu0 %v226, 112
    %v446 = vpop.permute.xlu0 %445
    %447 = vrot.lane.b32.xlu0 %v227, 112
    %v448 = vpop.permute.xlu0 %447
    %449 = vrot.lane.b32.xlu0 %v228, 112
    %v450 = vpop.permute.xlu0 %449
    %451 = vrot.lane.b32.xlu0 %v229, 112
    %v452 = vpop.permute.xlu0 %451
    %v453 = vsel %vm134, %v444, %v446
    %v454 = vsel %vm134, %v446, %v448
    %v455 = vsel %vm134, %v448, %v450
    %v456 = vsel %vm134, %v450, %v452
    %461 = vrot.lane.b32.xlu0 %v63, 111
    %v462 = vpop.permute.xlu0 %461
    %463 = vrot.lane.b32.xlu0 %v64, 111
    %v464 = vpop.permute.xlu0 %463
    %465 = vrot.lane.b32.xlu0 %v65, 111
    %v466 = vpop.permute.xlu0 %465
    %467 = vrot.lane.b32.xlu0 %v66, 111
    %v468 = vpop.permute.xlu0 %467
    %v469 = vsel %vm93, %v462, %v464
    %v470 = vsel %vm93, %v464, %v466
    %v471 = vsel %vm93, %v466, %v468
    %477 = vrot.lane.b32.xlu0 %v271, 110
    %v478 = vpop.permute.xlu0 %477
    %479 = vrot.lane.b32.xlu0 %v272, 110
    %v480 = vpop.permute.xlu0 %479
    %481 = vrot.lane.b32.xlu0 %v273, 110
    %v482 = vpop.permute.xlu0 %481
    %483 = vrot.lane.b32.xlu0 %v274, 110
    %v484 = vpop.permute.xlu0 %483
    %485 = vrot.lane.b32.xlu0 %v275, 110
    %v486 = vpop.permute.xlu0 %485
    %vm487 = vcmask 900096
    %v488 = vsel %vm487, %v478, %v480
    %v489 = vsel %vm487, %v480, %v482
    %v490 = vsel %vm487, %v482, %v484
    %v491 = vsel %vm487, %v484, %v486
    %497 = vrot.lane.b32.xlu0 %v312, 96
    %v498 = vpop.permute.xlu0 %497
    %499 = vrot.lane.b32.xlu0 %v313, 96
    %v500 = vpop.permute.xlu0 %499
    %501 = vrot.lane.b32.xlu0 %v314, 96
    %v502 = vpop.permute.xlu0 %501
    %503 = vrot.lane.b32.xlu0 %v315, 96
    %v504 = vpop.permute.xlu0 %503
    %505 = vrot.lane.b32.xlu0 %v316, 96
    %v506 = vpop.permute.xlu0 %505
    %vm507 = vcmask 785408
    %v508 = vsel %vm507, %v498, %v500
    %v509 = vsel %vm507, %v500, %v502
    %v510 = vsel %vm507, %v502, %v504
    %v511 = vsel %vm507, %v504, %v506
    %517 = vrot.lane.b32.xlu0 %v353, 95
    %v518 = vpop.permute.xlu0 %517
    %519 = vrot.lane.b32.xlu0 %v354, 95
    %v520 = vpop.permute.xlu0 %519
    %521 = vrot.lane.b32.xlu0 %v355, 95
    %v522 = vpop.permute.xlu0 %521
    %523 = vrot.lane.b32.xlu0 %v356, 95
    %v524 = vpop.permute.xlu0 %523
    %525 = vrot.lane.b32.xlu0 %v357, 95
    %v526 = vpop.permute.xlu0 %525
    %vm527 = vcmask 777216
    %v528 = vsel %vm527, %v518, %v520
    %v529 = vsel %vm527, %v520, %v522
    %v530 = vsel %vm527, %v522, %v524
    %v531 = vsel %vm527, %v524, %v526
    %537 = vrot.lane.b32.xlu0 %v394, 94
    %v538 = vpop.permute.xlu0 %537
    %539 = vrot.lane.b32.xlu0 %v395, 94
    %v540 = vpop.permute.xlu0 %539
    %541 = vrot.lane.b32.xlu0 %v396, 94
    %v542 = vpop.permute.xlu0 %541
    %543 = vrot.lane.b32.xlu0 %v397, 94
    %v544 = vpop.permute.xlu0 %543
    %545 = vrot.lane.b32.xlu0 %v398, 94
    %v546 = vpop.permute.xlu0 %545
    %vm547 = vcmask 769024
    %v548 = vsel %vm547, %v538, %v540
    %v549 = vsel %vm547, %v540, %v542
    %v550 = vsel %vm547, %v542, %v544
    %v551 = vsel %vm547, %v544, %v546
    %553 = vset.pattern.permute.xlu0 0
    %554 = vperm.xlu0 %553, %v61
    %v555 = vpop.permute.xlu0 %554
    %562 = vrot.lane.b32.xlu0 %v102, 17
    %v563 = vpop.permute.xlu0 %562
    %564 = vrot.lane.b32.xlu0 %v103, 17
    %v565 = vpop.permute.xlu0 %564
    %566 = vrot.lane.b32.xlu0 %v104, 17
    %v567 = vpop.permute.xlu0 %566
    %568 = vrot.lane.b32.xlu0 %v105, 17
    %v569 = vpop.permute.xlu0 %568
    %570 = vrot.lane.b32.xlu0 %v106, 17
    %v571 = vpop.permute.xlu0 %570
    %572 = vrot.lane.b32.xlu0 %v414, 17
    %v573 = vpop.permute.xlu0 %572
    %574 = vrot.lane.b32.xlu0 %v415, 17
    %v575 = vpop.permute.xlu0 %574
    %576 = vrot.lane.b32.xlu0 %v416, 17
    %v577 = vpop.permute.xlu0 %576
    %578 = vrot.lane.b32.xlu0 %v417, 17
    %v579 = vpop.permute.xlu0 %578
    %580 = vrot.lane.b32.xlu0 %v413, 17
    %v581 = vpop.permute.xlu0 %580
    %582 = vrot.lane.b32.xlu0 %v434, 17
    %v583 = vpop.permute.xlu0 %582
    %584 = vrot.lane.b32.xlu0 %v435, 17
    %v585 = vpop.permute.xlu0 %584
    %586 = vrot.lane.b32.xlu0 %v436, 17
    %v587 = vpop.permute.xlu0 %586
    %588 = vrot.lane.b32.xlu0 %v437, 17
    %v589 = vpop.permute.xlu0 %588
    %590 = vrot.lane.b32.xlu0 %v432, 17
    %v591 = vpop.permute.xlu0 %590
    %592 = vrot.lane.b32.xlu0 %v453, 17
    %v593 = vpop.permute.xlu0 %592
    %594 = vrot.lane.b32.xlu0 %v454, 17
    %v595 = vpop.permute.xlu0 %594
    %596 = vrot.lane.b32.xlu0 %v455, 17
    %v597 = vpop.permute.xlu0 %596
    %598 = vrot.lane.b32.xlu0 %v456, 17
    %v599 = vpop.permute.xlu0 %598
    %600 = vrot.lane.b32.xlu0 %v452, 17
    %v601 = vpop.permute.xlu0 %600
    %602 = vrot.lane.b32.xlu0 %v462, 17
    %v603 = vpop.permute.xlu0 %602
    %604 = vrot.lane.b32.xlu0 %v469, 17
    %v605 = vpop.permute.xlu0 %604
    %606 = vrot.lane.b32.xlu0 %v470, 17
    %v607 = vpop.permute.xlu0 %606
    %608 = vrot.lane.b32.xlu0 %v471, 17
    %v609 = vpop.permute.xlu0 %608
    %610 = vrot.lane.b32.xlu0 %v468, 17
    %v611 = vpop.permute.xlu0 %610
    %612 = vrot.lane.b32.xlu0 %v478, 17
    %v613 = vpop.permute.xlu0 %612
    %614 = vrot.lane.b32.xlu0 %v488, 17
    %v615 = vpop.permute.xlu0 %614
    %616 = vrot.lane.b32.xlu0 %v489, 17
    %v617 = vpop.permute.xlu0 %616
    %618 = vrot.lane.b32.xlu0 %v490, 17
    %v619 = vpop.permute.xlu0 %618
    %620 = vrot.lane.b32.xlu0 %v491, 17
    %v621 = vpop.permute.xlu0 %620
    %622 = vrot.lane.b32.xlu0 %v498, 17
    %v623 = vpop.permute.xlu0 %622
    %624 = vrot.lane.b32.xlu0 %v508, 17
    %v625 = vpop.permute.xlu0 %624
    %626 = vrot.lane.b32.xlu0 %v509, 17
    %v627 = vpop.permute.xlu0 %626
    %628 = vrot.lane.b32.xlu0 %v510, 17
    %v629 = vpop.permute.xlu0 %628
    %630 = vrot.lane.b32.xlu0 %v511, 17
    %v631 = vpop.permute.xlu0 %630
    %632 = vrot.lane.b32.xlu0 %v518, 17
    %v633 = vpop.permute.xlu0 %632
    %634 = vrot.lane.b32.xlu0 %v528, 17
    %v635 = vpop.permute.xlu0 %634
    %636 = vrot.lane.b32.xlu0 %v529, 17
    %v637 = vpop.permute.xlu0 %636
    %638 = vrot.lane.b32.xlu0 %v530, 17
    %v639 = vpop.permute.xlu0 %638
    %640 = vrot.lane.b32.xlu0 %v531, 17
    %v641 = vpop.permute.xlu0 %640
    %642 = vrot.lane.b32.xlu0 %v538, 17
    %v643 = vpop.permute.xlu0 %642
    %644 = vrot.lane.b32.xlu0 %v548, 17
    %v645 = vpop.permute.xlu0 %644
    %646 = vrot.lane.b32.xlu0 %v549, 17
    %v647 = vpop.permute.xlu0 %646
    %648 = vrot.lane.b32.xlu0 %v550, 17
    %v649 = vpop.permute.xlu0 %648
    %650 = vrot.lane.b32.xlu0 %v551, 17
    %v651 = vpop.permute.xlu0 %650
    %v652 = vsel %vm385, %v563, %v565
    %v653 = vsel %vm385, %v565, %v567
    %v654 = vsel %vm385, %v567, %v569
    %v655 = vsel %vm385, %v569, %v571
    %v656 = vsel %vm385, %v573, %v575
    %v657 = vsel %vm385, %v575, %v577
    %v658 = vsel %vm385, %v577, %v579
    %v659 = vsel %vm385, %v579, %v581
    %v660 = vsel %vm385, %v583, %v585
    %v661 = vsel %vm385, %v585, %v587
    %v662 = vsel %vm385, %v587, %v589
    %v663 = vsel %vm385, %v589, %v591
    %v664 = vsel %vm385, %v593, %v595
    %v665 = vsel %vm385, %v595, %v597
    %v666 = vsel %vm385, %v597, %v599
    %v667 = vsel %vm385, %v599, %v601
    %v668 = vsel %vm385, %v603, %v605
    %v669 = vsel %vm385, %v605, %v607
    %v670 = vsel %vm385, %v607, %v609
    %v671 = vsel %vm385, %v609, %v611
    %v672 = vsel %vm385, %v613, %v615
    %v673 = vsel %vm385, %v615, %v617
    %v674 = vsel %vm385, %v617, %v619
    %v675 = vsel %vm385, %v619, %v621
    %v676 = vsel %vm385, %v623, %v625
    %v677 = vsel %vm385, %v625, %v627
    %v678 = vsel %vm385, %v627, %v629
    %v679 = vsel %vm385, %v629, %v631
    %v680 = vsel %vm385, %v633, %v635
    %v681 = vsel %vm385, %v635, %v637
    %v682 = vsel %vm385, %v637, %v639
    %v683 = vsel %vm385, %v639, %v641
    %v684 = vsel %vm385, %v643, %v645
    %v685 = vsel %vm385, %v645, %v647
    %v686 = vsel %vm385, %v647, %v649
    %v687 = vsel %vm385, %v649, %v651
    %vm724 = vcmask 588800
    %v726 = vsel %vm724, %v60, 0
    %728 = vmatprep.subr.mxu0 %v653
    %729 = vmatpush1.msra.mxu0 %v652
    %730 = vmatprep.subr.mxu0 %v657
    %731 = vmatpush1.msra.mxu0 %v656
    %732 = vmatprep.subr.mxu0 %v661
    %733 = vmatpush1.msra.mxu0 %v660
    %734 = vmatprep.subr.mxu0 %v665
    %735 = vmatpush1.msra.mxu0 %v664
    %736 = vmatprep.subr.mxu0 %v669
    %737 = vmatpush1.msra.mxu0 %v668
    %738 = vmatprep.subr.mxu0 %v673
    %739 = vmatpush1.msra.mxu0 %v672
    %740 = vmatprep.subr.mxu0 %v677
    %741 = vmatpush1.msra.mxu0 %v676
    %742 = vmatprep.subr.mxu0 %v681
    %743 = vmatpush1.msra.mxu0 %v680
    %744 = vmatprep.subr.mxu0 %v685
    %745 = vmatpush1.msra.mxu0 %v684
    %746 = vmatprep.subr.mxu0 0.0
    %747 = vmatpush1.msra.mxu0 0.0
    %748 = vmatprep.subr.mxu0 0.0
    %749 = vmatpush1.msra.mxu0 0.0
    %750 = vmatprep.subr.mxu0 0.0
    %751 = vmatpush1.msra.mxu0 0.0
    %752 = vmatprep.subr.mxu0 0.0
    %753 = vmatpush1.msra.mxu0 0.0
    %754 = vmatprep.subr.mxu0 0.0
    %755 = vmatpush1.msra.mxu0 0.0
    %756 = vmatprep.subr.mxu0 0.0
    %757 = vmatpush1.msra.mxu0 0.0
    %758 = vmatprep.subr.mxu0 0.0
    %759 = vmatpush1.msra.mxu0 0.0
    %760 = vmatprep.subr.mxu0 0.0
    %761 = vmatpush1.msra.mxu0 0.0
    %762 = vmatprep.subr.mxu0 0.0
    %763 = vmatpush1.msra.mxu0 0.0
    %764 = vmatprep.subr.mxu0 0.0
    %765 = vmatpush1.msra.mxu0 0.0
    %766 = vmatprep.subr.mxu0 0.0
    %767 = vmatpush1.msra.mxu0 0.0
    %768 = vmatprep.subr.mxu0 0.0
    %769 = vmatpush1.msra.mxu0 0.0
    %770 = vmatprep.subr.mxu0 0.0
    %771 = vmatpush1.msra.mxu0 0.0
    %772 = vmatprep.subr.mxu0 0.0
    %773 = vmatpush1.msra.mxu0 0.0
    %774 = vmatprep.subr.mxu0 0.0
    %775 = vmatpush1.msra.mxu0 0.0
    %776 = vmatprep.subr.mxu0 0.0
    %777 = vmatpush1.msra.mxu0 0.0
    %778 = vmatprep.subr.mxu0 0.0
    %779 = vmatpush1.msra.mxu0 0.0
    %780 = vmatprep.subr.mxu0 0.0
    %781 = vmatpush1.msra.mxu0 0.0
    %782 = vmatprep.subr.mxu0 0.0
    %783 = vmatpush1.msra.mxu0 0.0
    %784 = vmatprep.subr.mxu0 0.0
    %785 = vmatpush1.msra.mxu0 0.0
    %786 = vmatprep.subr.mxu0 0.0
    %787 = vmatpush1.msra.mxu0 0.0
    %788 = vmatprep.subr.mxu0 0.0
    %789 = vmatpush1.msra.mxu0 0.0
    %790 = vmatprep.subr.mxu0 0.0
    %791 = vmatpush1.msra.mxu0 0.0
    %792 = vmatprep.mubr.f32.mxu0 0.0
    %793 = vmatmul.mubr.f32.gmra.mrb[0].mxu0 %v726
    %v794 = vpop.f32.mrb[0].mxu0
    %v795 = vadd.f32 %v555, %v794
    %v796 = vpop.f32.mrb[0].mxu0
    %v797 = vadd.f32 %v555, %v796
    %798 = vdwg.mxu0
    %799 = vmatprep.subr.mxu0 %v655
    %800 = vmatpush1.msra.mxu0 %v654
    %801 = vmatprep.subr.mxu0 %v659
    %802 = vmatpush1.msra.mxu0 %v658
    %803 = vmatprep.subr.mxu0 %v663
    %804 = vmatpush1.msra.mxu0 %v662
    %805 = vmatprep.subr.mxu0 %v667
    %806 = vmatpush1.msra.mxu0 %v666
    %807 = vmatprep.subr.mxu0 %v671
    %808 = vmatpush1.msra.mxu0 %v670
    %809 = vmatprep.subr.mxu0 %v675
    %810 = vmatpush1.msra.mxu0 %v674
    %811 = vmatprep.subr.mxu0 %v679
    %812 = vmatpush1.msra.mxu0 %v678
    %813 = vmatprep.subr.mxu0 %v683
    %814 = vmatpush1.msra.mxu0 %v682
    %815 = vmatprep.subr.mxu0 %v687
    %816 = vmatpush1.msra.mxu0 %v686
    %817 = vmatprep.subr.mxu0 0.0
    %818 = vmatpush1.msra.mxu0 0.0
    %819 = vmatprep.subr.mxu0 0.0
    %820 = vmatpush1.msra.mxu0 0.0
    %821 = vmatprep.subr.mxu0 0.0
    %822 = vmatpush1.msra.mxu0 0.0
    %823 = vmatprep.subr.mxu0 0.0
    %824 = vmatpush1.msra.mxu0 0.0
    %825 = vmatprep.subr.mxu0 0.0
    %826 = vmatpush1.msra.mxu0 0.0
    %827 = vmatprep.subr.mxu0 0.0
    %828 = vmatpush1.msra.mxu0 0.0
    %829 = vmatprep.subr.mxu0 0.0
    %830 = vmatpush1.msra.mxu0 0.0
    %831 = vmatprep.subr.mxu0 0.0
    %832 = vmatpush1.msra.mxu0 0.0
    %833 = vmatprep.subr.mxu0 0.0
    %834 = vmatpush1.msra.mxu0 0.0
    %835 = vmatprep.subr.mxu0 0.0
    %836 = vmatpush1.msra.mxu0 0.0
    %837 = vmatprep.subr.mxu0 0.0
    %838 = vmatpush1.msra.mxu0 0.0
    %839 = vmatprep.subr.mxu0 0.0
    %840 = vmatpush1.msra.mxu0 0.0
    %841 = vmatprep.subr.mxu0 0.0
    %842 = vmatpush1.msra.mxu0 0.0
    %843 = vmatprep.subr.mxu0 0.0
    %844 = vmatpush1.msra.mxu0 0.0
    %845 = vmatprep.subr.mxu0 0.0
    %846 = vmatpush1.msra.mxu0 0.0
    %847 = vmatprep.subr.mxu0 0.0
    %848 = vmatpush1.msra.mxu0 0.0
    %849 = vmatprep.subr.mxu0 0.0
    %850 = vmatpush1.msra.mxu0 0.0
    %851 = vmatprep.subr.mxu0 0.0
    %852 = vmatpush1.msra.mxu0 0.0
    %853 = vmatprep.subr.mxu0 0.0
    %854 = vmatpush1.msra.mxu0 0.0
    %855 = vmatprep.subr.mxu0 0.0
    %856 = vmatpush1.msra.mxu0 0.0
    %857 = vmatprep.subr.mxu0 0.0
    %858 = vmatpush1.msra.mxu0 0.0
    %859 = vmatprep.subr.mxu0 0.0
    %860 = vmatpush1.msra.mxu0 0.0
    %861 = vmatprep.subr.mxu0 0.0
    %862 = vmatpush1.msra.mxu0 0.0
    %863 = vmatprep.mubr.f32.mxu0 0.0
    %864 = vmatmul.mubr.f32.gmra.mrb[0].mxu0 %v726
    %v865 = vpop.f32.mrb[0].mxu0
    %v866 = vadd.f32 %v555, %v865
    %v867 = vpop.f32.mrb[0].mxu0
    %v868 = vadd.f32 %v555, %v867
    %869 = vdwg.mxu0
    %v870 = vmax.f32 %v795, 0.0
    %v871 = vmax.f32 %v797, 0.0
    %v872 = vmax.f32 %v866, 0.0
    %v873 = vmax.f32 %v868, 0.0
    %874 = vst [vmem:[#allocation2 + $0x8] sm:$0xff] %v870
    %875 = vst [vmem:[#allocation2 + $0x10] sm:$0xff] %v871
    %876 = vst [vmem:[#allocation2 + $0x18] sm:$0xff] %v872
    %877 = vst [vmem:[#allocation2 + $0x20] sm:$0xff] %v873
    %v878 = vld [vmem:[#allocation6] sm:$0xff]
    %v879 = vld [vmem:[%s4] sm:$0xff]
    %v880 = vld [vmem:[#allocation2] sm:$0xff]
    %v881 = vld [vmem:[#allocation2 + $0x8] sm:$0xff]
    %v882 = vld [vmem:[#allocation2 + $0x10] sm:$0xff]
    %v883 = vld [vmem:[#allocation2 + $0x18] sm:$0xff]
    %v884 = vld [vmem:[#allocation2 + $0x20] sm:$0xff]
    %v885 = vld [vmem:[%s5] sm:$0xf]
    %v887 = vlaneseq
    %v888 = vshrl.u32 %v887, 7
    %v889 = vsub.s32 0, %v888
    %v890 = vrot.slane %v885, %v889
    %v891 = vlaneseq
    %v892 = vshrl.u32 %v891, 7
    %v893 = vsub.s32 1, %v892
    %v894 = vrot.slane %v885, %v893
    %v895 = vlaneseq
    %v896 = vshrl.u32 %v895, 7
    %v897 = vsub.s32 2, %v896
    %v898 = vrot.slane %v885, %v897
    %v899 = vlaneseq
    %v900 = vshrl.u32 %v899, 7
    %v901 = vsub.s32 3, %v900
    %v902 = vrot.slane %v885, %v901
    %903 = vrot.lane.b32.xlu0 %v890, 111
    %v904 = vpop.permute.xlu0 %903
    %905 = vrot.lane.b32.xlu0 %v894, 111
    %v906 = vpop.permute.xlu0 %905
    %907 = vrot.lane.b32.xlu0 %v898, 111
    %v908 = vpop.permute.xlu0 %907
    %909 = vrot.lane.b32.xlu0 %v902, 111
    %v910 = vpop.permute.xlu0 %909
    %v911 = vsel %vm93, %v904, %v906
    %v912 = vsel %vm93, %v906, %v908
    %v913 = vsel %vm93, %v908, %v910
    %v919 = vmul.f32 %v880, %v904
    %v920 = vmul.f32 %v881, %v911
    %v921 = vmul.f32 %v882, %v912
    %v922 = vmul.f32 %v883, %v913
    %v923 = vmul.f32 %v884, %v910
    %v924 = vld [vmem:[%s107] sm:$0xf]
    %v926 = vlaneseq
    %v927 = vshrl.u32 %v926, 7
    %v928 = vsub.s32 0, %v927
    %v929 = vrot.slane %v924, %v928
    %v930 = vlaneseq
    %v931 = vshrl.u32 %v930, 7
    %v932 = vsub.s32 1, %v931
    %v933 = vrot.slane %v924, %v932
    %v934 = vlaneseq
    %v935 = vshrl.u32 %v934, 7
    %v936 = vsub.s32 2, %v935
    %v937 = vrot.slane %v924, %v936
    %v938 = vlaneseq
    %v939 = vshrl.u32 %v938, 7
    %v940 = vsub.s32 3, %v939
    %v941 = vrot.slane %v924, %v940
    %942 = vrot.lane.b32.xlu0 %v929, 112
    %v943 = vpop.permute.xlu0 %942
    %944 = vrot.lane.b32.xlu0 %v933, 112
    %v945 = vpop.permute.xlu0 %944
    %946 = vrot.lane.b32.xlu0 %v937, 112
    %v947 = vpop.permute.xlu0 %946
    %948 = vrot.lane.b32.xlu0 %v941, 112
    %v949 = vpop.permute.xlu0 %948
    %v950 = vsel %vm134, %v943, %v945
    %v951 = vsel %vm134, %v945, %v947
    %v952 = vsel %vm134, %v947, %v949
    %v958 = vmul.f32 %v880, %v943
    %v959 = vmul.f32 %v881, %v950
    %v960 = vmul.f32 %v882, %v951
    %v961 = vmul.f32 %v883, %v952
    %v962 = vmul.f32 %v884, %v949
    %v963 = vld [vmem:[%s148] sm:$0xf]
    %v965 = vlaneseq
    %v966 = vshrl.u32 %v965, 7
    %v967 = vsub.s32 0, %v966
    %v968 = vrot.slane %v963, %v967
    %v969 = vlaneseq
    %v970 = vshrl.u32 %v969, 7
    %v971 = vsub.s32 1, %v970
    %v972 = vrot.slane %v963, %v971
    %v973 = vlaneseq
    %v974 = vshrl.u32 %v973, 7
    %v975 = vsub.s32 2, %v974
    %v976 = vrot.slane %v963, %v975
    %v977 = vlaneseq
    %v978 = vshrl.u32 %v977, 7
    %v979 = vsub.s32 3, %v978
    %v980 = vrot.slane %v963, %v979
    %981 = vrot.lane.b32.xlu0 %v968, 113
    %v982 = vpop.permute.xlu0 %981
    %983 = vrot.lane.b32.xlu0 %v972, 113
    %v984 = vpop.permute.xlu0 %983
    %985 = vrot.lane.b32.xlu0 %v976, 113
    %v986 = vpop.permute.xlu0 %985
    %987 = vrot.lane.b32.xlu0 %v980, 113
    %v988 = vpop.permute.xlu0 %987
    %v989 = vsel %vm175, %v982, %v984
    %v990 = vsel %vm175, %v984, %v986
    %v991 = vsel %vm175, %v986, %v988
    %v997 = vmul.f32 %v880, %v982
    %v998 = vmul.f32 %v881, %v989
    %v999 = vmul.f32 %v882, %v990
    %v1000 = vmul.f32 %v883, %v991
    %v1001 = vmul.f32 %v884, %v988
    %v1002 = vld [vmem:[%s189] sm:$0xf]
    %v1004 = vlaneseq
    %v1005 = vshrl.u32 %v1004, 7
    %v1006 = vsub.s32 0, %v1005
    %v1007 = vrot.slane %v1002, %v1006
    %v1008 = vlaneseq
    %v1009 = vshrl.u32 %v1008, 7
    %v1010 = vsub.s32 1, %v1009
    %v1011 = vrot.slane %v1002, %v1010
    %v1012 = vlaneseq
    %v1013 = vshrl.u32 %v1012, 7
    %v1014 = vsub.s32 2, %v1013
    %v1015 = vrot.slane %v1002, %v1014
    %v1016 = vlaneseq
    %v1017 = vshrl.u32 %v1016, 7
    %v1018 = vsub.s32 3, %v1017
    %v1019 = vrot.slane %v1002, %v1018
    %1020 = vrot.lane.b32.xlu0 %v1007, 127
    %v1021 = vpop.permute.xlu0 %1020
    %1022 = vrot.lane.b32.xlu0 %v1011, 127
    %v1023 = vpop.permute.xlu0 %1022
    %1024 = vrot.lane.b32.xlu0 %v1015, 127
    %v1025 = vpop.permute.xlu0 %1024
    %1026 = vrot.lane.b32.xlu0 %v1019, 127
    %v1027 = vpop.permute.xlu0 %1026
    %v1028 = vsel %vm216, %v1021, %v1023
    %v1029 = vsel %vm216, %v1023, %v1025
    %v1030 = vsel %vm216, %v1025, %v1027
    %v1036 = vmul.f32 %v880, %v1021
    %v1037 = vmul.f32 %v881, %v1028
    %v1038 = vmul.f32 %v882, %v1029
    %v1039 = vmul.f32 %v883, %v1030
    %v1040 = vmul.f32 %v884, %v1027
    %v1041 = vld [vmem:[#allocation2 + $0x8] sm:$0xff]
    %v1042 = vld [vmem:[#allocation2 + $0x10] sm:$0xff]
    %v1043 = vld [vmem:[#allocation2 + $0x18] sm:$0xff]
    %v1044 = vld [vmem:[#allocation2 + $0x20] sm:$0xff]
    %v1045 = vld [vmem:[#allocation2 + $0x28] sm:$0xff]
    %v1046 = vld [vmem:[%s235] sm:$0xf]
    %v1048 = vlaneseq
    %v1049 = vshrl.u32 %v1048, 7
    %v1050 = vsub.s32 0, %v1049
    %v1051 = vrot.slane %v1046, %v1050
    %v1052 = vlaneseq
    %v1053 = vshrl.u32 %v1052, 7
    %v1054 = vsub.s32 1, %v1053
    %v1055 = vrot.slane %v1046, %v1054
    %v1056 = vlaneseq
    %v1057 = vshrl.u32 %v1056, 7
    %v1058 = vsub.s32 2, %v1057
    %v1059 = vrot.slane %v1046, %v1058
    %v1060 = vlaneseq
    %v1061 = vshrl.u32 %v1060, 7
    %v1062 = vsub.s32 3, %v1061
    %v1063 = vrot.slane %v1046, %v1062
    %1064 = vrot.lane.b32.xlu0 %v1051, 1
    %v1065 = vpop.permute.xlu0 %1064
    %1066 = vrot.lane.b32.xlu0 %v1055, 1
    %v1067 = vpop.permute.xlu0 %1066
    %1068 = vrot.lane.b32.xlu0 %v1059, 1
    %v1069 = vpop.permute.xlu0 %1068
    %1070 = vrot.lane.b32.xlu0 %v1063, 1
    %v1071 = vpop.permute.xlu0 %1070
    %v1072 = vsel %vm262, %v1065, %v1067
    %v1073 = vsel %vm262, %v1067, %v1069
    %v1074 = vsel %vm262, %v1069, %v1071
    %v1080 = vmul.f32 %v1041, %v1065
    %v1081 = vmul.f32 %v1042, %v1072
    %v1082 = vmul.f32 %v1043, %v1073
    %v1083 = vmul.f32 %v1044, %v1074
    %v1084 = vmul.f32 %v1045, %v1071
    %v1085 = vld [vmem:[%s276] sm:$0xf]
    %v1087 = vlaneseq
    %v1088 = vshrl.u32 %v1087, 7
    %v1089 = vsub.s32 0, %v1088
    %v1090 = vrot.slane %v1085, %v1089
    %v1091 = vlaneseq
    %v1092 = vshrl.u32 %v1091, 7
    %v1093 = vsub.s32 1, %v1092
    %v1094 = vrot.slane %v1085, %v1093
    %v1095 = vlaneseq
    %v1096 = vshrl.u32 %v1095, 7
    %v1097 = vsub.s32 2, %v1096
    %v1098 = vrot.slane %v1085, %v1097
    %v1099 = vlaneseq
    %v1100 = vshrl.u32 %v1099, 7
    %v1101 = vsub.s32 3, %v1100
    %v1102 = vrot.slane %v1085, %v1101
    %1103 = vrot.lane.b32.xlu0 %v1090, 15
    %v1104 = vpop.permute.xlu0 %1103
    %1105 = vrot.lane.b32.xlu0 %v1094, 15
    %v1106 = vpop.permute.xlu0 %1105
    %1107 = vrot.lane.b32.xlu0 %v1098, 15
    %v1108 = vpop.permute.xlu0 %1107
    %1109 = vrot.lane.b32.xlu0 %v1102, 15
    %v1110 = vpop.permute.xlu0 %1109
    %v1111 = vsel %vm303, %v1104, %v1106
    %v1112 = vsel %vm303, %v1106, %v1108
    %v1113 = vsel %vm303, %v1108, %v1110
    %v1119 = vmul.f32 %v1041, %v1104
    %v1120 = vmul.f32 %v1042, %v1111
    %v1121 = vmul.f32 %v1043, %v1112
    %v1122 = vmul.f32 %v1044, %v1113
    %v1123 = vmul.f32 %v1045, %v1110
    %v1124 = vld [vmem:[%s317] sm:$0xf]
    %v1126 = vlaneseq
    %v1127 = vshrl.u32 %v1126, 7
    %v1128 = vsub.s32 0, %v1127
    %v1129 = vrot.slane %v1124, %v1128
    %v1130 = vlaneseq
    %v1131 = vshrl.u32 %v1130, 7
    %v1132 = vsub.s32 1, %v1131
    %v1133 = vrot.slane %v1124, %v1132
    %v1134 = vlaneseq
    %v1135 = vshrl.u32 %v1134, 7
    %v1136 = vsub.s32 2, %v1135
    %v1137 = vrot.slane %v1124, %v1136
    %v1138 = vlaneseq
    %v1139 = vshrl.u32 %v1138, 7
    %v1140 = vsub.s32 3, %v1139
    %v1141 = vrot.slane %v1124, %v1140
    %1142 = vrot.lane.b32.xlu0 %v1129, 16
    %v1143 = vpop.permute.xlu0 %1142
    %1144 = vrot.lane.b32.xlu0 %v1133, 16
    %v1145 = vpop.permute.xlu0 %1144
    %1146 = vrot.lane.b32.xlu0 %v1137, 16
    %v1147 = vpop.permute.xlu0 %1146
    %1148 = vrot.lane.b32.xlu0 %v1141, 16
    %v1149 = vpop.permute.xlu0 %1148
    %v1150 = vsel %vm344, %v1143, %v1145
    %v1151 = vsel %vm344, %v1145, %v1147
    %v1152 = vsel %vm344, %v1147, %v1149
    %v1158 = vmul.f32 %v1041, %v1143
    %v1159 = vmul.f32 %v1042, %v1150
    %v1160 = vmul.f32 %v1043, %v1151
    %v1161 = vmul.f32 %v1044, %v1152
    %v1162 = vmul.f32 %v1045, %v1149
    %v1163 = vld [vmem:[%s358] sm:$0xf]
    %v1165 = vlaneseq
    %v1166 = vshrl.u32 %v1165, 7
    %v1167 = vsub.s32 0, %v1166
    %v1168 = vrot.slane %v1163, %v1167
    %v1169 = vlaneseq
    %v1170 = vshrl.u32 %v1169, 7
    %v1171 = vsub.s32 1, %v1170
    %v1172 = vrot.slane %v1163, %v1171
    %v1173 = vlaneseq
    %v1174 = vshrl.u32 %v1173, 7
    %v1175 = vsub.s32 2, %v1174
    %v1176 = vrot.slane %v1163, %v1175
    %v1177 = vlaneseq
    %v1178 = vshrl.u32 %v1177, 7
    %v1179 = vsub.s32 3, %v1178
    %v1180 = vrot.slane %v1163, %v1179
    %1181 = vrot.lane.b32.xlu0 %v1168, 17
    %v1182 = vpop.permute.xlu0 %1181
    %1183 = vrot.lane.b32.xlu0 %v1172, 17
    %v1184 = vpop.permute.xlu0 %1183
    %1185 = vrot.lane.b32.xlu0 %v1176, 17
    %v1186 = vpop.permute.xlu0 %1185
    %1187 = vrot.lane.b32.xlu0 %v1180, 17
    %v1188 = vpop.permute.xlu0 %1187
    %v1189 = vsel %vm385, %v1182, %v1184
    %v1190 = vsel %vm385, %v1184, %v1186
    %v1191 = vsel %vm385, %v1186, %v1188
    %v1197 = vmul.f32 %v1041, %v1182
    %v1198 = vmul.f32 %v1042, %v1189
    %v1199 = vmul.f32 %v1043, %v1190
    %v1200 = vmul.f32 %v1044, %v1191
    %v1201 = vmul.f32 %v1045, %v1188
    %1207 = vrot.lane.b32.xlu0 %v958, 127
    %v1208 = vpop.permute.xlu0 %1207
    %1209 = vrot.lane.b32.xlu0 %v959, 127
    %v1210 = vpop.permute.xlu0 %1209
    %1211 = vrot.lane.b32.xlu0 %v960, 127
    %v1212 = vpop.permute.xlu0 %1211
    %1213 = vrot.lane.b32.xlu0 %v961, 127
    %v1214 = vpop.permute.xlu0 %1213
    %1215 = vrot.lane.b32.xlu0 %v962, 127
    %v1216 = vpop.permute.xlu0 %1215
    %v1217 = vsel %vm216, %v1208, %v1210
    %v1218 = vsel %vm216, %v1210, %v1212
    %v1219 = vsel %vm216, %v1212, %v1214
    %v1220 = vsel %vm216, %v1214, %v1216
    %1226 = vrot.lane.b32.xlu0 %v997, 126
    %v1227 = vpop.permute.xlu0 %1226
    %1228 = vrot.lane.b32.xlu0 %v998, 126
    %v1229 = vpop.permute.xlu0 %1228
    %1230 = vrot.lane.b32.xlu0 %v999, 126
    %v1231 = vpop.permute.xlu0 %1230
    %1232 = vrot.lane.b32.xlu0 %v1000, 126
    %v1233 = vpop.permute.xlu0 %1232
    %1234 = vrot.lane.b32.xlu0 %v1001, 126
    %v1235 = vpop.permute.xlu0 %1234
    %v1236 = vsel %vm433, %v1227, %v1229
    %v1237 = vsel %vm433, %v1229, %v1231
    %v1238 = vsel %vm433, %v1231, %v1233
    %v1239 = vsel %vm433, %v1233, %v1235
    %1245 = vrot.lane.b32.xlu0 %v1036, 112
    %v1246 = vpop.permute.xlu0 %1245
    %1247 = vrot.lane.b32.xlu0 %v1037, 112
    %v1248 = vpop.permute.xlu0 %1247
    %1249 = vrot.lane.b32.xlu0 %v1038, 112
    %v1250 = vpop.permute.xlu0 %1249
    %1251 = vrot.lane.b32.xlu0 %v1039, 112
    %v1252 = vpop.permute.xlu0 %1251
    %1253 = vrot.lane.b32.xlu0 %v1040, 112
    %v1254 = vpop.permute.xlu0 %1253
    %v1255 = vsel %vm134, %v1246, %v1248
    %v1256 = vsel %vm134, %v1248, %v1250
    %v1257 = vsel %vm134, %v1250, %v1252
    %v1258 = vsel %vm134, %v1252, %v1254
    %1263 = vrot.lane.b32.xlu0 %v881, 111
    %v1264 = vpop.permute.xlu0 %1263
    %1265 = vrot.lane.b32.xlu0 %v882, 111
    %v1266 = vpop.permute.xlu0 %1265
    %1267 = vrot.lane.b32.xlu0 %v883, 111
    %v1268 = vpop.permute.xlu0 %1267
    %1269 = vrot.lane.b32.xlu0 %v884, 111
    %v1270 = vpop.permute.xlu0 %1269
    %v1271 = vsel %vm93, %v1264, %v1266
    %v1272 = vsel %vm93, %v1266, %v1268
    %v1273 = vsel %vm93, %v1268, %v1270
    %1279 = vrot.lane.b32.xlu0 %v1080, 110
    %v1280 = vpop.permute.xlu0 %1279
    %1281 = vrot.lane.b32.xlu0 %v1081, 110
    %v1282 = vpop.permute.xlu0 %1281
    %1283 = vrot.lane.b32.xlu0 %v1082, 110
    %v1284 = vpop.permute.xlu0 %1283
    %1285 = vrot.lane.b32.xlu0 %v1083, 110
    %v1286 = vpop.permute.xlu0 %1285
    %1287 = vrot.lane.b32.xlu0 %v1084, 110
    %v1288 = vpop.permute.xlu0 %1287
    %v1289 = vsel %vm487, %v1280, %v1282
    %v1290 = vsel %vm487, %v1282, %v1284
    %v1291 = vsel %vm487, %v1284, %v1286
    %v1292 = vsel %vm487, %v1286, %v1288
    %1298 = vrot.lane.b32.xlu0 %v1119, 96
    %v1299 = vpop.permute.xlu0 %1298
    %1300 = vrot.lane.b32.xlu0 %v1120, 96
    %v1301 = vpop.permute.xlu0 %1300
    %1302 = vrot.lane.b32.xlu0 %v1121, 96
    %v1303 = vpop.permute.xlu0 %1302
    %1304 = vrot.lane.b32.xlu0 %v1122, 96
    %v1305 = vpop.permute.xlu0 %1304
    %1306 = vrot.lane.b32.xlu0 %v1123, 96
    %v1307 = vpop.permute.xlu0 %1306
    %v1308 = vsel %vm507, %v1299, %v1301
    %v1309 = vsel %vm507, %v1301, %v1303
    %v1310 = vsel %vm507, %v1303, %v1305
    %v1311 = vsel %vm507, %v1305, %v1307
    %1317 = vrot.lane.b32.xlu0 %v1158, 95
    %v1318 = vpop.permute.xlu0 %1317
    %1319 = vrot.lane.b32.xlu0 %v1159, 95
    %v1320 = vpop.permute.xlu0 %1319
    %1321 = vrot.lane.b32.xlu0 %v1160, 95
    %v1322 = vpop.permute.xlu0 %1321
    %1323 = vrot.lane.b32.xlu0 %v1161, 95
    %v1324 = vpop.permute.xlu0 %1323
    %1325 = vrot.lane.b32.xlu0 %v1162, 95
    %v1326 = vpop.permute.xlu0 %1325
    %v1327 = vsel %vm527, %v1318, %v1320
    %v1328 = vsel %vm527, %v1320, %v1322
    %v1329 = vsel %vm527, %v1322, %v1324
    %v1330 = vsel %vm527, %v1324, %v1326
    %1336 = vrot.lane.b32.xlu0 %v1197, 94
    %v1337 = vpop.permute.xlu0 %1336
    %1338 = vrot.lane.b32.xlu0 %v1198, 94
    %v1339 = vpop.permute.xlu0 %1338
    %1340 = vrot.lane.b32.xlu0 %v1199, 94
    %v1341 = vpop.permute.xlu0 %1340
    %1342 = vrot.lane.b32.xlu0 %v1200, 94
    %v1343 = vpop.permute.xlu0 %1342
    %1344 = vrot.lane.b32.xlu0 %v1201, 94
    %v1345 = vpop.permute.xlu0 %1344
    %v1346 = vsel %vm547, %v1337, %v1339
    %v1347 = vsel %vm547, %v1339, %v1341
    %v1348 = vsel %vm547, %v1341, %v1343
    %v1349 = vsel %vm547, %v1343, %v1345
    %1351 = vset.pattern.permute.xlu0 0
    %1352 = vperm.xlu0 %1351, %v879
    %v1353 = vpop.permute.xlu0 %1352
    %1360 = vrot.lane.b32.xlu0 %v919, 17
    %v1361 = vpop.permute.xlu0 %1360
    %1362 = vrot.lane.b32.xlu0 %v920, 17
    %v1363 = vpop.permute.xlu0 %1362
    %1364 = vrot.lane.b32.xlu0 %v921, 17
    %v1365 = vpop.permute.xlu0 %1364
    %1366 = vrot.lane.b32.xlu0 %v922, 17
    %v1367 = vpop.permute.xlu0 %1366
    %1368 = vrot.lane.b32.xlu0 %v923, 17
    %v1369 = vpop.permute.xlu0 %1368
    %1370 = vrot.lane.b32.xlu0 %v1217, 17
    %v1371 = vpop.permute.xlu0 %1370
    %1372 = vrot.lane.b32.xlu0 %v1218, 17
    %v1373 = vpop.permute.xlu0 %1372
    %1374 = vrot.lane.b32.xlu0 %v1219, 17
    %v1375 = vpop.permute.xlu0 %1374
    %1376 = vrot.lane.b32.xlu0 %v1220, 17
    %v1377 = vpop.permute.xlu0 %1376
    %1378 = vrot.lane.b32.xlu0 %v1216, 17
    %v1379 = vpop.permute.xlu0 %1378
    %1380 = vrot.lane.b32.xlu0 %v1236, 17
    %v1381 = vpop.permute.xlu0 %1380
    %1382 = vrot.lane.b32.xlu0 %v1237, 17
    %v1383 = vpop.permute.xlu0 %1382
    %1384 = vrot.lane.b32.xlu0 %v1238, 17
    %v1385 = vpop.permute.xlu0 %1384
    %1386 = vrot.lane.b32.xlu0 %v1239, 17
    %v1387 = vpop.permute.xlu0 %1386
    %1388 = vrot.lane.b32.xlu0 %v1235, 17
    %v1389 = vpop.permute.xlu0 %1388
    %1390 = vrot.lane.b32.xlu0 %v1255, 17
    %v1391 = vpop.permute.xlu0 %1390
    %1392 = vrot.lane.b32.xlu0 %v1256, 17
    %v1393 = vpop.permute.xlu0 %1392
    %1394 = vrot.lane.b32.xlu0 %v1257, 17
    %v1395 = vpop.permute.xlu0 %1394
    %1396 = vrot.lane.b32.xlu0 %v1258, 17
    %v1397 = vpop.permute.xlu0 %1396
    %1398 = vrot.lane.b32.xlu0 %v1254, 17
    %v1399 = vpop.permute.xlu0 %1398
    %1400 = vrot.lane.b32.xlu0 %v1264, 17
    %v1401 = vpop.permute.xlu0 %1400
    %1402 = vrot.lane.b32.xlu0 %v1271, 17
    %v1403 = vpop.permute.xlu0 %1402
    %1404 = vrot.lane.b32.xlu0 %v1272, 17
    %v1405 = vpop.permute.xlu0 %1404
    %1406 = vrot.lane.b32.xlu0 %v1273, 17
    %v1407 = vpop.permute.xlu0 %1406
    %1408 = vrot.lane.b32.xlu0 %v1270, 17
    %v1409 = vpop.permute.xlu0 %1408
    %1410 = vrot.lane.b32.xlu0 %v1280, 17
    %v1411 = vpop.permute.xlu0 %1410
    %1412 = vrot.lane.b32.xlu0 %v1289, 17
    %v1413 = vpop.permute.xlu0 %1412
    %1414 = vrot.lane.b32.xlu0 %v1290, 17
    %v1415 = vpop.permute.xlu0 %1414
    %1416 = vrot.lane.b32.xlu0 %v1291, 17
    %v1417 = vpop.permute.xlu0 %1416
    %1418 = vrot.lane.b32.xlu0 %v1292, 17
    %v1419 = vpop.permute.xlu0 %1418
    %1420 = vrot.lane.b32.xlu0 %v1299, 17
    %v1421 = vpop.permute.xlu0 %1420
    %1422 = vrot.lane.b32.xlu0 %v1308, 17
    %v1423 = vpop.permute.xlu0 %1422
    %1424 = vrot.lane.b32.xlu0 %v1309, 17
    %v1425 = vpop.permute.xlu0 %1424
    %1426 = vrot.lane.b32.xlu0 %v1310, 17
    %v1427 = vpop.permute.xlu0 %1426
    %1428 = vrot.lane.b32.xlu0 %v1311, 17
    %v1429 = vpop.permute.xlu0 %1428
    %1430 = vrot.lane.b32.xlu0 %v1318, 17
    %v1431 = vpop.permute.xlu0 %1430
    %1432 = vrot.lane.b32.xlu0 %v1327, 17
    %v1433 = vpop.permute.xlu0 %1432
    %1434 = vrot.lane.b32.xlu0 %v1328, 17
    %v1435 = vpop.permute.xlu0 %1434
    %1436 = vrot.lane.b32.xlu0 %v1329, 17
    %v1437 = vpop.permute.xlu0 %1436
    %1438 = vrot.lane.b32.xlu0 %v1330, 17
    %v1439 = vpop.permute.xlu0 %1438
    %1440 = vrot.lane.b32.xlu0 %v1337, 17
    %v1441 = vpop.permute.xlu0 %1440
    %1442 = vrot.lane.b32.xlu0 %v1346, 17
    %v1443 = vpop.permute.xlu0 %1442
    %1444 = vrot.lane.b32.xlu0 %v1347, 17
    %v1445 = vpop.permute.xlu0 %1444
    %1446 = vrot.lane.b32.xlu0 %v1348, 17
    %v1447 = vpop.permute.xlu0 %1446
    %1448 = vrot.lane.b32.xlu0 %v1349, 17
    %v1449 = vpop.permute.xlu0 %1448
    %v1450 = vsel %vm385, %v1361, %v1363
    %v1451 = vsel %vm385, %v1363, %v1365
    %v1452 = vsel %vm385, %v1365, %v1367
    %v1453 = vsel %vm385, %v1367, %v1369
    %v1454 = vsel %vm385, %v1371, %v1373
    %v1455 = vsel %vm385, %v1373, %v1375
    %v1456 = vsel %vm385, %v1375, %v1377
    %v1457 = vsel %vm385, %v1377, %v1379
    %v1458 = vsel %vm385, %v1381, %v1383
    %v1459 = vsel %vm385, %v1383, %v1385
    %v1460 = vsel %vm385, %v1385, %v1387
    %v1461 = vsel %vm385, %v1387, %v1389
    %v1462 = vsel %vm385, %v1391, %v1393
    %v1463 = vsel %vm385, %v1393, %v1395
    %v1464 = vsel %vm385, %v1395, %v1397
    %v1465 = vsel %vm385, %v1397, %v1399
    %v1466 = vsel %vm385, %v1401, %v1403
    %v1467 = vsel %vm385, %v1403, %v1405
    %v1468 = vsel %vm385, %v1405, %v1407
    %v1469 = vsel %vm385, %v1407, %v1409
    %v1470 = vsel %vm385, %v1411, %v1413
    %v1471 = vsel %vm385, %v1413, %v1415
    %v1472 = vsel %vm385, %v1415, %v1417
    %v1473 = vsel %vm385, %v1417, %v1419
    %v1474 = vsel %vm385, %v1421, %v1423
    %v1475 = vsel %vm385, %v1423, %v1425
    %v1476 = vsel %vm385, %v1425, %v1427
    %v1477 = vsel %vm385, %v1427, %v1429
    %v1478 = vsel %vm385, %v1431, %v1433
    %v1479 = vsel %vm385, %v1433, %v1435
    %v1480 = vsel %vm385, %v1435, %v1437
    %v1481 = vsel %vm385, %v1437, %v1439
    %v1482 = vsel %vm385, %v1441, %v1443
    %v1483 = vsel %vm385, %v1443, %v1445
    %v1484 = vsel %vm385, %v1445, %v1447
    %v1485 = vsel %vm385, %v1447, %v1449
    %v1523 = vsel %vm724, %v878, 0
    %1525 = vmatprep.subr.mxu0 %v1451
    %1526 = vmatpush1.msra.mxu0 %v1450
    %1527 = vmatprep.subr.mxu0 %v1455
    %1528 = vmatpush1.msra.mxu0 %v1454
    %1529 = vmatprep.subr.mxu0 %v1459
    %1530 = vmatpush1.msra.mxu0 %v1458
    %1531 = vmatprep.subr.mxu0 %v1463
    %1532 = vmatpush1.msra.mxu0 %v1462
    %1533 = vmatprep.subr.mxu0 %v1467
    %1534 = vmatpush1.msra.mxu0 %v1466
    %1535 = vmatprep.subr.mxu0 %v1471
    %1536 = vmatpush1.msra.mxu0 %v1470
    %1537 = vmatprep.subr.mxu0 %v1475
    %1538 = vmatpush1.msra.mxu0 %v1474
    %1539 = vmatprep.subr.mxu0 %v1479
    %1540 = vmatpush1.msra.mxu0 %v1478
    %1541 = vmatprep.subr.mxu0 %v1483
    %1542 = vmatpush1.msra.mxu0 %v1482
    %1543 = vmatprep.subr.mxu0 0.0
    %1544 = vmatpush1.msra.mxu0 0.0
    %1545 = vmatprep.subr.mxu0 0.0
    %1546 = vmatpush1.msra.mxu0 0.0
    %1547 = vmatprep.subr.mxu0 0.0
    %1548 = vmatpush1.msra.mxu0 0.0
    %1549 = vmatprep.subr.mxu0 0.0
    %1550 = vmatpush1.msra.mxu0 0.0
    %1551 = vmatprep.subr.mxu0 0.0
    %1552 = vmatpush1.msra.mxu0 0.0
    %1553 = vmatprep.subr.mxu0 0.0
    %1554 = vmatpush1.msra.mxu0 0.0
    %1555 = vmatprep.subr.mxu0 0.0
    %1556 = vmatpush1.msra.mxu0 0.0
    %1557 = vmatprep.subr.mxu0 0.0
    %1558 = vmatpush1.msra.mxu0 0.0
    %1559 = vmatprep.subr.mxu0 0.0
    %1560 = vmatpush1.msra.mxu0 0.0
    %1561 = vmatprep.subr.mxu0 0.0
    %1562 = vmatpush1.msra.mxu0 0.0
    %1563 = vmatprep.subr.mxu0 0.0
    %1564 = vmatpush1.msra.mxu0 0.0
    %1565 = vmatprep.subr.mxu0 0.0
    %1566 = vmatpush1.msra.mxu0 0.0
    %1567 = vmatprep.subr.mxu0 0.0
    %1568 = vmatpush1.msra.mxu0 0.0
    %1569 = vmatprep.subr.mxu0 0.0
    %1570 = vmatpush1.msra.mxu0 0.0
    %1571 = vmatprep.subr.mxu0 0.0
    %1572 = vmatpush1.msra.mxu0 0.0
    %1573 = vmatprep.subr.mxu0 0.0
    %1574 = vmatpush1.msra.mxu0 0.0
    %1575 = vmatprep.subr.mxu0 0.0
    %1576 = vmatpush1.msra.mxu0 0.0
    %1577 = vmatprep.subr.mxu0 0.0
    %1578 = vmatpush1.msra.mxu0 0.0
    %1579 = vmatprep.subr.mxu0 0.0
    %1580 = vmatpush1.msra.mxu0 0.0
    %1581 = vmatprep.subr.mxu0 0.0
    %1582 = vmatpush1.msra.mxu0 0.0
    %1583 = vmatprep.subr.mxu0 0.0
    %1584 = vmatpush1.msra.mxu0 0.0
    %1585 = vmatprep.subr.mxu0 0.0
    %1586 = vmatpush1.msra.mxu0 0.0
    %1587 = vmatprep.subr.mxu0 0.0
    %1588 = vmatpush1.msra.mxu0 0.0
    %1589 = vmatprep.mubr.f32.mxu0 0.0
    %1590 = vmatmul.mubr.f32.gmra.mrb[0].mxu0 %v1523
    %v1591 = vpop.f32.mrb[0].mxu0
    %v1592 = vadd.f32 %v1353, %v1591
    %v1593 = vpop.f32.mrb[0].mxu0
    %v1594 = vadd.f32 %v1353, %v1593
    %1595 = vdwg.mxu0
    %1596 = vmatprep.subr.mxu0 %v1453
    %1597 = vmatpush1.msra.mxu0 %v1452
    %1598 = vmatprep.subr.mxu0 %v1457
    %1599 = vmatpush1.msra.mxu0 %v1456
    %1600 = vmatprep.subr.mxu0 %v1461
    %1601 = vmatpush1.msra.mxu0 %v1460
    %1602 = vmatprep.subr.mxu0 %v1465
    %1603 = vmatpush1.msra.mxu0 %v1464
    %1604 = vmatprep.subr.mxu0 %v1469
    %1605 = vmatpush1.msra.mxu0 %v1468
    %1606 = vmatprep.subr.mxu0 %v1473
    %1607 = vmatpush1.msra.mxu0 %v1472
    %1608 = vmatprep.subr.mxu0 %v1477
    %1609 = vmatpush1.msra.mxu0 %v1476
    %1610 = vmatprep.subr.mxu0 %v1481
    %1611 = vmatpush1.msra.mxu0 %v1480
    %1612 = vmatprep.subr.mxu0 %v1485
    %1613 = vmatpush1.msra.mxu0 %v1484
    %1614 = vmatprep.subr.mxu0 0.0
    %1615 = vmatpush1.msra.mxu0 0.0
    %1616 = vmatprep.subr.mxu0 0.0
    %1617 = vmatpush1.msra.mxu0 0.0
    %1618 = vmatprep.subr.mxu0 0.0
    %1619 = vmatpush1.msra.mxu0 0.0
    %1620 = vmatprep.subr.mxu0 0.0
    %1621 = vmatpush1.msra.mxu0 0.0
    %1622 = vmatprep.subr.mxu0 0.0
    %1623 = vmatpush1.msra.mxu0 0.0
    %1624 = vmatprep.subr.mxu0 0.0
    %1625 = vmatpush1.msra.mxu0 0.0
    %1626 = vmatprep.subr.mxu0 0.0
    %1627 = vmatpush1.msra.mxu0 0.0
    %1628 = vmatprep.subr.mxu0 0.0
    %1629 = vmatpush1.msra.mxu0 0.0
    %1630 = vmatprep.subr.mxu0 0.0
    %1631 = vmatpush1.msra.mxu0 0.0
    %1632 = vmatprep.subr.mxu0 0.0
    %1633 = vmatpush1.msra.mxu0 0.0
    %1634 = vmatprep.subr.mxu0 0.0
    %1635 = vmatpush1.msra.mxu0 0.0
    %1636 = vmatprep.subr.mxu0 0.0
    %1637 = vmatpush1.msra.mxu0 0.0
    %1638 = vmatprep.subr.mxu0 0.0
    %1639 = vmatpush1.msra.mxu0 0.0
    %1640 = vmatprep.subr.mxu0 0.0
    %1641 = vmatpush1.msra.mxu0 0.0
    %1642 = vmatprep.subr.mxu0 0.0
    %1643 = vmatpush1.msra.mxu0 0.0
    %1644 = vmatprep.subr.mxu0 0.0
    %1645 = vmatpush1.msra.mxu0 0.0
    %1646 = vmatprep.subr.mxu0 0.0
    %1647 = vmatpush1.msra.mxu0 0.0
    %1648 = vmatprep.subr.mxu0 0.0
    %1649 = vmatpush1.msra.mxu0 0.0
    %1650 = vmatprep.subr.mxu0 0.0
    %1651 = vmatpush1.msra.mxu0 0.0
    %1652 = vmatprep.subr.mxu0 0.0
    %1653 = vmatpush1.msra.mxu0 0.0
    %1654 = vmatprep.subr.mxu0 0.0
    %1655 = vmatpush1.msra.mxu0 0.0
    %1656 = vmatprep.subr.mxu0 0.0
    %1657 = vmatpush1.msra.mxu0 0.0
    %1658 = vmatprep.subr.mxu0 0.0
    %1659 = vmatpush1.msra.mxu0 0.0
    %1660 = vmatprep.mubr.f32.mxu0 0.0
    %1661 = vmatmul.mubr.f32.gmra.mrb[0].mxu0 %v1523
    %v1662 = vpop.f32.mrb[0].mxu0
    %v1663 = vadd.f32 %v1353, %v1662
    %v1664 = vpop.f32.mrb[0].mxu0
    %v1665 = vadd.f32 %v1353, %v1664
    %1666 = vdwg.mxu0
    %v1667 = vadd.f32 %v1592, %v52
    %v1668 = vadd.f32 %v1594, %v53
    %v1669 = vadd.f32 %v1663, %v54
    %v1670 = vadd.f32 %v1665, %v55
    %1671 = vst [vmem:[#allocation2 + $0x8] sm:$0xff] %v1667
    %1672 = vst [vmem:[#allocation2 + $0x10] sm:$0xff] %v1668
    %1673 = vst [vmem:[#allocation2 + $0x18] sm:$0xff] %v1669
    %1674 = vst [vmem:[#allocation2 + $0x20] sm:$0xff] %v1670
    %s1675 = scalar_lea.vmem %s1, 8
    %v1676 = vld [vmem:[%s1675] sm:$0xff]
    %s1677 = scalar_lea.vmem %s2, 8
    %v1678 = vld [vmem:[%s1677] sm:$0xff]
    %v1679 = vld [vmem:[#allocation2] sm:$0xff]
    %v1680 = vld [vmem:[#allocation2 + $0x8] sm:$0xff]
    %v1681 = vld [vmem:[#allocation2 + $0x10] sm:$0xff]
    %v1682 = vld [vmem:[#allocation2 + $0x18] sm:$0xff]
    %v1683 = vld [vmem:[#allocation2 + $0x20] sm:$0xff]
    %v1684 = vld [vmem:[%s5] sm:$0xf]
    %v1686 = vlaneseq
    %v1687 = vshrl.u32 %v1686, 7
    %v1688 = vsub.s32 0, %v1687
    %v1689 = vrot.slane %v1684, %v1688
    %v1690 = vlaneseq
    %v1691 = vshrl.u32 %v1690, 7
    %v1692 = vsub.s32 1, %v1691
    %v1693 = vrot.slane %v1684, %v1692
    %v1694 = vlaneseq
    %v1695 = vshrl.u32 %v1694, 7
    %v1696 = vsub.s32 2, %v1695
    %v1697 = vrot.slane %v1684, %v1696
    %v1698 = vlaneseq
    %v1699 = vshrl.u32 %v1698, 7
    %v1700 = vsub.s32 3, %v1699
    %v1701 = vrot.slane %v1684, %v1700
    %1702 = vrot.lane.b32.xlu0 %v1689, 111
    %v1703 = vpop.permute.xlu0 %1702
    %1704 = vrot.lane.b32.xlu0 %v1693, 111
    %v1705 = vpop.permute.xlu0 %1704
    %1706 = vrot.lane.b32.xlu0 %v1697, 111
    %v1707 = vpop.permute.xlu0 %1706
    %1708 = vrot.lane.b32.xlu0 %v1701, 111
    %v1709 = vpop.permute.xlu0 %1708
    %v1710 = vsel %vm93, %v1703, %v1705
    %v1711 = vsel %vm93, %v1705, %v1707
    %v1712 = vsel %vm93, %v1707, %v1709
    %v1718 = vmul.f32 %v1679, %v1703
    %v1719 = vmul.f32 %v1680, %v1710
    %v1720 = vmul.f32 %v1681, %v1711
    %v1721 = vmul.f32 %v1682, %v1712
    %v1722 = vmul.f32 %v1683, %v1709
    %v1723 = vld [vmem:[%s107] sm:$0xf]
    %v1725 = vlaneseq
    %v1726 = vshrl.u32 %v1725, 7
    %v1727 = vsub.s32 0, %v1726
    %v1728 = vrot.slane %v1723, %v1727
    %v1729 = vlaneseq
    %v1730 = vshrl.u32 %v1729, 7
    %v1731 = vsub.s32 1, %v1730
    %v1732 = vrot.slane %v1723, %v1731
    %v1733 = vlaneseq
    %v1734 = vshrl.u32 %v1733, 7
    %v1735 = vsub.s32 2, %v1734
    %v1736 = vrot.slane %v1723, %v1735
    %v1737 = vlaneseq
    %v1738 = vshrl.u32 %v1737, 7
    %v1739 = vsub.s32 3, %v1738
    %v1740 = vrot.slane %v1723, %v1739
    %1741 = vrot.lane.b32.xlu0 %v1728, 112
    %v1742 = vpop.permute.xlu0 %1741
    %1743 = vrot.lane.b32.xlu0 %v1732, 112
    %v1744 = vpop.permute.xlu0 %1743
    %1745 = vrot.lane.b32.xlu0 %v1736, 112
    %v1746 = vpop.permute.xlu0 %1745
    %1747 = vrot.lane.b32.xlu0 %v1740, 112
    %v1748 = vpop.permute.xlu0 %1747
    %v1749 = vsel %vm134, %v1742, %v1744
    %v1750 = vsel %vm134, %v1744, %v1746
    %v1751 = vsel %vm134, %v1746, %v1748
    %v1757 = vmul.f32 %v1679, %v1742
    %v1758 = vmul.f32 %v1680, %v1749
    %v1759 = vmul.f32 %v1681, %v1750
    %v1760 = vmul.f32 %v1682, %v1751
    %v1761 = vmul.f32 %v1683, %v1748
    %v1762 = vld [vmem:[%s148] sm:$0xf]
    %v1764 = vlaneseq
    %v1765 = vshrl.u32 %v1764, 7
    %v1766 = vsub.s32 0, %v1765
    %v1767 = vrot.slane %v1762, %v1766
    %v1768 = vlaneseq
    %v1769 = vshrl.u32 %v1768, 7
    %v1770 = vsub.s32 1, %v1769
    %v1771 = vrot.slane %v1762, %v1770
    %v1772 = vlaneseq
    %v1773 = vshrl.u32 %v1772, 7
    %v1774 = vsub.s32 2, %v1773
    %v1775 = vrot.slane %v1762, %v1774
    %v1776 = vlaneseq
    %v1777 = vshrl.u32 %v1776, 7
    %v1778 = vsub.s32 3, %v1777
    %v1779 = vrot.slane %v1762, %v1778
    %1780 = vrot.lane.b32.xlu0 %v1767, 113
    %v1781 = vpop.permute.xlu0 %1780
    %1782 = vrot.lane.b32.xlu0 %v1771, 113
    %v1783 = vpop.permute.xlu0 %1782
    %1784 = vrot.lane.b32.xlu0 %v1775, 113
    %v1785 = vpop.permute.xlu0 %1784
    %1786 = vrot.lane.b32.xlu0 %v1779, 113
    %v1787 = vpop.permute.xlu0 %1786
    %v1788 = vsel %vm175, %v1781, %v1783
    %v1789 = vsel %vm175, %v1783, %v1785
    %v1790 = vsel %vm175, %v1785, %v1787
    %v1796 = vmul.f32 %v1679, %v1781
    %v1797 = vmul.f32 %v1680, %v1788
    %v1798 = vmul.f32 %v1681, %v1789
    %v1799 = vmul.f32 %v1682, %v1790
    %v1800 = vmul.f32 %v1683, %v1787
    %v1801 = vld [vmem:[%s189] sm:$0xf]
    %v1803 = vlaneseq
    %v1804 = vshrl.u32 %v1803, 7
    %v1805 = vsub.s32 0, %v1804
    %v1806 = vrot.slane %v1801, %v1805
    %v1807 = vlaneseq
    %v1808 = vshrl.u32 %v1807, 7
    %v1809 = vsub.s32 1, %v1808
    %v1810 = vrot.slane %v1801, %v1809
    %v1811 = vlaneseq
    %v1812 = vshrl.u32 %v1811, 7
    %v1813 = vsub.s32 2, %v1812
    %v1814 = vrot.slane %v1801, %v1813
    %v1815 = vlaneseq
    %v1816 = vshrl.u32 %v1815, 7
    %v1817 = vsub.s32 3, %v1816
    %v1818 = vrot.slane %v1801, %v1817
    %1819 = vrot.lane.b32.xlu0 %v1806, 127
    %v1820 = vpop.permute.xlu0 %1819
    %1821 = vrot.lane.b32.xlu0 %v1810, 127
    %v1822 = vpop.permute.xlu0 %1821
    %1823 = vrot.lane.b32.xlu0 %v1814, 127
    %v1824 = vpop.permute.xlu0 %1823
    %1825 = vrot.lane.b32.xlu0 %v1818, 127
    %v1826 = vpop.permute.xlu0 %1825
    %v1827 = vsel %vm216, %v1820, %v1822
    %v1828 = vsel %vm216, %v1822, %v1824
    %v1829 = vsel %vm216, %v1824, %v1826
    %v1835 = vmul.f32 %v1679, %v1820
    %v1836 = vmul.f32 %v1680, %v1827
    %v1837 = vmul.f32 %v1681, %v1828
    %v1838 = vmul.f32 %v1682, %v1829
    %v1839 = vmul.f32 %v1683, %v1826
    %v1840 = vld [vmem:[#allocation2 + $0x8] sm:$0xff]
    %v1841 = vld [vmem:[#allocation2 + $0x10] sm:$0xff]
    %v1842 = vld [vmem:[#allocation2 + $0x18] sm:$0xff]
    %v1843 = vld [vmem:[#allocation2 + $0x20] sm:$0xff]
    %v1844 = vld [vmem:[#allocation2 + $0x28] sm:$0xff]
    %v1845 = vld [vmem:[%s235] sm:$0xf]
    %v1847 = vlaneseq
    %v1848 = vshrl.u32 %v1847, 7
    %v1849 = vsub.s32 0, %v1848
    %v1850 = vrot.slane %v1845, %v1849
    %v1851 = vlaneseq
    %v1852 = vshrl.u32 %v1851, 7
    %v1853 = vsub.s32 1, %v1852
    %v1854 = vrot.slane %v1845, %v1853
    %v1855 = vlaneseq
    %v1856 = vshrl.u32 %v1855, 7
    %v1857 = vsub.s32 2, %v1856
    %v1858 = vrot.slane %v1845, %v1857
    %v1859 = vlaneseq
    %v1860 = vshrl.u32 %v1859, 7
    %v1861 = vsub.s32 3, %v1860
    %v1862 = vrot.slane %v1845, %v1861
    %1863 = vrot.lane.b32.xlu0 %v1850, 1
    %v1864 = vpop.permute.xlu0 %1863
    %1865 = vrot.lane.b32.xlu0 %v1854, 1
    %v1866 = vpop.permute.xlu0 %1865
    %1867 = vrot.lane.b32.xlu0 %v1858, 1
    %v1868 = vpop.permute.xlu0 %1867
    %1869 = vrot.lane.b32.xlu0 %v1862, 1
    %v1870 = vpop.permute.xlu0 %1869
    %v1871 = vsel %vm262, %v1864, %v1866
    %v1872 = vsel %vm262, %v1866, %v1868
    %v1873 = vsel %vm262, %v1868, %v1870
    %v1879 = vmul.f32 %v1840, %v1864
    %v1880 = vmul.f32 %v1841, %v1871
    %v1881 = vmul.f32 %v1842, %v1872
    %v1882 = vmul.f32 %v1843, %v1873
    %v1883 = vmul.f32 %v1844, %v1870
    %v1884 = vld [vmem:[%s276] sm:$0xf]
    %v1886 = vlaneseq
    %v1887 = vshrl.u32 %v1886, 7
    %v1888 = vsub.s32 0, %v1887
    %v1889 = vrot.slane %v1884, %v1888
    %v1890 = vlaneseq
    %v1891 = vshrl.u32 %v1890, 7
    %v1892 = vsub.s32 1, %v1891
    %v1893 = vrot.slane %v1884, %v1892
    %v1894 = vlaneseq
    %v1895 = vshrl.u32 %v1894, 7
    %v1896 = vsub.s32 2, %v1895
    %v1897 = vrot.slane %v1884, %v1896
    %v1898 = vlaneseq
    %v1899 = vshrl.u32 %v1898, 7
    %v1900 = vsub.s32 3, %v1899
    %v1901 = vrot.slane %v1884, %v1900
    %1902 = vrot.lane.b32.xlu0 %v1889, 15
    %v1903 = vpop.permute.xlu0 %1902
    %1904 = vrot.lane.b32.xlu0 %v1893, 15
    %v1905 = vpop.permute.xlu0 %1904
    %1906 = vrot.lane.b32.xlu0 %v1897, 15
    %v1907 = vpop.permute.xlu0 %1906
    %1908 = vrot.lane.b32.xlu0 %v1901, 15
    %v1909 = vpop.permute.xlu0 %1908
    %v1910 = vsel %vm303, %v1903, %v1905
    %v1911 = vsel %vm303, %v1905, %v1907
    %v1912 = vsel %vm303, %v1907, %v1909
    %v1918 = vmul.f32 %v1840, %v1903
    %v1919 = vmul.f32 %v1841, %v1910
    %v1920 = vmul.f32 %v1842, %v1911
    %v1921 = vmul.f32 %v1843, %v1912
    %v1922 = vmul.f32 %v1844, %v1909
    %v1923 = vld [vmem:[%s317] sm:$0xf]
    %v1925 = vlaneseq
    %v1926 = vshrl.u32 %v1925, 7
    %v1927 = vsub.s32 0, %v1926
    %v1928 = vrot.slane %v1923, %v1927
    %v1929 = vlaneseq
    %v1930 = vshrl.u32 %v1929, 7
    %v1931 = vsub.s32 1, %v1930
    %v1932 = vrot.slane %v1923, %v1931
    %v1933 = vlaneseq
    %v1934 = vshrl.u32 %v1933, 7
    %v1935 = vsub.s32 2, %v1934
    %v1936 = vrot.slane %v1923, %v1935
    %v1937 = vlaneseq
    %v1938 = vshrl.u32 %v1937, 7
    %v1939 = vsub.s32 3, %v1938
    %v1940 = vrot.slane %v1923, %v1939
    %1941 = vrot.lane.b32.xlu0 %v1928, 16
    %v1942 = vpop.permute.xlu0 %1941
    %1943 = vrot.lane.b32.xlu0 %v1932, 16
    %v1944 = vpop.permute.xlu0 %1943
    %1945 = vrot.lane.b32.xlu0 %v1936, 16
    %v1946 = vpop.permute.xlu0 %1945
    %1947 = vrot.lane.b32.xlu0 %v1940, 16
    %v1948 = vpop.permute.xlu0 %1947
    %v1949 = vsel %vm344, %v1942, %v1944
    %v1950 = vsel %vm344, %v1944, %v1946
    %v1951 = vsel %vm344, %v1946, %v1948
    %v1957 = vmul.f32 %v1840, %v1942
    %v1958 = vmul.f32 %v1841, %v1949
    %v1959 = vmul.f32 %v1842, %v1950
    %v1960 = vmul.f32 %v1843, %v1951
    %v1961 = vmul.f32 %v1844, %v1948
    %v1962 = vld [vmem:[%s358] sm:$0xf]
    %v1964 = vlaneseq
    %v1965 = vshrl.u32 %v1964, 7
    %v1966 = vsub.s32 0, %v1965
    %v1967 = vrot.slane %v1962, %v1966
    %v1968 = vlaneseq
    %v1969 = vshrl.u32 %v1968, 7
    %v1970 = vsub.s32 1, %v1969
    %v1971 = vrot.slane %v1962, %v1970
    %v1972 = vlaneseq
    %v1973 = vshrl.u32 %v1972, 7
    %v1974 = vsub.s32 2, %v1973
    %v1975 = vrot.slane %v1962, %v1974
    %v1976 = vlaneseq
    %v1977 = vshrl.u32 %v1976, 7
    %v1978 = vsub.s32 3, %v1977
    %v1979 = vrot.slane %v1962, %v1978
    %1980 = vrot.lane.b32.xlu0 %v1967, 17
    %v1981 = vpop.permute.xlu0 %1980
    %1982 = vrot.lane.b32.xlu0 %v1971, 17
    %v1983 = vpop.permute.xlu0 %1982
    %1984 = vrot.lane.b32.xlu0 %v1975, 17
    %v1985 = vpop.permute.xlu0 %1984
    %1986 = vrot.lane.b32.xlu0 %v1979, 17
    %v1987 = vpop.permute.xlu0 %1986
    %v1988 = vsel %vm385, %v1981, %v1983
    %v1989 = vsel %vm385, %v1983, %v1985
    %v1990 = vsel %vm385, %v1985, %v1987
    %v1996 = vmul.f32 %v1840, %v1981
    %v1997 = vmul.f32 %v1841, %v1988
    %v1998 = vmul.f32 %v1842, %v1989
    %v1999 = vmul.f32 %v1843, %v1990
    %v2000 = vmul.f32 %v1844, %v1987
    %2006 = vrot.lane.b32.xlu0 %v1757, 127
    %v2007 = vpop.permute.xlu0 %2006
    %2008 = vrot.lane.b32.xlu0 %v1758, 127
    %v2009 = vpop.permute.xlu0 %2008
    %2010 = vrot.lane.b32.xlu0 %v1759, 127
    %v2011 = vpop.permute.xlu0 %2010
    %2012 = vrot.lane.b32.xlu0 %v1760, 127
    %v2013 = vpop.permute.xlu0 %2012
    %2014 = vrot.lane.b32.xlu0 %v1761, 127
    %v2015 = vpop.permute.xlu0 %2014
    %v2016 = vsel %vm216, %v2007, %v2009
    %v2017 = vsel %vm216, %v2009, %v2011
    %v2018 = vsel %vm216, %v2011, %v2013
    %v2019 = vsel %vm216, %v2013, %v2015
    %2025 = vrot.lane.b32.xlu0 %v1796, 126
    %v2026 = vpop.permute.xlu0 %2025
    %2027 = vrot.lane.b32.xlu0 %v1797, 126
    %v2028 = vpop.permute.xlu0 %2027
    %2029 = vrot.lane.b32.xlu0 %v1798, 126
    %v2030 = vpop.permute.xlu0 %2029
    %2031 = vrot.lane.b32.xlu0 %v1799, 126
    %v2032 = vpop.permute.xlu0 %2031
    %2033 = vrot.lane.b32.xlu0 %v1800, 126
    %v2034 = vpop.permute.xlu0 %2033
    %v2035 = vsel %vm433, %v2026, %v2028
    %v2036 = vsel %vm433, %v2028, %v2030
    %v2037 = vsel %vm433, %v2030, %v2032
    %v2038 = vsel %vm433, %v2032, %v2034
    %2044 = vrot.lane.b32.xlu0 %v1835, 112
    %v2045 = vpop.permute.xlu0 %2044
    %2046 = vrot.lane.b32.xlu0 %v1836, 112
    %v2047 = vpop.permute.xlu0 %2046
    %2048 = vrot.lane.b32.xlu0 %v1837, 112
    %v2049 = vpop.permute.xlu0 %2048
    %2050 = vrot.lane.b32.xlu0 %v1838, 112
    %v2051 = vpop.permute.xlu0 %2050
    %2052 = vrot.lane.b32.xlu0 %v1839, 112
    %v2053 = vpop.permute.xlu0 %2052
    %v2054 = vsel %vm134, %v2045, %v2047
    %v2055 = vsel %vm134, %v2047, %v2049
    %v2056 = vsel %vm134, %v2049, %v2051
    %v2057 = vsel %vm134, %v2051, %v2053
    %2062 = vrot.lane.b32.xlu0 %v1680, 111
    %v2063 = vpop.permute.xlu0 %2062
    %2064 = vrot.lane.b32.xlu0 %v1681, 111
    %v2065 = vpop.permute.xlu0 %2064
    %2066 = vrot.lane.b32.xlu0 %v1682, 111
    %v2067 = vpop.permute.xlu0 %2066
    %2068 = vrot.lane.b32.xlu0 %v1683, 111
    %v2069 = vpop.permute.xlu0 %2068
    %v2070 = vsel %vm93, %v2063, %v2065
    %v2071 = vsel %vm93, %v2065, %v2067
    %v2072 = vsel %vm93, %v2067, %v2069
    %2078 = vrot.lane.b32.xlu0 %v1879, 110
    %v2079 = vpop.permute.xlu0 %2078
    %2080 = vrot.lane.b32.xlu0 %v1880, 110
    %v2081 = vpop.permute.xlu0 %2080
    %2082 = vrot.lane.b32.xlu0 %v1881, 110
    %v2083 = vpop.permute.xlu0 %2082
    %2084 = vrot.lane.b32.xlu0 %v1882, 110
    %v2085 = vpop.permute.xlu0 %2084
    %2086 = vrot.lane.b32.xlu0 %v1883, 110
    %v2087 = vpop.permute.xlu0 %2086
    %v2088 = vsel %vm487, %v2079, %v2081
    %v2089 = vsel %vm487, %v2081, %v2083
    %v2090 = vsel %vm487, %v2083, %v2085
    %v2091 = vsel %vm487, %v2085, %v2087
    %2097 = vrot.lane.b32.xlu0 %v1918, 96
    %v2098 = vpop.permute.xlu0 %2097
    %2099 = vrot.lane.b32.xlu0 %v1919, 96
    %v2100 = vpop.permute.xlu0 %2099
    %2101 = vrot.lane.b32.xlu0 %v1920, 96
    %v2102 = vpop.permute.xlu0 %2101
    %2103 = vrot.lane.b32.xlu0 %v1921, 96
    %v2104 = vpop.permute.xlu0 %2103
    %2105 = vrot.lane.b32.xlu0 %v1922, 96
    %v2106 = vpop.permute.xlu0 %2105
    %v2107 = vsel %vm507, %v2098, %v2100
    %v2108 = vsel %vm507, %v2100, %v2102
    %v2109 = vsel %vm507, %v2102, %v2104
    %v2110 = vsel %vm507, %v2104, %v2106
    %2116 = vrot.lane.b32.xlu0 %v1957, 95
    %v2117 = vpop.permute.xlu0 %2116
    %2118 = vrot.lane.b32.xlu0 %v1958, 95
    %v2119 = vpop.permute.xlu0 %2118
    %2120 = vrot.lane.b32.xlu0 %v1959, 95
    %v2121 = vpop.permute.xlu0 %2120
    %2122 = vrot.lane.b32.xlu0 %v1960, 95
    %v2123 = vpop.permute.xlu0 %2122
    %2124 = vrot.lane.b32.xlu0 %v1961, 95
    %v2125 = vpop.permute.xlu0 %2124
    %v2126 = vsel %vm527, %v2117, %v2119
    %v2127 = vsel %vm527, %v2119, %v2121
    %v2128 = vsel %vm527, %v2121, %v2123
    %v2129 = vsel %vm527, %v2123, %v2125
    %2135 = vrot.lane.b32.xlu0 %v1996, 94
    %v2136 = vpop.permute.xlu0 %2135
    %2137 = vrot.lane.b32.xlu0 %v1997, 94
    %v2138 = vpop.permute.xlu0 %2137
    %2139 = vrot.lane.b32.xlu0 %v1998, 94
    %v2140 = vpop.permute.xlu0 %2139
    %2141 = vrot.lane.b32.xlu0 %v1999, 94
    %v2142 = vpop.permute.xlu0 %2141
    %2143 = vrot.lane.b32.xlu0 %v2000, 94
    %v2144 = vpop.permute.xlu0 %2143
    %v2145 = vsel %vm547, %v2136, %v2138
    %v2146 = vsel %vm547, %v2138, %v2140
    %v2147 = vsel %vm547, %v2140, %v2142
    %v2148 = vsel %vm547, %v2142, %v2144
    %2150 = vset.pattern.permute.xlu0 0
    %2151 = vperm.xlu0 %2150, %v1678
    %v2152 = vpop.permute.xlu0 %2151
    %2159 = vrot.lane.b32.xlu0 %v1718, 17
    %v2160 = vpop.permute.xlu0 %2159
    %2161 = vrot.lane.b32.xlu0 %v1719, 17
    %v2162 = vpop.permute.xlu0 %2161
    %2163 = vrot.lane.b32.xlu0 %v1720, 17
    %v2164 = vpop.permute.xlu0 %2163
    %2165 = vrot.lane.b32.xlu0 %v1721, 17
    %v2166 = vpop.permute.xlu0 %2165
    %2167 = vrot.lane.b32.xlu0 %v1722, 17
    %v2168 = vpop.permute.xlu0 %2167
    %2169 = vrot.lane.b32.xlu0 %v2016, 17
    %v2170 = vpop.permute.xlu0 %2169
    %2171 = vrot.lane.b32.xlu0 %v2017, 17
    %v2172 = vpop.permute.xlu0 %2171
    %2173 = vrot.lane.b32.xlu0 %v2018, 17
    %v2174 = vpop.permute.xlu0 %2173
    %2175 = vrot.lane.b32.xlu0 %v2019, 17
    %v2176 = vpop.permute.xlu0 %2175
    %2177 = vrot.lane.b32.xlu0 %v2015, 17
    %v2178 = vpop.permute.xlu0 %2177
    %2179 = vrot.lane.b32.xlu0 %v2035, 17
    %v2180 = vpop.permute.xlu0 %2179
    %2181 = vrot.lane.b32.xlu0 %v2036, 17
    %v2182 = vpop.permute.xlu0 %2181
    %2183 = vrot.lane.b32.xlu0 %v2037, 17
    %v2184 = vpop.permute.xlu0 %2183
    %2185 = vrot.lane.b32.xlu0 %v2038, 17
    %v2186 = vpop.permute.xlu0 %2185
    %2187 = vrot.lane.b32.xlu0 %v2034, 17
    %v2188 = vpop.permute.xlu0 %2187
    %2189 = vrot.lane.b32.xlu0 %v2054, 17
    %v2190 = vpop.permute.xlu0 %2189
    %2191 = vrot.lane.b32.xlu0 %v2055, 17
    %v2192 = vpop.permute.xlu0 %2191
    %2193 = vrot.lane.b32.xlu0 %v2056, 17
    %v2194 = vpop.permute.xlu0 %2193
    %2195 = vrot.lane.b32.xlu0 %v2057, 17
    %v2196 = vpop.permute.xlu0 %2195
    %2197 = vrot.lane.b32.xlu0 %v2053, 17
    %v2198 = vpop.permute.xlu0 %2197
    %2199 = vrot.lane.b32.xlu0 %v2063, 17
    %v2200 = vpop.permute.xlu0 %2199
    %2201 = vrot.lane.b32.xlu0 %v2070, 17
    %v2202 = vpop.permute.xlu0 %2201
    %2203 = vrot.lane.b32.xlu0 %v2071, 17
    %v2204 = vpop.permute.xlu0 %2203
    %2205 = vrot.lane.b32.xlu0 %v2072, 17
    %v2206 = vpop.permute.xlu0 %2205
    %2207 = vrot.lane.b32.xlu0 %v2069, 17
    %v2208 = vpop.permute.xlu0 %2207
    %2209 = vrot.lane.b32.xlu0 %v2079, 17
    %v2210 = vpop.permute.xlu0 %2209
    %2211 = vrot.lane.b32.xlu0 %v2088, 17
    %v2212 = vpop.permute.xlu0 %2211
    %2213 = vrot.lane.b32.xlu0 %v2089, 17
    %v2214 = vpop.permute.xlu0 %2213
    %2215 = vrot.lane.b32.xlu0 %v2090, 17
    %v2216 = vpop.permute.xlu0 %2215
    %2217 = vrot.lane.b32.xlu0 %v2091, 17
    %v2218 = vpop.permute.xlu0 %2217
    %2219 = vrot.lane.b32.xlu0 %v2098, 17
    %v2220 = vpop.permute.xlu0 %2219
    %2221 = vrot.lane.b32.xlu0 %v2107, 17
    %v2222 = vpop.permute.xlu0 %2221
    %2223 = vrot.lane.b32.xlu0 %v2108, 17
    %v2224 = vpop.permute.xlu0 %2223
    %2225 = vrot.lane.b32.xlu0 %v2109, 17
    %v2226 = vpop.permute.xlu0 %2225
    %2227 = vrot.lane.b32.xlu0 %v2110, 17
    %v2228 = vpop.permute.xlu0 %2227
    %2229 = vrot.lane.b32.xlu0 %v2117, 17
    %v2230 = vpop.permute.xlu0 %2229
    %2231 = vrot.lane.b32.xlu0 %v2126, 17
    %v2232 = vpop.permute.xlu0 %2231
    %2233 = vrot.lane.b32.xlu0 %v2127, 17
    %v2234 = vpop.permute.xlu0 %2233
    %2235 = vrot.lane.b32.xlu0 %v2128, 17
    %v2236 = vpop.permute.xlu0 %2235
    %2237 = vrot.lane.b32.xlu0 %v2129, 17
    %v2238 = vpop.permute.xlu0 %2237
    %2239 = vrot.lane.b32.xlu0 %v2136, 17
    %v2240 = vpop.permute.xlu0 %2239
    %2241 = vrot.lane.b32.xlu0 %v2145, 17
    %v2242 = vpop.permute.xlu0 %2241
    %2243 = vrot.lane.b32.xlu0 %v2146, 17
    %v2244 = vpop.permute.xlu0 %2243
    %2245 = vrot.lane.b32.xlu0 %v2147, 17
    %v2246 = vpop.permute.xlu0 %2245
    %2247 = vrot.lane.b32.xlu0 %v2148, 17
    %v2248 = vpop.permute.xlu0 %2247
    %v2249 = vsel %vm385, %v2160, %v2162
    %v2250 = vsel %vm385, %v2162, %v2164
    %v2251 = vsel %vm385, %v2164, %v2166
    %v2252 = vsel %vm385, %v2166, %v2168
    %v2253 = vsel %vm385, %v2170, %v2172
    %v2254 = vsel %vm385, %v2172, %v2174
    %v2255 = vsel %vm385, %v2174, %v2176
    %v2256 = vsel %vm385, %v2176, %v2178
    %v2257 = vsel %vm385, %v2180, %v2182
    %v2258 = vsel %vm385, %v2182, %v2184
    %v2259 = vsel %vm385, %v2184, %v2186
    %v2260 = vsel %vm385, %v2186, %v2188
    %v2261 = vsel %vm385, %v2190, %v2192
    %v2262 = vsel %vm385, %v2192, %v2194
    %v2263 = vsel %vm385, %v2194, %v2196
    %v2264 = vsel %vm385, %v2196, %v2198
    %v2265 = vsel %vm385, %v2200, %v2202
    %v2266 = vsel %vm385, %v2202, %v2204
    %v2267 = vsel %vm385, %v2204, %v2206
    %v2268 = vsel %vm385, %v2206, %v2208
    %v2269 = vsel %vm385, %v2210, %v2212
    %v2270 = vsel %vm385, %v2212, %v2214
    %v2271 = vsel %vm385, %v2214, %v2216
    %v2272 = vsel %vm385, %v2216, %v2218
    %v2273 = vsel %vm385, %v2220, %v2222
    %v2274 = vsel %vm385, %v2222, %v2224
    %v2275 = vsel %vm385, %v2224, %v2226
    %v2276 = vsel %vm385, %v2226, %v2228
    %v2277 = vsel %vm385, %v2230, %v2232
    %v2278 = vsel %vm385, %v2232, %v2234
    %v2279 = vsel %vm385, %v2234, %v2236
    %v2280 = vsel %vm385, %v2236, %v2238
    %v2281 = vsel %vm385, %v2240, %v2242
    %v2282 = vsel %vm385, %v2242, %v2244
    %v2283 = vsel %vm385, %v2244, %v2246
    %v2284 = vsel %vm385, %v2246, %v2248
    %v2322 = vsel %vm724, %v1676, 0
    %2324 = vmatprep.subr.mxu0 %v2250
    %2325 = vmatpush1.msra.mxu0 %v2249
    %2326 = vmatprep.subr.mxu0 %v2254
    %2327 = vmatpush1.msra.mxu0 %v2253
    %2328 = vmatprep.subr.mxu0 %v2258
    %2329 = vmatpush1.msra.mxu0 %v2257
    %2330 = vmatprep.subr.mxu0 %v2262
    %2331 = vmatpush1.msra.mxu0 %v2261
    %2332 = vmatprep.subr.mxu0 %v2266
    %2333 = vmatpush1.msra.mxu0 %v2265
    %2334 = vmatprep.subr.mxu0 %v2270
    %2335 = vmatpush1.msra.mxu0 %v2269
    %2336 = vmatprep.subr.mxu0 %v2274
    %2337 = vmatpush1.msra.mxu0 %v2273
    %2338 = vmatprep.subr.mxu0 %v2278
    %2339 = vmatpush1.msra.mxu0 %v2277
    %2340 = vmatprep.subr.mxu0 %v2282
    %2341 = vmatpush1.msra.mxu0 %v2281
    %2342 = vmatprep.subr.mxu0 0.0
    %2343 = vmatpush1.msra.mxu0 0.0
    %2344 = vmatprep.subr.mxu0 0.0
    %2345 = vmatpush1.msra.mxu0 0.0
    %2346 = vmatprep.subr.mxu0 0.0
    %2347 = vmatpush1.msra.mxu0 0.0
    %2348 = vmatprep.subr.mxu0 0.0
    %2349 = vmatpush1.msra.mxu0 0.0
    %2350 = vmatprep.subr.mxu0 0.0
    %2351 = vmatpush1.msra.mxu0 0.0
    %2352 = vmatprep.subr.mxu0 0.0
    %2353 = vmatpush1.msra.mxu0 0.0
    %2354 = vmatprep.subr.mxu0 0.0
    %2355 = vmatpush1.msra.mxu0 0.0
    %2356 = vmatprep.subr.mxu0 0.0
    %2357 = vmatpush1.msra.mxu0 0.0
    %2358 = vmatprep.subr.mxu0 0.0
    %2359 = vmatpush1.msra.mxu0 0.0
    %2360 = vmatprep.subr.mxu0 0.0
    %2361 = vmatpush1.msra.mxu0 0.0
    %2362 = vmatprep.subr.mxu0 0.0
    %2363 = vmatpush1.msra.mxu0 0.0
    %2364 = vmatprep.subr.mxu0 0.0
    %2365 = vmatpush1.msra.mxu0 0.0
    %2366 = vmatprep.subr.mxu0 0.0
    %2367 = vmatpush1.msra.mxu0 0.0
    %2368 = vmatprep.subr.mxu0 0.0
    %2369 = vmatpush1.msra.mxu0 0.0
    %2370 = vmatprep.subr.mxu0 0.0
    %2371 = vmatpush1.msra.mxu0 0.0
    %2372 = vmatprep.subr.mxu0 0.0
    %2373 = vmatpush1.msra.mxu0 0.0
    %2374 = vmatprep.subr.mxu0 0.0
    %2375 = vmatpush1.msra.mxu0 0.0
    %2376 = vmatprep.subr.mxu0 0.0
    %2377 = vmatpush1.msra.mxu0 0.0
    %2378 = vmatprep.subr.mxu0 0.0
    %2379 = vmatpush1.msra.mxu0 0.0
    %2380 = vmatprep.subr.mxu0 0.0
    %2381 = vmatpush1.msra.mxu0 0.0
    %2382 = vmatprep.subr.mxu0 0.0
    %2383 = vmatpush1.msra.mxu0 0.0
    %2384 = vmatprep.subr.mxu0 0.0
    %2385 = vmatpush1.msra.mxu0 0.0
    %2386 = vmatprep.subr.mxu0 0.0
    %2387 = vmatpush1.msra.mxu0 0.0
    %2388 = vmatprep.mubr.f32.mxu0 0.0
    %2389 = vmatmul.mubr.f32.gmra.mrb[0].mxu0 %v2322
    %v2390 = vpop.f32.mrb[0].mxu0
    %v2391 = vadd.f32 %v2152, %v2390
    %v2392 = vpop.f32.mrb[0].mxu0
    %v2393 = vadd.f32 %v2152, %v2392
    %2394 = vdwg.mxu0
    %2395 = vmatprep.subr.mxu0 %v2252
    %2396 = vmatpush1.msra.mxu0 %v2251
    %2397 = vmatprep.subr.mxu0 %v2256
    %2398 = vmatpush1.msra.mxu0 %v2255
    %2399 = vmatprep.subr.mxu0 %v2260
    %2400 = vmatpush1.msra.mxu0 %v2259
    %2401 = vmatprep.subr.mxu0 %v2264
    %2402 = vmatpush1.msra.mxu0 %v2263
    %2403 = vmatprep.subr.mxu0 %v2268
    %2404 = vmatpush1.msra.mxu0 %v2267
    %2405 = vmatprep.subr.mxu0 %v2272
    %2406 = vmatpush1.msra.mxu0 %v2271
    %2407 = vmatprep.subr.mxu0 %v2276
    %2408 = vmatpush1.msra.mxu0 %v2275
    %2409 = vmatprep.subr.mxu0 %v2280
    %2410 = vmatpush1.msra.mxu0 %v2279
    %2411 = vmatprep.subr.mxu0 %v2284
    %2412 = vmatpush1.msra.mxu0 %v2283
    %2413 = vmatprep.subr.mxu0 0.0
    %2414 = vmatpush1.msra.mxu0 0.0
    %2415 = vmatprep.subr.mxu0 0.0
    %2416 = vmatpush1.msra.mxu0 0.0
    %2417 = vmatprep.subr.mxu0 0.0
    %2418 = vmatpush1.msra.mxu0 0.0
    %2419 = vmatprep.subr.mxu0 0.0
    %2420 = vmatpush1.msra.mxu0 0.0
    %2421 = vmatprep.subr.mxu0 0.0
    %2422 = vmatpush1.msra.mxu0 0.0
    %2423 = vmatprep.subr.mxu0 0.0
    %2424 = vmatpush1.msra.mxu0 0.0
    %2425 = vmatprep.subr.mxu0 0.0
    %2426 = vmatpush1.msra.mxu0 0.0
    %2427 = vmatprep.subr.mxu0 0.0
    %2428 = vmatpush1.msra.mxu0 0.0
    %2429 = vmatprep.subr.mxu0 0.0
    %2430 = vmatpush1.msra.mxu0 0.0
    %2431 = vmatprep.subr.mxu0 0.0
    %2432 = vmatpush1.msra.mxu0 0.0
    %2433 = vmatprep.subr.mxu0 0.0
    %2434 = vmatpush1.msra.mxu0 0.0
    %2435 = vmatprep.subr.mxu0 0.0
    %2436 = vmatpush1.msra.mxu0 0.0
    %2437 = vmatprep.subr.mxu0 0.0
    %2438 = vmatpush1.msra.mxu0 0.0
    %2439 = vmatprep.subr.mxu0 0.0
    %2440 = vmatpush1.msra.mxu0 0.0
    %2441 = vmatprep.subr.mxu0 0.0
    %2442 = vmatpush1.msra.mxu0 0.0
    %2443 = vmatprep.subr.mxu0 0.0
    %2444 = vmatpush1.msra.mxu0 0.0
    %2445 = vmatprep.subr.mxu0 0.0
    %2446 = vmatpush1.msra.mxu0 0.0
    %2447 = vmatprep.subr.mxu0 0.0
    %2448 = vmatpush1.msra.mxu0 0.0
    %2449 = vmatprep.subr.mxu0 0.0
    %2450 = vmatpush1.msra.mxu0 0.0
    %2451 = vmatprep.subr.mxu0 0.0
    %2452 = vmatpush1.msra.mxu0 0.0
    %2453 = vmatprep.subr.mxu0 0.0
    %2454 = vmatpush1.msra.mxu0 0.0
    %2455 = vmatprep.subr.mxu0 0.0
    %2456 = vmatpush1.msra.mxu0 0.0
    %2457 = vmatprep.subr.mxu0 0.0
    %2458 = vmatpush1.msra.mxu0 0.0
    %2459 = vmatprep.mubr.f32.mxu0 0.0
    %2460 = vmatmul.mubr.f32.gmra.mrb[0].mxu0 %v2322
    %v2461 = vpop.f32.mrb[0].mxu0
    %v2462 = vadd.f32 %v2152, %v2461
    %v2463 = vpop.f32.mrb[0].mxu0
    %v2464 = vadd.f32 %v2152, %v2463
    %2465 = vdwg.mxu0
    %v2466 = vmax.f32 %v2391, 0.0
    %v2467 = vmax.f32 %v2393, 0.0
    %v2468 = vmax.f32 %v2462, 0.0
    %v2469 = vmax.f32 %v2464, 0.0
    %2470 = vst [vmem:[#allocation2 + $0x8] sm:$0xff] %v2466
    %2471 = vst [vmem:[#allocation2 + $0x10] sm:$0xff] %v2467
    %2472 = vst [vmem:[#allocation2 + $0x18] sm:$0xff] %v2468
    %2473 = vst [vmem:[#allocation2 + $0x20] sm:$0xff] %v2469
    %s2474 = scalar_lea.vmem [#allocation6], 8
    %v2475 = vld [vmem:[%s2474] sm:$0xff]
    %s2476 = scalar_lea.vmem %s4, 8
    %v2477 = vld [vmem:[%s2476] sm:$0xff]
    %v2478 = vld [vmem:[#allocation2] sm:$0xff]
    %v2479 = vld [vmem:[#allocation2 + $0x8] sm:$0xff]
    %v2480 = vld [vmem:[#allocation2 + $0x10] sm:$0xff]
    %v2481 = vld [vmem:[#allocation2 + $0x18] sm:$0xff]
    %v2482 = vld [vmem:[#allocation2 + $0x20] sm:$0xff]
    %v2483 = vld [vmem:[%s5] sm:$0xf]
    %v2485 = vlaneseq
    %v2486 = vshrl.u32 %v2485, 7
    %v2487 = vsub.s32 0, %v2486
    %v2488 = vrot.slane %v2483, %v2487
    %v2489 = vlaneseq
    %v2490 = vshrl.u32 %v2489, 7
    %v2491 = vsub.s32 1, %v2490
    %v2492 = vrot.slane %v2483, %v2491
    %v2493 = vlaneseq
    %v2494 = vshrl.u32 %v2493, 7
    %v2495 = vsub.s32 2, %v2494
    %v2496 = vrot.slane %v2483, %v2495
    %v2497 = vlaneseq
    %v2498 = vshrl.u32 %v2497, 7
    %v2499 = vsub.s32 3, %v2498
    %v2500 = vrot.slane %v2483, %v2499
    %2501 = vrot.lane.b32.xlu0 %v2488, 111
    %v2502 = vpop.permute.xlu0 %2501
    %2503 = vrot.lane.b32.xlu0 %v2492, 111
    %v2504 = vpop.permute.xlu0 %2503
    %2505 = vrot.lane.b32.xlu0 %v2496, 111
    %v2506 = vpop.permute.xlu0 %2505
    %2507 = vrot.lane.b32.xlu0 %v2500, 111
    %v2508 = vpop.permute.xlu0 %2507
    %v2509 = vsel %vm93, %v2502, %v2504
    %v2510 = vsel %vm93, %v2504, %v2506
    %v2511 = vsel %vm93, %v2506, %v2508
    %v2517 = vmul.f32 %v2478, %v2502
    %v2518 = vmul.f32 %v2479, %v2509
    %v2519 = vmul.f32 %v2480, %v2510
    %v2520 = vmul.f32 %v2481, %v2511
    %v2521 = vmul.f32 %v2482, %v2508
    %v2522 = vld [vmem:[%s107] sm:$0xf]
    %v2524 = vlaneseq
    %v2525 = vshrl.u32 %v2524, 7
    %v2526 = vsub.s32 0, %v2525
    %v2527 = vrot.slane %v2522, %v2526
    %v2528 = vlaneseq
    %v2529 = vshrl.u32 %v2528, 7
    %v2530 = vsub.s32 1, %v2529
    %v2531 = vrot.slane %v2522, %v2530
    %v2532 = vlaneseq
    %v2533 = vshrl.u32 %v2532, 7
    %v2534 = vsub.s32 2, %v2533
    %v2535 = vrot.slane %v2522, %v2534
    %v2536 = vlaneseq
    %v2537 = vshrl.u32 %v2536, 7
    %v2538 = vsub.s32 3, %v2537
    %v2539 = vrot.slane %v2522, %v2538
    %2540 = vrot.lane.b32.xlu0 %v2527, 112
    %v2541 = vpop.permute.xlu0 %2540
    %2542 = vrot.lane.b32.xlu0 %v2531, 112
    %v2543 = vpop.permute.xlu0 %2542
    %2544 = vrot.lane.b32.xlu0 %v2535, 112
    %v2545 = vpop.permute.xlu0 %2544
    %2546 = vrot.lane.b32.xlu0 %v2539, 112
    %v2547 = vpop.permute.xlu0 %2546
    %v2548 = vsel %vm134, %v2541, %v2543
    %v2549 = vsel %vm134, %v2543, %v2545
    %v2550 = vsel %vm134, %v2545, %v2547
    %v2556 = vmul.f32 %v2478, %v2541
    %v2557 = vmul.f32 %v2479, %v2548
    %v2558 = vmul.f32 %v2480, %v2549
    %v2559 = vmul.f32 %v2481, %v2550
    %v2560 = vmul.f32 %v2482, %v2547
    %v2561 = vld [vmem:[%s148] sm:$0xf]
    %v2563 = vlaneseq
    %v2564 = vshrl.u32 %v2563, 7
    %v2565 = vsub.s32 0, %v2564
    %v2566 = vrot.slane %v2561, %v2565
    %v2567 = vlaneseq
    %v2568 = vshrl.u32 %v2567, 7
    %v2569 = vsub.s32 1, %v2568
    %v2570 = vrot.slane %v2561, %v2569
    %v2571 = vlaneseq
    %v2572 = vshrl.u32 %v2571, 7
    %v2573 = vsub.s32 2, %v2572
    %v2574 = vrot.slane %v2561, %v2573
    %v2575 = vlaneseq
    %v2576 = vshrl.u32 %v2575, 7
    %v2577 = vsub.s32 3, %v2576
    %v2578 = vrot.slane %v2561, %v2577
    %2579 = vrot.lane.b32.xlu0 %v2566, 113
    %v2580 = vpop.permute.xlu0 %2579
    %2581 = vrot.lane.b32.xlu0 %v2570, 113
    %v2582 = vpop.permute.xlu0 %2581
    %2583 = vrot.lane.b32.xlu0 %v2574, 113
    %v2584 = vpop.permute.xlu0 %2583
    %2585 = vrot.lane.b32.xlu0 %v2578, 113
    %v2586 = vpop.permute.xlu0 %2585
    %v2587 = vsel %vm175, %v2580, %v2582
    %v2588 = vsel %vm175, %v2582, %v2584
    %v2589 = vsel %vm175, %v2584, %v2586
    %v2595 = vmul.f32 %v2478, %v2580
    %v2596 = vmul.f32 %v2479, %v2587
    %v2597 = vmul.f32 %v2480, %v2588
    %v2598 = vmul.f32 %v2481, %v2589
    %v2599 = vmul.f32 %v2482, %v2586
    %v2600 = vld [vmem:[%s189] sm:$0xf]
    %v2602 = vlaneseq
    %v2603 = vshrl.u32 %v2602, 7
    %v2604 = vsub.s32 0, %v2603
    %v2605 = vrot.slane %v2600, %v2604
    %v2606 = vlaneseq
    %v2607 = vshrl.u32 %v2606, 7
    %v2608 = vsub.s32 1, %v2607
    %v2609 = vrot.slane %v2600, %v2608
    %v2610 = vlaneseq
    %v2611 = vshrl.u32 %v2610, 7
    %v2612 = vsub.s32 2, %v2611
    %v2613 = vrot.slane %v2600, %v2612
    %v2614 = vlaneseq
    %v2615 = vshrl.u32 %v2614, 7
    %v2616 = vsub.s32 3, %v2615
    %v2617 = vrot.slane %v2600, %v2616
    %2618 = vrot.lane.b32.xlu0 %v2605, 127
    %v2619 = vpop.permute.xlu0 %2618
    %2620 = vrot.lane.b32.xlu0 %v2609, 127
    %v2621 = vpop.permute.xlu0 %2620
    %2622 = vrot.lane.b32.xlu0 %v2613, 127
    %v2623 = vpop.permute.xlu0 %2622
    %2624 = vrot.lane.b32.xlu0 %v2617, 127
    %v2625 = vpop.permute.xlu0 %2624
    %v2626 = vsel %vm216, %v2619, %v2621
    %v2627 = vsel %vm216, %v2621, %v2623
    %v2628 = vsel %vm216, %v2623, %v2625
    %v2634 = vmul.f32 %v2478, %v2619
    %v2635 = vmul.f32 %v2479, %v2626
    %v2636 = vmul.f32 %v2480, %v2627
    %v2637 = vmul.f32 %v2481, %v2628
    %v2638 = vmul.f32 %v2482, %v2625
    %v2639 = vld [vmem:[#allocation2 + $0x8] sm:$0xff]
    %v2640 = vld [vmem:[#allocation2 + $0x10] sm:$0xff]
    %v2641 = vld [vmem:[#allocation2 + $0x18] sm:$0xff]
    %v2642 = vld [vmem:[#allocation2 + $0x20] sm:$0xff]
    %v2643 = vld [vmem:[#allocation2 + $0x28] sm:$0xff]
    %v2644 = vld [vmem:[%s235] sm:$0xf]
    %v2646 = vlaneseq
    %v2647 = vshrl.u32 %v2646, 7
    %v2648 = vsub.s32 0, %v2647
    %v2649 = vrot.slane %v2644, %v2648
    %v2650 = vlaneseq
    %v2651 = vshrl.u32 %v2650, 7
    %v2652 = vsub.s32 1, %v2651
    %v2653 = vrot.slane %v2644, %v2652
    %v2654 = vlaneseq
    %v2655 = vshrl.u32 %v2654, 7
    %v2656 = vsub.s32 2, %v2655
    %v2657 = vrot.slane %v2644, %v2656
    %v2658 = vlaneseq
    %v2659 = vshrl.u32 %v2658, 7
    %v2660 = vsub.s32 3, %v2659
    %v2661 = vrot.slane %v2644, %v2660
    %2662 = vrot.lane.b32.xlu0 %v2649, 1
    %v2663 = vpop.permute.xlu0 %2662
    %2664 = vrot.lane.b32.xlu0 %v2653, 1
    %v2665 = vpop.permute.xlu0 %2664
    %2666 = vrot.lane.b32.xlu0 %v2657, 1
    %v2667 = vpop.permute.xlu0 %2666
    %2668 = vrot.lane.b32.xlu0 %v2661, 1
    %v2669 = vpop.permute.xlu0 %2668
    %v2670 = vsel %vm262, %v2663, %v2665
    %v2671 = vsel %vm262, %v2665, %v2667
    %v2672 = vsel %vm262, %v2667, %v2669
    %v2678 = vmul.f32 %v2639, %v2663
    %v2679 = vmul.f32 %v2640, %v2670
    %v2680 = vmul.f32 %v2641, %v2671
    %v2681 = vmul.f32 %v2642, %v2672
    %v2682 = vmul.f32 %v2643, %v2669
    %v2683 = vld [vmem:[%s276] sm:$0xf]
    %v2685 = vlaneseq
    %v2686 = vshrl.u32 %v2685, 7
    %v2687 = vsub.s32 0, %v2686
    %v2688 = vrot.slane %v2683, %v2687
    %v2689 = vlaneseq
    %v2690 = vshrl.u32 %v2689, 7
    %v2691 = vsub.s32 1, %v2690
    %v2692 = vrot.slane %v2683, %v2691
    %v2693 = vlaneseq
    %v2694 = vshrl.u32 %v2693, 7
    %v2695 = vsub.s32 2, %v2694
    %v2696 = vrot.slane %v2683, %v2695
    %v2697 = vlaneseq
    %v2698 = vshrl.u32 %v2697, 7
    %v2699 = vsub.s32 3, %v2698
    %v2700 = vrot.slane %v2683, %v2699
    %2701 = vrot.lane.b32.xlu0 %v2688, 15
    %v2702 = vpop.permute.xlu0 %2701
    %2703 = vrot.lane.b32.xlu0 %v2692, 15
    %v2704 = vpop.permute.xlu0 %2703
    %2705 = vrot.lane.b32.xlu0 %v2696, 15
    %v2706 = vpop.permute.xlu0 %2705
    %2707 = vrot.lane.b32.xlu0 %v2700, 15
    %v2708 = vpop.permute.xlu0 %2707
    %v2709 = vsel %vm303, %v2702, %v2704
    %v2710 = vsel %vm303, %v2704, %v2706
    %v2711 = vsel %vm303, %v2706, %v2708
    %v2717 = vmul.f32 %v2639, %v2702
    %v2718 = vmul.f32 %v2640, %v2709
    %v2719 = vmul.f32 %v2641, %v2710
    %v2720 = vmul.f32 %v2642, %v2711
    %v2721 = vmul.f32 %v2643, %v2708
    %v2722 = vld [vmem:[%s317] sm:$0xf]
    %v2724 = vlaneseq
    %v2725 = vshrl.u32 %v2724, 7
    %v2726 = vsub.s32 0, %v2725
    %v2727 = vrot.slane %v2722, %v2726
    %v2728 = vlaneseq
    %v2729 = vshrl.u32 %v2728, 7
    %v2730 = vsub.s32 1, %v2729
    %v2731 = vrot.slane %v2722, %v2730
    %v2732 = vlaneseq
    %v2733 = vshrl.u32 %v2732, 7
    %v2734 = vsub.s32 2, %v2733
    %v2735 = vrot.slane %v2722, %v2734
    %v2736 = vlaneseq
    %v2737 = vshrl.u32 %v2736, 7
    %v2738 = vsub.s32 3, %v2737
    %v2739 = vrot.slane %v2722, %v2738
    %2740 = vrot.lane.b32.xlu0 %v2727, 16
    %v2741 = vpop.permute.xlu0 %2740
    %2742 = vrot.lane.b32.xlu0 %v2731, 16
    %v2743 = vpop.permute.xlu0 %2742
    %2744 = vrot.lane.b32.xlu0 %v2735, 16
    %v2745 = vpop.permute.xlu0 %2744
    %2746 = vrot.lane.b32.xlu0 %v2739, 16
    %v2747 = vpop.permute.xlu0 %2746
    %v2748 = vsel %vm344, %v2741, %v2743
    %v2749 = vsel %vm344, %v2743, %v2745
    %v2750 = vsel %vm344, %v2745, %v2747
    %v2756 = vmul.f32 %v2639, %v2741
    %v2757 = vmul.f32 %v2640, %v2748
    %v2758 = vmul.f32 %v2641, %v2749
    %v2759 = vmul.f32 %v2642, %v2750
    %v2760 = vmul.f32 %v2643, %v2747
    %v2761 = vld [vmem:[%s358] sm:$0xf]
    %v2763 = vlaneseq
    %v2764 = vshrl.u32 %v2763, 7
    %v2765 = vsub.s32 0, %v2764
    %v2766 = vrot.slane %v2761, %v2765
    %v2767 = vlaneseq
    %v2768 = vshrl.u32 %v2767, 7
    %v2769 = vsub.s32 1, %v2768
    %v2770 = vrot.slane %v2761, %v2769
    %v2771 = vlaneseq
    %v2772 = vshrl.u32 %v2771, 7
    %v2773 = vsub.s32 2, %v2772
    %v2774 = vrot.slane %v2761, %v2773
    %v2775 = vlaneseq
    %v2776 = vshrl.u32 %v2775, 7
    %v2777 = vsub.s32 3, %v2776
    %v2778 = vrot.slane %v2761, %v2777
    %2779 = vrot.lane.b32.xlu0 %v2766, 17
    %v2780 = vpop.permute.xlu0 %2779
    %2781 = vrot.lane.b32.xlu0 %v2770, 17
    %v2782 = vpop.permute.xlu0 %2781
    %2783 = vrot.lane.b32.xlu0 %v2774, 17
    %v2784 = vpop.permute.xlu0 %2783
    %2785 = vrot.lane.b32.xlu0 %v2778, 17
    %v2786 = vpop.permute.xlu0 %2785
    %v2787 = vsel %vm385, %v2780, %v2782
    %v2788 = vsel %vm385, %v2782, %v2784
    %v2789 = vsel %vm385, %v2784, %v2786
    %v2795 = vmul.f32 %v2639, %v2780
    %v2796 = vmul.f32 %v2640, %v2787
    %v2797 = vmul.f32 %v2641, %v2788
    %v2798 = vmul.f32 %v2642, %v2789
    %v2799 = vmul.f32 %v2643, %v2786
    %2805 = vrot.lane.b32.xlu0 %v2556, 127
    %v2806 = vpop.permute.xlu0 %2805
    %2807 = vrot.lane.b32.xlu0 %v2557, 127
    %v2808 = vpop.permute.xlu0 %2807
    %2809 = vrot.lane.b32.xlu0 %v2558, 127
    %v2810 = vpop.permute.xlu0 %2809
    %2811 = vrot.lane.b32.xlu0 %v2559, 127
    %v2812 = vpop.permute.xlu0 %2811
    %2813 = vrot.lane.b32.xlu0 %v2560, 127
    %v2814 = vpop.permute.xlu0 %2813
    %v2815 = vsel %vm216, %v2806, %v2808
    %v2816 = vsel %vm216, %v2808, %v2810
    %v2817 = vsel %vm216, %v2810, %v2812
    %v2818 = vsel %vm216, %v2812, %v2814
    %2824 = vrot.lane.b32.xlu0 %v2595, 126
    %v2825 = vpop.permute.xlu0 %2824
    %2826 = vrot.lane.b32.xlu0 %v2596, 126
    %v2827 = vpop.permute.xlu0 %2826
    %2828 = vrot.lane.b32.xlu0 %v2597, 126
    %v2829 = vpop.permute.xlu0 %2828
    %2830 = vrot.lane.b32.xlu0 %v2598, 126
    %v2831 = vpop.permute.xlu0 %2830
    %2832 = vrot.lane.b32.xlu0 %v2599, 126
    %v2833 = vpop.permute.xlu0 %2832
    %v2834 = vsel %vm433, %v2825, %v2827
    %v2835 = vsel %vm433, %v2827, %v2829
    %v2836 = vsel %vm433, %v2829, %v2831
    %v2837 = vsel %vm433, %v2831, %v2833
    %2843 = vrot.lane.b32.xlu0 %v2634, 112
    %v2844 = vpop.permute.xlu0 %2843
    %2845 = vrot.lane.b32.xlu0 %v2635, 112
    %v2846 = vpop.permute.xlu0 %2845
    %2847 = vrot.lane.b32.xlu0 %v2636, 112
    %v2848 = vpop.permute.xlu0 %2847
    %2849 = vrot.lane.b32.xlu0 %v2637, 112
    %v2850 = vpop.permute.xlu0 %2849
    %2851 = vrot.lane.b32.xlu0 %v2638, 112
    %v2852 = vpop.permute.xlu0 %2851
    %v2853 = vsel %vm134, %v2844, %v2846
    %v2854 = vsel %vm134, %v2846, %v2848
    %v2855 = vsel %vm134, %v2848, %v2850
    %v2856 = vsel %vm134, %v2850, %v2852
    %2861 = vrot.lane.b32.xlu0 %v2479, 111
    %v2862 = vpop.permute.xlu0 %2861
    %2863 = vrot.lane.b32.xlu0 %v2480, 111
    %v2864 = vpop.permute.xlu0 %2863
    %2865 = vrot.lane.b32.xlu0 %v2481, 111
    %v2866 = vpop.permute.xlu0 %2865
    %2867 = vrot.lane.b32.xlu0 %v2482, 111
    %v2868 = vpop.permute.xlu0 %2867
    %v2869 = vsel %vm93, %v2862, %v2864
    %v2870 = vsel %vm93, %v2864, %v2866
    %v2871 = vsel %vm93, %v2866, %v2868
    %2877 = vrot.lane.b32.xlu0 %v2678, 110
    %v2878 = vpop.permute.xlu0 %2877
    %2879 = vrot.lane.b32.xlu0 %v2679, 110
    %v2880 = vpop.permute.xlu0 %2879
    %2881 = vrot.lane.b32.xlu0 %v2680, 110
    %v2882 = vpop.permute.xlu0 %2881
    %2883 = vrot.lane.b32.xlu0 %v2681, 110
    %v2884 = vpop.permute.xlu0 %2883
    %2885 = vrot.lane.b32.xlu0 %v2682, 110
    %v2886 = vpop.permute.xlu0 %2885
    %v2887 = vsel %vm487, %v2878, %v2880
    %v2888 = vsel %vm487, %v2880, %v2882
    %v2889 = vsel %vm487, %v2882, %v2884
    %v2890 = vsel %vm487, %v2884, %v2886
    %2896 = vrot.lane.b32.xlu0 %v2717, 96
    %v2897 = vpop.permute.xlu0 %2896
    %2898 = vrot.lane.b32.xlu0 %v2718, 96
    %v2899 = vpop.permute.xlu0 %2898
    %2900 = vrot.lane.b32.xlu0 %v2719, 96
    %v2901 = vpop.permute.xlu0 %2900
    %2902 = vrot.lane.b32.xlu0 %v2720, 96
    %v2903 = vpop.permute.xlu0 %2902
    %2904 = vrot.lane.b32.xlu0 %v2721, 96
    %v2905 = vpop.permute.xlu0 %2904
    %v2906 = vsel %vm507, %v2897, %v2899
    %v2907 = vsel %vm507, %v2899, %v2901
    %v2908 = vsel %vm507, %v2901, %v2903
    %v2909 = vsel %vm507, %v2903, %v2905
    %2915 = vrot.lane.b32.xlu0 %v2756, 95
    %v2916 = vpop.permute.xlu0 %2915
    %2917 = vrot.lane.b32.xlu0 %v2757, 95
    %v2918 = vpop.permute.xlu0 %2917
    %2919 = vrot.lane.b32.xlu0 %v2758, 95
    %v2920 = vpop.permute.xlu0 %2919
    %2921 = vrot.lane.b32.xlu0 %v2759, 95
    %v2922 = vpop.permute.xlu0 %2921
    %2923 = vrot.lane.b32.xlu0 %v2760, 95
    %v2924 = vpop.permute.xlu0 %2923
    %v2925 = vsel %vm527, %v2916, %v2918
    %v2926 = vsel %vm527, %v2918, %v2920
    %v2927 = vsel %vm527, %v2920, %v2922
    %v2928 = vsel %vm527, %v2922, %v2924
    %2934 = vrot.lane.b32.xlu0 %v2795, 94
    %v2935 = vpop.permute.xlu0 %2934
    %2936 = vrot.lane.b32.xlu0 %v2796, 94
    %v2937 = vpop.permute.xlu0 %2936
    %2938 = vrot.lane.b32.xlu0 %v2797, 94
    %v2939 = vpop.permute.xlu0 %2938
    %2940 = vrot.lane.b32.xlu0 %v2798, 94
    %v2941 = vpop.permute.xlu0 %2940
    %2942 = vrot.lane.b32.xlu0 %v2799, 94
    %v2943 = vpop.permute.xlu0 %2942
    %v2944 = vsel %vm547, %v2935, %v2937
    %v2945 = vsel %vm547, %v2937, %v2939
    %v2946 = vsel %vm547, %v2939, %v2941
    %v2947 = vsel %vm547, %v2941, %v2943
    %2949 = vset.pattern.permute.xlu0 0
    %2950 = vperm.xlu0 %2949, %v2477
    %v2951 = vpop.permute.xlu0 %2950
    %2958 = vrot.lane.b32.xlu0 %v2517, 17
    %v2959 = vpop.permute.xlu0 %2958
    %2960 = vrot.lane.b32.xlu0 %v2518, 17
    %v2961 = vpop.permute.xlu0 %2960
    %2962 = vrot.lane.b32.xlu0 %v2519, 17
    %v2963 = vpop.permute.xlu0 %2962
    %2964 = vrot.lane.b32.xlu0 %v2520, 17
    %v2965 = vpop.permute.xlu0 %2964
    %2966 = vrot.lane.b32.xlu0 %v2521, 17
    %v2967 = vpop.permute.xlu0 %2966
    %2968 = vrot.lane.b32.xlu0 %v2815, 17
    %v2969 = vpop.permute.xlu0 %2968
    %2970 = vrot.lane.b32.xlu0 %v2816, 17
    %v2971 = vpop.permute.xlu0 %2970
    %2972 = vrot.lane.b32.xlu0 %v2817, 17
    %v2973 = vpop.permute.xlu0 %2972
    %2974 = vrot.lane.b32.xlu0 %v2818, 17
    %v2975 = vpop.permute.xlu0 %2974
    %2976 = vrot.lane.b32.xlu0 %v2814, 17
    %v2977 = vpop.permute.xlu0 %2976
    %2978 = vrot.lane.b32.xlu0 %v2834, 17
    %v2979 = vpop.permute.xlu0 %2978
    %2980 = vrot.lane.b32.xlu0 %v2835, 17
    %v2981 = vpop.permute.xlu0 %2980
    %2982 = vrot.lane.b32.xlu0 %v2836, 17
    %v2983 = vpop.permute.xlu0 %2982
    %2984 = vrot.lane.b32.xlu0 %v2837, 17
    %v2985 = vpop.permute.xlu0 %2984
    %2986 = vrot.lane.b32.xlu0 %v2833, 17
    %v2987 = vpop.permute.xlu0 %2986
    %2988 = vrot.lane.b32.xlu0 %v2853, 17
    %v2989 = vpop.permute.xlu0 %2988
    %2990 = vrot.lane.b32.xlu0 %v2854, 17
    %v2991 = vpop.permute.xlu0 %2990
    %2992 = vrot.lane.b32.xlu0 %v2855, 17
    %v2993 = vpop.permute.xlu0 %2992
    %2994 = vrot.lane.b32.xlu0 %v2856, 17
    %v2995 = vpop.permute.xlu0 %2994
    %2996 = vrot.lane.b32.xlu0 %v2852, 17
    %v2997 = vpop.permute.xlu0 %2996
    %2998 = vrot.lane.b32.xlu0 %v2862, 17
    %v2999 = vpop.permute.xlu0 %2998
    %3000 = vrot.lane.b32.xlu0 %v2869, 17
    %v3001 = vpop.permute.xlu0 %3000
    %3002 = vrot.lane.b32.xlu0 %v2870, 17
    %v3003 = vpop.permute.xlu0 %3002
    %3004 = vrot.lane.b32.xlu0 %v2871, 17
    %v3005 = vpop.permute.xlu0 %3004
    %3006 = vrot.lane.b32.xlu0 %v2868, 17
    %v3007 = vpop.permute.xlu0 %3006
    %3008 = vrot.lane.b32.xlu0 %v2878, 17
    %v3009 = vpop.permute.xlu0 %3008
    %3010 = vrot.lane.b32.xlu0 %v2887, 17
    %v3011 = vpop.permute.xlu0 %3010
    %3012 = vrot.lane.b32.xlu0 %v2888, 17
    %v3013 = vpop.permute.xlu0 %3012
    %3014 = vrot.lane.b32.xlu0 %v2889, 17
    %v3015 = vpop.permute.xlu0 %3014
    %3016 = vrot.lane.b32.xlu0 %v2890, 17
    %v3017 = vpop.permute.xlu0 %3016
    %3018 = vrot.lane.b32.xlu0 %v2897, 17
    %v3019 = vpop.permute.xlu0 %3018
    %3020 = vrot.lane.b32.xlu0 %v2906, 17
    %v3021 = vpop.permute.xlu0 %3020
    %3022 = vrot.lane.b32.xlu0 %v2907, 17
    %v3023 = vpop.permute.xlu0 %3022
    %3024 = vrot.lane.b32.xlu0 %v2908, 17
    %v3025 = vpop.permute.xlu0 %3024
    %3026 = vrot.lane.b32.xlu0 %v2909, 17
    %v3027 = vpop.permute.xlu0 %3026
    %3028 = vrot.lane.b32.xlu0 %v2916, 17
    %v3029 = vpop.permute.xlu0 %3028
    %3030 = vrot.lane.b32.xlu0 %v2925, 17
    %v3031 = vpop.permute.xlu0 %3030
    %3032 = vrot.lane.b32.xlu0 %v2926, 17
    %v3033 = vpop.permute.xlu0 %3032
    %3034 = vrot.lane.b32.xlu0 %v2927, 17
    %v3035 = vpop.permute.xlu0 %3034
    %3036 = vrot.lane.b32.xlu0 %v2928, 17
    %v3037 = vpop.permute.xlu0 %3036
    %3038 = vrot.lane.b32.xlu0 %v2935, 17
    %v3039 = vpop.permute.xlu0 %3038
    %3040 = vrot.lane.b32.xlu0 %v2944, 17
    %v3041 = vpop.permute.xlu0 %3040
    %3042 = vrot.lane.b32.xlu0 %v2945, 17
    %v3043 = vpop.permute.xlu0 %3042
    %3044 = vrot.lane.b32.xlu0 %v2946, 17
    %v3045 = vpop.permute.xlu0 %3044
    %3046 = vrot.lane.b32.xlu0 %v2947, 17
    %v3047 = vpop.permute.xlu0 %3046
    %v3048 = vsel %vm385, %v2959, %v2961
    %v3049 = vsel %vm385, %v2961, %v2963
    %v3050 = vsel %vm385, %v2963, %v2965
    %v3051 = vsel %vm385, %v2965, %v2967
    %v3052 = vsel %vm385, %v2969, %v2971
    %v3053 = vsel %vm385, %v2971, %v2973
    %v3054 = vsel %vm385, %v2973, %v2975
    %v3055 = vsel %vm385, %v2975, %v2977
    %v3056 = vsel %vm385, %v2979, %v2981
    %v3057 = vsel %vm385, %v2981, %v2983
    %v3058 = vsel %vm385, %v2983, %v2985
    %v3059 = vsel %vm385, %v2985, %v2987
    %v3060 = vsel %vm385, %v2989, %v2991
    %v3061 = vsel %vm385, %v2991, %v2993
    %v3062 = vsel %vm385, %v2993, %v2995
    %v3063 = vsel %vm385, %v2995, %v2997
    %v3064 = vsel %vm385, %v2999, %v3001
    %v3065 = vsel %vm385, %v3001, %v3003
    %v3066 = vsel %vm385, %v3003, %v3005
    %v3067 = vsel %vm385, %v3005, %v3007
    %v3068 = vsel %vm385, %v3009, %v3011
    %v3069 = vsel %vm385, %v3011, %v3013
    %v3070 = vsel %vm385, %v3013, %v3015
    %v3071 = vsel %vm385, %v3015, %v3017
    %v3072 = vsel %vm385, %v3019, %v3021
    %v3073 = vsel %vm385, %v3021, %v3023
    %v3074 = vsel %vm385, %v3023, %v3025
    %v3075 = vsel %vm385, %v3025, %v3027
    %v3076 = vsel %vm385, %v3029, %v3031
    %v3077 = vsel %vm385, %v3031, %v3033
    %v3078 = vsel %vm385, %v3033, %v3035
    %v3079 = vsel %vm385, %v3035, %v3037
    %v3080 = vsel %vm385, %v3039, %v3041
    %v3081 = vsel %vm385, %v3041, %v3043
    %v3082 = vsel %vm385, %v3043, %v3045
    %v3083 = vsel %vm385, %v3045, %v3047
    %v3121 = vsel %vm724, %v2475, 0
    %3123 = vmatprep.subr.mxu0 %v3049
    %3124 = vmatpush1.msra.mxu0 %v3048
    %3125 = vmatprep.subr.mxu0 %v3053
    %3126 = vmatpush1.msra.mxu0 %v3052
    %3127 = vmatprep.subr.mxu0 %v3057
    %3128 = vmatpush1.msra.mxu0 %v3056
    %3129 = vmatprep.subr.mxu0 %v3061
    %3130 = vmatpush1.msra.mxu0 %v3060
    %3131 = vmatprep.subr.mxu0 %v3065
    %3132 = vmatpush1.msra.mxu0 %v3064
    %3133 = vmatprep.subr.mxu0 %v3069
    %3134 = vmatpush1.msra.mxu0 %v3068
    %3135 = vmatprep.subr.mxu0 %v3073
    %3136 = vmatpush1.msra.mxu0 %v3072
    %3137 = vmatprep.subr.mxu0 %v3077
    %3138 = vmatpush1.msra.mxu0 %v3076
    %3139 = vmatprep.subr.mxu0 %v3081
    %3140 = vmatpush1.msra.mxu0 %v3080
    %3141 = vmatprep.subr.mxu0 0.0
    %3142 = vmatpush1.msra.mxu0 0.0
    %3143 = vmatprep.subr.mxu0 0.0
    %3144 = vmatpush1.msra.mxu0 0.0
    %3145 = vmatprep.subr.mxu0 0.0
    %3146 = vmatpush1.msra.mxu0 0.0
    %3147 = vmatprep.subr.mxu0 0.0
    %3148 = vmatpush1.msra.mxu0 0.0
    %3149 = vmatprep.subr.mxu0 0.0
    %3150 = vmatpush1.msra.mxu0 0.0
    %3151 = vmatprep.subr.mxu0 0.0
    %3152 = vmatpush1.msra.mxu0 0.0
    %3153 = vmatprep.subr.mxu0 0.0
    %3154 = vmatpush1.msra.mxu0 0.0
    %3155 = vmatprep.subr.mxu0 0.0
    %3156 = vmatpush1.msra.mxu0 0.0
    %3157 = vmatprep.subr.mxu0 0.0
    %3158 = vmatpush1.msra.mxu0 0.0
    %3159 = vmatprep.subr.mxu0 0.0
    %3160 = vmatpush1.msra.mxu0 0.0
    %3161 = vmatprep.subr.mxu0 0.0
    %3162 = vmatpush1.msra.mxu0 0.0
    %3163 = vmatprep.subr.mxu0 0.0
    %3164 = vmatpush1.msra.mxu0 0.0
    %3165 = vmatprep.subr.mxu0 0.0
    %3166 = vmatpush1.msra.mxu0 0.0
    %3167 = vmatprep.subr.mxu0 0.0
    %3168 = vmatpush1.msra.mxu0 0.0
    %3169 = vmatprep.subr.mxu0 0.0
    %3170 = vmatpush1.msra.mxu0 0.0
    %3171 = vmatprep.subr.mxu0 0.0
    %3172 = vmatpush1.msra.mxu0 0.0
    %3173 = vmatprep.subr.mxu0 0.0
    %3174 = vmatpush1.msra.mxu0 0.0
    %3175 = vmatprep.subr.mxu0 0.0
    %3176 = vmatpush1.msra.mxu0 0.0
    %3177 = vmatprep.subr.mxu0 0.0
    %3178 = vmatpush1.msra.mxu0 0.0
    %3179 = vmatprep.subr.mxu0 0.0
    %3180 = vmatpush1.msra.mxu0 0.0
    %3181 = vmatprep.subr.mxu0 0.0
    %3182 = vmatpush1.msra.mxu0 0.0
    %3183 = vmatprep.subr.mxu0 0.0
    %3184 = vmatpush1.msra.mxu0 0.0
    %3185 = vmatprep.subr.mxu0 0.0
    %3186 = vmatpush1.msra.mxu0 0.0
    %3187 = vmatprep.mubr.f32.mxu0 0.0
    %3188 = vmatmul.mubr.f32.gmra.mrb[0].mxu0 %v3121
    %v3189 = vpop.f32.mrb[0].mxu0
    %v3190 = vadd.f32 %v2951, %v3189
    %v3191 = vpop.f32.mrb[0].mxu0
    %v3192 = vadd.f32 %v2951, %v3191
    %3193 = vdwg.mxu0
    %3194 = vmatprep.subr.mxu0 %v3051
    %3195 = vmatpush1.msra.mxu0 %v3050
    %3196 = vmatprep.subr.mxu0 %v3055
    %3197 = vmatpush1.msra.mxu0 %v3054
    %3198 = vmatprep.subr.mxu0 %v3059
    %3199 = vmatpush1.msra.mxu0 %v3058
    %3200 = vmatprep.subr.mxu0 %v3063
    %3201 = vmatpush1.msra.mxu0 %v3062
    %3202 = vmatprep.subr.mxu0 %v3067
    %3203 = vmatpush1.msra.mxu0 %v3066
    %3204 = vmatprep.subr.mxu0 %v3071
    %3205 = vmatpush1.msra.mxu0 %v3070
    %3206 = vmatprep.subr.mxu0 %v3075
    %3207 = vmatpush1.msra.mxu0 %v3074
    %3208 = vmatprep.subr.mxu0 %v3079
    %3209 = vmatpush1.msra.mxu0 %v3078
    %3210 = vmatprep.subr.mxu0 %v3083
    %3211 = vmatpush1.msra.mxu0 %v3082
    %3212 = vmatprep.subr.mxu0 0.0
    %3213 = vmatpush1.msra.mxu0 0.0
    %3214 = vmatprep.subr.mxu0 0.0
    %3215 = vmatpush1.msra.mxu0 0.0
    %3216 = vmatprep.subr.mxu0 0.0
    %3217 = vmatpush1.msra.mxu0 0.0
    %3218 = vmatprep.subr.mxu0 0.0
    %3219 = vmatpush1.msra.mxu0 0.0
    %3220 = vmatprep.subr.mxu0 0.0
    %3221 = vmatpush1.msra.mxu0 0.0
    %3222 = vmatprep.subr.mxu0 0.0
    %3223 = vmatpush1.msra.mxu0 0.0
    %3224 = vmatprep.subr.mxu0 0.0
    %3225 = vmatpush1.msra.mxu0 0.0
    %3226 = vmatprep.subr.mxu0 0.0
    %3227 = vmatpush1.msra.mxu0 0.0
    %3228 = vmatprep.subr.mxu0 0.0
    %3229 = vmatpush1.msra.mxu0 0.0
    %3230 = vmatprep.subr.mxu0 0.0
    %3231 = vmatpush1.msra.mxu0 0.0
    %3232 = vmatprep.subr.mxu0 0.0
    %3233 = vmatpush1.msra.mxu0 0.0
    %3234 = vmatprep.subr.mxu0 0.0
    %3235 = vmatpush1.msra.mxu0 0.0
    %3236 = vmatprep.subr.mxu0 0.0
    %3237 = vmatpush1.msra.mxu0 0.0
    %3238 = vmatprep.subr.mxu0 0.0
    %3239 = vmatpush1.msra.mxu0 0.0
    %3240 = vmatprep.subr.mxu0 0.0
    %3241 = vmatpush1.msra.mxu0 0.0
    %3242 = vmatprep.subr.mxu0 0.0
    %3243 = vmatpush1.msra.mxu0 0.0
    %3244 = vmatprep.subr.mxu0 0.0
    %3245 = vmatpush1.msra.mxu0 0.0
    %3246 = vmatprep.subr.mxu0 0.0
    %3247 = vmatpush1.msra.mxu0 0.0
    %3248 = vmatprep.subr.mxu0 0.0
    %3249 = vmatpush1.msra.mxu0 0.0
    %3250 = vmatprep.subr.mxu0 0.0
    %3251 = vmatpush1.msra.mxu0 0.0
    %3252 = vmatprep.subr.mxu0 0.0
    %3253 = vmatpush1.msra.mxu0 0.0
    %3254 = vmatprep.subr.mxu0 0.0
    %3255 = vmatpush1.msra.mxu0 0.0
    %3256 = vmatprep.subr.mxu0 0.0
    %3257 = vmatpush1.msra.mxu0 0.0
    %3258 = vmatprep.mubr.f32.mxu0 0.0
    %3259 = vmatmul.mubr.f32.gmra.mrb[0].mxu0 %v3121
    %v3260 = vpop.f32.mrb[0].mxu0
    %v3261 = vadd.f32 %v2951, %v3260
    %v3262 = vpop.f32.mrb[0].mxu0
    %v3263 = vadd.f32 %v2951, %v3262
    %3264 = vdwg.mxu0
    %v3265 = vadd.f32 %v3190, %v1667
    %v3266 = vadd.f32 %v3192, %v1668
    %v3267 = vadd.f32 %v3261, %v1669
    %v3268 = vadd.f32 %v3263, %v1670
    %3269 = vst [vmem:[#allocation8] sm:$0xff] %v3265
    %3270 = vst [vmem:[#allocation8 + $0x8] sm:$0xff] %v3266
    %3271 = vst [vmem:[#allocation8 + $0x10] sm:$0xff] %v3267
    %3272 = vst [vmem:[#allocation8 + $0x18] sm:$0xff] %v3268
    // Predicated region
    $region34: #{tpu_custom_call.1} parent=1 // pred_check
      _
    $region35: #{tpu_custom_call.1} parent=1 // pred_check_branch
      %3274 = sbr.rel (0) target = $region37
    $region36: #{tpu_custom_call.1} parent=1 // pred_region
      %s3276 = ssub.s32 512, 512
      %3277 = vsyncadd [#allocation5], %s3276
      %s3279 = sshll.u32 [#allocation8], 4
      %s3280 = int_to_ptr.vmem [resolvable:$true] %s3279
      %3282 = dma.vmem_to_hbm [thread:$0]  %s3280, 512, %s6, [#allocation5]
    $region37: #{tpu_custom_call.1} parent=1 // pred_fallthru
      _
    // Predicated region
    $region38: #{tpu_custom_call.1} parent=1 // pred_check
      _
    $region39: #{tpu_custom_call.1} parent=1 // pred_check_branch
      %3284 = sbr.rel (0) target = $region41
    $region40: #{tpu_custom_call.1} parent=1 // pred_region
      %3285 = dma.done [#allocation5], 512
    $region41: #{tpu_custom_call.1} parent=1 // pred_fallthru
      _
    %3286 = vsyncpa [#allocation4], 1
    %3287 = vsyncpa [#allocation7], 1
    %3288 = vsyncpa [#allocation5], 1

</llo_original>
